<compile_context>
chip_gen: v6e
topology: v6e:2x2x1
jax: 0.10.0
libtpu: 0.0.40
codegen_flags: <defaults>
</compile_context>

<pallas_src>
import functools
import numpy as np
import jax
import jax.numpy as jnp
from jax.experimental import pallas as pl
from jax.experimental.pallas import tpu as pltpu


CFG = dict(vocab=64, d_model=32, n_heads=4, d_kv=8, d_ff=64,
           n_layers=2, n_clusters=5, rel_buckets=32)
NPAD = 128  # lane-dense padded classifier output width


# --------------------------- fused forward kernel ----------------------------

def _byt5_fused_kernel(ids_ref, pos_bias_ref, embed_ref,
                       ln1_ref, wqkv_ref, wo_ref, ln2_ref, wi_ref, wo_ff_ref,
                       final_ln_ref, fc3_w_ref, fc3_b_ref, out_ref,
                       *, n_layers, n_heads, d_kv, d_ff):
    """One grid step = one batch sample; whole encoder stays resident in VMEM."""
    S = ids_ref.shape[1]
    vocab, D = embed_ref.shape
    inner = n_heads * d_kv

    def rmsnorm(v, w):  # T5 RMSNorm: no mean subtraction, no bias, eps=1e-6 (f32)
        var = jnp.mean(v * v, axis=-1, keepdims=True)
        return v * jax.lax.rsqrt(var + 1e-6) * w

    # ---- embedding lookup as a one-hot matmul (exact row select, MXU) ----
    ids = ids_ref[0]                                             # (S, 1) int32
    iota = jax.lax.broadcasted_iota(jnp.int32, (S, vocab), 1)    # (S, vocab)
    onehot = (ids == iota).astype(jnp.float32)
    x = jnp.dot(onehot, embed_ref[...],
                preferred_element_type=jnp.float32)              # (S, D) f32

    bias = pos_bias_ref[...]                                     # (H, S, S) f32

    for li in range(n_layers):                                   # static unroll
        # -------- self-attention sublayer --------
        xn = rmsnorm(x, ln1_ref[li])                             # (S, D) f32
        qkv = jnp.dot(xn.astype(jnp.bfloat16), wqkv_ref[li],
                      preferred_element_type=jnp.float32)        # (S, 3*inner)

        heads = []
        for h in range(n_heads):                                 # static unroll
            qh = qkv[:, h * d_kv:(h + 1) * d_kv]                 # (S, dkv)
            kh = qkv[:, inner + h * d_kv: inner + (h + 1) * d_kv]
            vh = qkv[:, 2 * inner + h * d_kv: 2 * inner + (h + 1) * d_kv]
            # T5: no 1/sqrt(d_kv) scaling; relative-position bias added to logits.
            # Score / weighted-sum on the VPU (d_kv=8 too shallow for useful MXU work).
            s = jnp.sum(qh[:, None, :] * kh[None, :, :], axis=-1) + bias[h]  # (S, S)
            s = s - jnp.max(s, axis=-1, keepdims=True)
            p = jnp.exp(s)
            p = p * pl.reciprocal(jnp.sum(p, axis=-1, keepdims=True), approx=True)
            heads.append(jnp.sum(p[:, :, None] * vh[None, :, :], axis=1))    # (S, dkv)
        attn = jnp.concatenate(heads, axis=-1)                   # (S, inner)

        x = x + jnp.dot(attn.astype(jnp.bfloat16), wo_ref[li],
                        preferred_element_type=jnp.float32)      # residual

        # -------- gated-GELU feed-forward sublayer --------
        xn = rmsnorm(x, ln2_ref[li])
        hw = jnp.dot(xn.astype(jnp.bfloat16), wi_ref[li],
                     preferred_element_type=jnp.float32)         # (S, 2*d_ff)
        h0 = hw[:, :d_ff]
        h1 = hw[:, d_ff:]
        g = 0.5 * h0 * (1.0 + jnp.tanh(0.7978845608028654
                                       * (h0 + 0.044715 * h0 * h0 * h0)))    # gelu_new
        ff = g * h1
        x = x + jnp.dot(ff.astype(jnp.bfloat16), wo_ff_ref[li],
                        preferred_element_type=jnp.float32)      # residual

    # -------- final RMSNorm (CLS row only) + classifier head --------
    cls = rmsnorm(x[0:1, :], final_ln_ref[...])                  # (1, D)
    out_ref[0] = (jnp.dot(cls.astype(jnp.bfloat16), fc3_w_ref[...],
                          preferred_element_type=jnp.float32)
                  + fc3_b_ref[...])                              # (1, NPAD)


# --------------------------- plain-JAX glue ----------------------------------

def compute_position_bias(rel_bias_weight, seq_len, num_buckets=32, max_distance=128):
    """T5 bidirectional relative-position bias -> (H, S, S). Buckets are static numpy."""
    ctx = np.arange(seq_len)[:, None]
    mem = np.arange(seq_len)[None, :]
    rel = mem - ctx
    half = num_buckets // 2
    buckets = (rel > 0).astype(np.int32) * half
    rel_abs = np.abs(rel)
    max_exact = half // 2
    is_small = rel_abs < max_exact
    large = max_exact + (
        np.log(np.maximum(rel_abs, 1).astype(np.float32) / max_exact)
        / np.log(max_distance / max_exact) * (half - max_exact)
    ).astype(np.int32)
    large = np.minimum(large, half - 1)
    buckets = (buckets + np.where(is_small, rel_abs, large)).astype(np.int32)
    bias = rel_bias_weight[jnp.asarray(buckets)]                 # (S, S, H) gather
    return jnp.transpose(bias, (2, 0, 1))                        # (H, S, S)


def init_params(key, cfg=CFG):
    def normal(k, shape, scale=0.05):
        return (scale * jax.random.normal(k, shape)).astype(jnp.float32)

    D, H, dk, dff, L = cfg['d_model'], cfg['n_heads'], cfg['d_kv'], cfg['d_ff'], cfg['n_layers']
    inner = H * dk
    keys = jax.random.split(key, 10)
    return {
        'embed': normal(keys[0], (cfg['vocab'], D)),
        'rel_bias': normal(keys[1], (cfg['rel_buckets'], H)),
        'ln1': jnp.ones((L, 1, D), jnp.float32),
        'wqkv': normal(keys[2], (L, D, 3 * inner)),     # concat [wq | wk | wv]
        'wo': normal(keys[3], (L, inner, D)),
        'ln2': jnp.ones((L, 1, D), jnp.float32),
        'wi': normal(keys[4], (L, D, 2 * dff)),         # concat [wi0 | wi1]
        'wo_ff': normal(keys[5], (L, dff, D)),
        'final_ln': jnp.ones((1, D), jnp.float32),
        'fc3_w': normal(keys[6], (D, cfg['n_clusters'])),
        'fc3_b': normal(keys[7], (1, cfg['n_clusters'])),
    }


def byt5_classifier_forward(params, input_ids, cfg=CFG):
    """input_ids: (B, 1, S) int32.  Returns logits (B, n_clusters) f32."""
    D, H, dk, dff, L = cfg['d_model'], cfg['n_heads'], cfg['d_kv'], cfg['d_ff'], cfg['n_layers']
    inner = H * dk
    B, _, S = input_ids.shape

    ids = input_ids[:, 0, :].reshape(B, S, 1).astype(jnp.int32)        # == [:,0,:].squeeze(1)
    pos_bias = compute_position_bias(params['rel_bias'], S)            # (H, S, S)

    # bf16 MXU operands (f32 accumulation in-kernel); classifier padded to 128 lanes.
    wqkv = params['wqkv'].astype(jnp.bfloat16)
    wo = params['wo'].astype(jnp.bfloat16)
    wi = params['wi'].astype(jnp.bfloat16)
    wo_ff = params['wo_ff'].astype(jnp.bfloat16)
    fc3_w = jnp.zeros((D, NPAD), jnp.bfloat16).at[:, :cfg['n_clusters']].set(
        params['fc3_w'].astype(jnp.bfloat16))
    fc3_b = jnp.zeros((1, NPAD), jnp.float32).at[:, :cfg['n_clusters']].set(params['fc3_b'])

    kernel = functools.partial(_byt5_fused_kernel,
                               n_layers=L, n_heads=H, d_kv=dk, d_ff=dff)

    out = pl.pallas_call(
        kernel,
        grid=(B,),
        out_shape=jax.ShapeDtypeStruct((B, 1, NPAD), jnp.float32),
        in_specs=[
            pl.BlockSpec((1, S, 1), lambda b: (b, 0, 0)),               # ids
            pl.BlockSpec((H, S, S), lambda b: (0, 0, 0)),               # position bias
            pl.BlockSpec((cfg['vocab'], D), lambda b: (0, 0)),          # embedding table
            pl.BlockSpec((L, 1, D), lambda b: (0, 0, 0)),               # ln1 (all layers)
            pl.BlockSpec((L, D, 3 * inner), lambda b: (0, 0, 0)),       # wqkv
            pl.BlockSpec((L, inner, D), lambda b: (0, 0, 0)),           # wo
            pl.BlockSpec((L, 1, D), lambda b: (0, 0, 0)),               # ln2
            pl.BlockSpec((L, D, 2 * dff), lambda b: (0, 0, 0)),         # wi (gate|up)
            pl.BlockSpec((L, dff, D), lambda b: (0, 0, 0)),             # wo_ff
            pl.BlockSpec((1, D), lambda b: (0, 0)),                     # final_ln
            pl.BlockSpec((D, NPAD), lambda b: (0, 0)),                  # fc3 weight (padded)
            pl.BlockSpec((1, NPAD), lambda b: (0, 0)),                  # fc3 bias (padded)
        ],
        out_specs=pl.BlockSpec((1, 1, NPAD), lambda b: (b, 0, 0)),
        compiler_params=pltpu.CompilerParams(
            dimension_semantics=("parallel",)),                        # v7x: one sample / TC
    )(ids, pos_bias, params['embed'],
      params['ln1'], wqkv, wo, params['ln2'], wi, wo_ff,
      params['final_ln'], fc3_w, fc3_b)

    return out[:, 0, :cfg['n_clusters']]                                # (B, n_clusters)


# ------------------------------- main -----------------------------------------

if __name__ == "__main__":
    key = jax.random.PRNGKey(0)
    k_ids, k_params = jax.random.split(key)

    B, S = 2, 8
    input_ids = jax.random.randint(k_ids, (B, 1, S), 0, CFG['vocab'], dtype=jnp.int32)
    params = init_params(k_params)

    fwd = jax.jit(functools.partial(byt5_classifier_forward, cfg=CFG))
    logits = fwd(params, input_ids)
    jax.block_until_ready(logits)

    assert logits.shape == (B, CFG['n_clusters'])
    assert bool(jnp.all(jnp.isfinite(logits)))
    print("KERNEL_OK")
</pallas_src>

<mosaic_0001>
module attributes {stable_mosaic.version = 11 : i64} {
  func.func @_byt5_fused_kernel(%arg0: i32, %arg1: memref<1x8x1xi32, #tpu.memory_space<vmem>>, %arg2: memref<4x8x8xf32, #tpu.memory_space<vmem>>, %arg3: memref<64x32xf32, #tpu.memory_space<vmem>>, %arg4: memref<2x1x32xf32, #tpu.memory_space<vmem>>, %arg5: memref<2x32x96xbf16, #tpu.memory_space<vmem>>, %arg6: memref<2x32x32xbf16, #tpu.memory_space<vmem>>, %arg7: memref<2x1x32xf32, #tpu.memory_space<vmem>>, %arg8: memref<2x32x128xbf16, #tpu.memory_space<vmem>>, %arg9: memref<2x64x32xbf16, #tpu.memory_space<vmem>>, %arg10: memref<1x32xf32, #tpu.memory_space<vmem>>, %arg11: memref<32x128xbf16, #tpu.memory_space<vmem>>, %arg12: memref<1x128xf32, #tpu.memory_space<vmem>>, %arg13: memref<1x1x128xf32, #tpu.memory_space<vmem>>) attributes {dimension_semantics = [#tpu.dimension_semantics<parallel>], iteration_bounds = array<i64: 2>, scalar_prefetch = 0 : i64, scratch_operands = 0 : i64, tpu.core_type = #tpu.core_type<tc>, window_params = [{transform_indices = @transform_0, window_bounds = array<i64: 1, 8, 1>}, {pipeline_mode = #tpu.pipeline_mode<synchronous>, transform_indices = @transform_1, window_bounds = array<i64: 4, 8, 8>}, {pipeline_mode = #tpu.pipeline_mode<synchronous>, transform_indices = @transform_2, window_bounds = array<i64: 64, 32>}, {pipeline_mode = #tpu.pipeline_mode<synchronous>, transform_indices = @transform_3, window_bounds = array<i64: 2, 1, 32>}, {pipeline_mode = #tpu.pipeline_mode<synchronous>, transform_indices = @transform_4, window_bounds = array<i64: 2, 32, 96>}, {pipeline_mode = #tpu.pipeline_mode<synchronous>, transform_indices = @transform_5, window_bounds = array<i64: 2, 32, 32>}, {pipeline_mode = #tpu.pipeline_mode<synchronous>, transform_indices = @transform_6, window_bounds = array<i64: 2, 1, 32>}, {pipeline_mode = #tpu.pipeline_mode<synchronous>, transform_indices = @transform_7, window_bounds = array<i64: 2, 32, 128>}, {pipeline_mode = #tpu.pipeline_mode<synchronous>, transform_indices = @transform_8, window_bounds = array<i64: 2, 64, 32>}, {pipeline_mode = #tpu.pipeline_mode<synchronous>, transform_indices = @transform_9, window_bounds = array<i64: 1, 32>}, {pipeline_mode = #tpu.pipeline_mode<synchronous>, transform_indices = @transform_10, window_bounds = array<i64: 32, 128>}, {pipeline_mode = #tpu.pipeline_mode<synchronous>, transform_indices = @transform_11, window_bounds = array<i64: 1, 128>}, {transform_indices = @transform_12, window_bounds = array<i64: 1, 1, 128>}]} {
    %c0 = arith.constant 0 : index
    %c0_0 = arith.constant 0 : index
    %c0_1 = arith.constant 0 : index
    %0 = vector.load %arg1[%c0, %c0_0, %c0_1] : memref<1x8x1xi32, #tpu.memory_space<vmem>>, vector<1x8x1xi32>
    %1 = vector.shape_cast %0 : vector<1x8x1xi32> to vector<8x1xi32>
    %2 = tpu.iota {dimensions = array<i32: 1>} : vector<8x64xi32>
    %3 = vector.broadcast %1 : vector<8x1xi32> to vector<8x64xi32>
    %4 = arith.cmpi eq, %3, %2 : vector<8x64xi32>
    %5 = arith.extui %4 : vector<8x64xi1> to vector<8x64xi32>
    %6 = arith.sitofp %5 : vector<8x64xi32> to vector<8x64xf32>
    %c0_2 = arith.constant 0 : index
    %c0_3 = arith.constant 0 : index
    %7 = vector.load %arg3[%c0_2, %c0_3] : memref<64x32xf32, #tpu.memory_space<vmem>>, vector<64x32xf32>
    %cst = arith.constant dense<0.000000e+00> : vector<8x32xf32>
    %8 = tpu.matmul %6, %7, %cst {dimension_numbers = #tpu.dot_dimension_numbers<[1], [0], [0], [1], [0, 0, 1, 1], [], []>} : vector<8x64xf32>, vector<64x32xf32>, vector<8x32xf32> -> vector<8x32xf32>
    %c0_4 = arith.constant 0 : index
    %c0_5 = arith.constant 0 : index
    %c0_6 = arith.constant 0 : index
    %9 = vector.load %arg2[%c0_4, %c0_5, %c0_6] : memref<4x8x8xf32, #tpu.memory_space<vmem>>, vector<4x8x8xf32>
    %c0_7 = arith.constant 0 : index
    %c0_8 = arith.constant 0 : index
    %c0_9 = arith.constant 0 : index
    %10 = vector.load %arg4[%c0_7, %c0_8, %c0_9] : memref<2x1x32xf32, #tpu.memory_space<vmem>>, vector<1x1x32xf32>
    %11 = vector.shape_cast %10 : vector<1x1x32xf32> to vector<1x32xf32>
    %12 = arith.mulf %8, %8 : vector<8x32xf32>
    %cst_10 = arith.constant dense<0.000000e+00> : vector<8xf32>
    %13 = vector.multi_reduction <add>, %12, %cst_10 [1] : vector<8x32xf32> to vector<8xf32>
    %14 = vector.shape_cast %13 : vector<8xf32> to vector<8x1xf32>
    %cst_11 = arith.constant 3.200000e+01 : f32
    %15 = vector.broadcast %cst_11 : f32 to vector<8x1xf32>
    %16 = arith.divf %14, %15 : vector<8x1xf32>
    %cst_12 = arith.constant 9.99999997E-7 : f32
    %17 = vector.broadcast %cst_12 : f32 to vector<8x1xf32>
    %18 = arith.addf %16, %17 : vector<8x1xf32>
    %19 = math.rsqrt %18 : vector<8x1xf32>
    %20 = vector.broadcast %19 : vector<8x1xf32> to vector<8x32xf32>
    %21 = arith.mulf %8, %20 : vector<8x32xf32>
    %22 = vector.broadcast %11 : vector<1x32xf32> to vector<8x32xf32>
    %23 = arith.mulf %21, %22 : vector<8x32xf32>
    %24 = arith.truncf %23 : vector<8x32xf32> to vector<8x32xbf16>
    %c0_13 = arith.constant 0 : index
    %c0_14 = arith.constant 0 : index
    %c0_15 = arith.constant 0 : index
    %25 = vector.load %arg5[%c0_13, %c0_14, %c0_15] : memref<2x32x96xbf16, #tpu.memory_space<vmem>>, vector<1x32x96xbf16>
    %26 = vector.shape_cast %25 : vector<1x32x96xbf16> to vector<32x96xbf16>
    %cst_16 = arith.constant dense<0.000000e+00> : vector<8x96xf32>
    %27 = tpu.matmul %24, %26, %cst_16 {dimension_numbers = #tpu.dot_dimension_numbers<[1], [0], [0], [1], [0, 0, 1, 1], [], []>} : vector<8x32xbf16>, vector<32x96xbf16>, vector<8x96xf32> -> vector<8x96xf32>
    %28 = vector.extract_strided_slice %27 {offsets = [0, 0], sizes = [8, 8], strides = [1, 1]} : vector<8x96xf32> to vector<8x8xf32>
    %29 = vector.extract_strided_slice %27 {offsets = [0, 32], sizes = [8, 8], strides = [1, 1]} : vector<8x96xf32> to vector<8x8xf32>
    %30 = vector.extract_strided_slice %27 {offsets = [0, 64], sizes = [8, 8], strides = [1, 1]} : vector<8x96xf32> to vector<8x8xf32>
    %31 = vector.shape_cast %28 : vector<8x8xf32> to vector<8x1x8xf32>
    %32 = vector.shape_cast %29 : vector<8x8xf32> to vector<1x8x8xf32>
    %33 = vector.broadcast %31 : vector<8x1x8xf32> to vector<8x8x8xf32>
    %34 = vector.broadcast %32 : vector<1x8x8xf32> to vector<8x8x8xf32>
    %35 = arith.mulf %33, %34 : vector<8x8x8xf32>
    %cst_17 = arith.constant dense<0.000000e+00> : vector<8x8xf32>
    %36 = vector.multi_reduction <add>, %35, %cst_17 [2] : vector<8x8x8xf32> to vector<8x8xf32>
    %37 = vector.extract_strided_slice %9 {offsets = [0, 0, 0], sizes = [1, 8, 8], strides = [1, 1, 1]} : vector<4x8x8xf32> to vector<1x8x8xf32>
    %38 = vector.shape_cast %37 : vector<1x8x8xf32> to vector<8x8xf32>
    %39 = arith.addf %36, %38 : vector<8x8xf32>
    %cst_18 = arith.constant dense<0xFF800000> : vector<8xf32>
    %40 = vector.multi_reduction <maximumf>, %39, %cst_18 [1] : vector<8x8xf32> to vector<8xf32>
    %41 = vector.shape_cast %40 : vector<8xf32> to vector<8x1xf32>
    %42 = vector.broadcast %41 : vector<8x1xf32> to vector<8x8xf32>
    %43 = arith.subf %39, %42 : vector<8x8xf32>
    %44 = math.exp %43 : vector<8x8xf32>
    %cst_19 = arith.constant dense<0.000000e+00> : vector<8xf32>
    %45 = vector.multi_reduction <add>, %44, %cst_19 [1] : vector<8x8xf32> to vector<8xf32>
    %46 = vector.shape_cast %45 : vector<8xf32> to vector<8x1xf32>
    %47 = tpu.reciprocal %46 {approx = true} : vector<8x1xf32> -> vector<8x1xf32>
    %48 = vector.broadcast %47 : vector<8x1xf32> to vector<8x8xf32>
    %49 = arith.mulf %44, %48 : vector<8x8xf32>
    %50 = vector.shape_cast %49 : vector<8x8xf32> to vector<8x8x1xf32>
    %51 = vector.shape_cast %30 : vector<8x8xf32> to vector<1x8x8xf32>
    %52 = vector.broadcast %50 : vector<8x8x1xf32> to vector<8x8x8xf32>
    %53 = vector.broadcast %51 : vector<1x8x8xf32> to vector<8x8x8xf32>
    %54 = arith.mulf %52, %53 : vector<8x8x8xf32>
    %cst_20 = arith.constant dense<0.000000e+00> : vector<8x8xf32>
    %55 = vector.multi_reduction <add>, %54, %cst_20 [1] : vector<8x8x8xf32> to vector<8x8xf32>
    %56 = vector.extract_strided_slice %27 {offsets = [0, 8], sizes = [8, 8], strides = [1, 1]} : vector<8x96xf32> to vector<8x8xf32>
    %57 = vector.extract_strided_slice %27 {offsets = [0, 40], sizes = [8, 8], strides = [1, 1]} : vector<8x96xf32> to vector<8x8xf32>
    %58 = vector.extract_strided_slice %27 {offsets = [0, 72], sizes = [8, 8], strides = [1, 1]} : vector<8x96xf32> to vector<8x8xf32>
    %59 = vector.shape_cast %56 : vector<8x8xf32> to vector<8x1x8xf32>
    %60 = vector.shape_cast %57 : vector<8x8xf32> to vector<1x8x8xf32>
    %61 = vector.broadcast %59 : vector<8x1x8xf32> to vector<8x8x8xf32>
    %62 = vector.broadcast %60 : vector<1x8x8xf32> to vector<8x8x8xf32>
    %63 = arith.mulf %61, %62 : vector<8x8x8xf32>
    %cst_21 = arith.constant dense<0.000000e+00> : vector<8x8xf32>
    %64 = vector.multi_reduction <add>, %63, %cst_21 [2] : vector<8x8x8xf32> to vector<8x8xf32>
    %65 = vector.extract_strided_slice %9 {offsets = [1, 0, 0], sizes = [1, 8, 8], strides = [1, 1, 1]} : vector<4x8x8xf32> to vector<1x8x8xf32>
    %66 = vector.shape_cast %65 : vector<1x8x8xf32> to vector<8x8xf32>
    %67 = arith.addf %64, %66 : vector<8x8xf32>
    %cst_22 = arith.constant dense<0xFF800000> : vector<8xf32>
    %68 = vector.multi_reduction <maximumf>, %67, %cst_22 [1] : vector<8x8xf32> to vector<8xf32>
    %69 = vector.shape_cast %68 : vector<8xf32> to vector<8x1xf32>
    %70 = vector.broadcast %69 : vector<8x1xf32> to vector<8x8xf32>
    %71 = arith.subf %67, %70 : vector<8x8xf32>
    %72 = math.exp %71 : vector<8x8xf32>
    %cst_23 = arith.constant dense<0.000000e+00> : vector<8xf32>
    %73 = vector.multi_reduction <add>, %72, %cst_23 [1] : vector<8x8xf32> to vector<8xf32>
    %74 = vector.shape_cast %73 : vector<8xf32> to vector<8x1xf32>
    %75 = tpu.reciprocal %74 {approx = true} : vector<8x1xf32> -> vector<8x1xf32>
    %76 = vector.broadcast %75 : vector<8x1xf32> to vector<8x8xf32>
    %77 = arith.mulf %72, %76 : vector<8x8xf32>
    %78 = vector.shape_cast %77 : vector<8x8xf32> to vector<8x8x1xf32>
    %79 = vector.shape_cast %58 : vector<8x8xf32> to vector<1x8x8xf32>
    %80 = vector.broadcast %78 : vector<8x8x1xf32> to vector<8x8x8xf32>
    %81 = vector.broadcast %79 : vector<1x8x8xf32> to vector<8x8x8xf32>
    %82 = arith.mulf %80, %81 : vector<8x8x8xf32>
    %cst_24 = arith.constant dense<0.000000e+00> : vector<8x8xf32>
    %83 = vector.multi_reduction <add>, %82, %cst_24 [1] : vector<8x8x8xf32> to vector<8x8xf32>
    %84 = vector.extract_strided_slice %27 {offsets = [0, 16], sizes = [8, 8], strides = [1, 1]} : vector<8x96xf32> to vector<8x8xf32>
    %85 = vector.extract_strided_slice %27 {offsets = [0, 48], sizes = [8, 8], strides = [1, 1]} : vector<8x96xf32> to vector<8x8xf32>
    %86 = vector.extract_strided_slice %27 {offsets = [0, 80], sizes = [8, 8], strides = [1, 1]} : vector<8x96xf32> to vector<8x8xf32>
    %87 = vector.shape_cast %84 : vector<8x8xf32> to vector<8x1x8xf32>
    %88 = vector.shape_cast %85 : vector<8x8xf32> to vector<1x8x8xf32>
    %89 = vector.broadcast %87 : vector<8x1x8xf32> to vector<8x8x8xf32>
    %90 = vector.broadcast %88 : vector<1x8x8xf32> to vector<8x8x8xf32>
    %91 = arith.mulf %89, %90 : vector<8x8x8xf32>
    %cst_25 = arith.constant dense<0.000000e+00> : vector<8x8xf32>
    %92 = vector.multi_reduction <add>, %91, %cst_25 [2] : vector<8x8x8xf32> to vector<8x8xf32>
    %93 = vector.extract_strided_slice %9 {offsets = [2, 0, 0], sizes = [1, 8, 8], strides = [1, 1, 1]} : vector<4x8x8xf32> to vector<1x8x8xf32>
    %94 = vector.shape_cast %93 : vector<1x8x8xf32> to vector<8x8xf32>
    %95 = arith.addf %92, %94 : vector<8x8xf32>
    %cst_26 = arith.constant dense<0xFF800000> : vector<8xf32>
    %96 = vector.multi_reduction <maximumf>, %95, %cst_26 [1] : vector<8x8xf32> to vector<8xf32>
    %97 = vector.shape_cast %96 : vector<8xf32> to vector<8x1xf32>
    %98 = vector.broadcast %97 : vector<8x1xf32> to vector<8x8xf32>
    %99 = arith.subf %95, %98 : vector<8x8xf32>
    %100 = math.exp %99 : vector<8x8xf32>
    %cst_27 = arith.constant dense<0.000000e+00> : vector<8xf32>
    %101 = vector.multi_reduction <add>, %100, %cst_27 [1] : vector<8x8xf32> to vector<8xf32>
    %102 = vector.shape_cast %101 : vector<8xf32> to vector<8x1xf32>
    %103 = tpu.reciprocal %102 {approx = true} : vector<8x1xf32> -> vector<8x1xf32>
    %104 = vector.broadcast %103 : vector<8x1xf32> to vector<8x8xf32>
    %105 = arith.mulf %100, %104 : vector<8x8xf32>
    %106 = vector.shape_cast %105 : vector<8x8xf32> to vector<8x8x1xf32>
    %107 = vector.shape_cast %86 : vector<8x8xf32> to vector<1x8x8xf32>
    %108 = vector.broadcast %106 : vector<8x8x1xf32> to vector<8x8x8xf32>
    %109 = vector.broadcast %107 : vector<1x8x8xf32> to vector<8x8x8xf32>
    %110 = arith.mulf %108, %109 : vector<8x8x8xf32>
    %cst_28 = arith.constant dense<0.000000e+00> : vector<8x8xf32>
    %111 = vector.multi_reduction <add>, %110, %cst_28 [1] : vector<8x8x8xf32> to vector<8x8xf32>
    %112 = vector.extract_strided_slice %27 {offsets = [0, 24], sizes = [8, 8], strides = [1, 1]} : vector<8x96xf32> to vector<8x8xf32>
    %113 = vector.extract_strided_slice %27 {offsets = [0, 56], sizes = [8, 8], strides = [1, 1]} : vector<8x96xf32> to vector<8x8xf32>
    %114 = vector.extract_strided_slice %27 {offsets = [0, 88], sizes = [8, 8], strides = [1, 1]} : vector<8x96xf32> to vector<8x8xf32>
    %115 = vector.shape_cast %112 : vector<8x8xf32> to vector<8x1x8xf32>
    %116 = vector.shape_cast %113 : vector<8x8xf32> to vector<1x8x8xf32>
    %117 = vector.broadcast %115 : vector<8x1x8xf32> to vector<8x8x8xf32>
    %118 = vector.broadcast %116 : vector<1x8x8xf32> to vector<8x8x8xf32>
    %119 = arith.mulf %117, %118 : vector<8x8x8xf32>
    %cst_29 = arith.constant dense<0.000000e+00> : vector<8x8xf32>
    %120 = vector.multi_reduction <add>, %119, %cst_29 [2] : vector<8x8x8xf32> to vector<8x8xf32>
    %121 = vector.extract_strided_slice %9 {offsets = [3, 0, 0], sizes = [1, 8, 8], strides = [1, 1, 1]} : vector<4x8x8xf32> to vector<1x8x8xf32>
    %122 = vector.shape_cast %121 : vector<1x8x8xf32> to vector<8x8xf32>
    %123 = arith.addf %120, %122 : vector<8x8xf32>
    %cst_30 = arith.constant dense<0xFF800000> : vector<8xf32>
    %124 = vector.multi_reduction <maximumf>, %123, %cst_30 [1] : vector<8x8xf32> to vector<8xf32>
    %125 = vector.shape_cast %124 : vector<8xf32> to vector<8x1xf32>
    %126 = vector.broadcast %125 : vector<8x1xf32> to vector<8x8xf32>
    %127 = arith.subf %123, %126 : vector<8x8xf32>
    %128 = math.exp %127 : vector<8x8xf32>
    %cst_31 = arith.constant dense<0.000000e+00> : vector<8xf32>
    %129 = vector.multi_reduction <add>, %128, %cst_31 [1] : vector<8x8xf32> to vector<8xf32>
    %130 = vector.shape_cast %129 : vector<8xf32> to vector<8x1xf32>
    %131 = tpu.reciprocal %130 {approx = true} : vector<8x1xf32> -> vector<8x1xf32>
    %132 = vector.broadcast %131 : vector<8x1xf32> to vector<8x8xf32>
    %133 = arith.mulf %128, %132 : vector<8x8xf32>
    %134 = vector.shape_cast %133 : vector<8x8xf32> to vector<8x8x1xf32>
    %135 = vector.shape_cast %114 : vector<8x8xf32> to vector<1x8x8xf32>
    %136 = vector.broadcast %134 : vector<8x8x1xf32> to vector<8x8x8xf32>
    %137 = vector.broadcast %135 : vector<1x8x8xf32> to vector<8x8x8xf32>
    %138 = arith.mulf %136, %137 : vector<8x8x8xf32>
    %cst_32 = arith.constant dense<0.000000e+00> : vector<8x8xf32>
    %139 = vector.multi_reduction <add>, %138, %cst_32 [1] : vector<8x8x8xf32> to vector<8x8xf32>
    %140 = tpu.concatenate %55, %83, %111, %139 in 1 : vector<8x8xf32>, vector<8x8xf32>, vector<8x8xf32>, vector<8x8xf32> -> vector<8x32xf32>
    %141 = arith.truncf %140 : vector<8x32xf32> to vector<8x32xbf16>
    %c0_33 = arith.constant 0 : index
    %c0_34 = arith.constant 0 : index
    %c0_35 = arith.constant 0 : index
    %142 = vector.load %arg6[%c0_33, %c0_34, %c0_35] : memref<2x32x32xbf16, #tpu.memory_space<vmem>>, vector<1x32x32xbf16>
    %143 = vector.shape_cast %142 : vector<1x32x32xbf16> to vector<32x32xbf16>
    %cst_36 = arith.constant dense<0.000000e+00> : vector<8x32xf32>
    %144 = tpu.matmul %141, %143, %cst_36 {dimension_numbers = #tpu.dot_dimension_numbers<[1], [0], [0], [1], [0, 0, 1, 1], [], []>} : vector<8x32xbf16>, vector<32x32xbf16>, vector<8x32xf32> -> vector<8x32xf32>
    %145 = arith.addf %8, %144 : vector<8x32xf32>
    %c0_37 = arith.constant 0 : index
    %c0_38 = arith.constant 0 : index
    %c0_39 = arith.constant 0 : index
    %146 = vector.load %arg7[%c0_37, %c0_38, %c0_39] : memref<2x1x32xf32, #tpu.memory_space<vmem>>, vector<1x1x32xf32>
    %147 = vector.shape_cast %146 : vector<1x1x32xf32> to vector<1x32xf32>
    %148 = arith.mulf %145, %145 : vector<8x32xf32>
    %cst_40 = arith.constant dense<0.000000e+00> : vector<8xf32>
    %149 = vector.multi_reduction <add>, %148, %cst_40 [1] : vector<8x32xf32> to vector<8xf32>
    %150 = vector.shape_cast %149 : vector<8xf32> to vector<8x1xf32>
    %cst_41 = arith.constant 3.200000e+01 : f32
    %151 = vector.broadcast %cst_41 : f32 to vector<8x1xf32>
    %152 = arith.divf %150, %151 : vector<8x1xf32>
    %cst_42 = arith.constant 9.99999997E-7 : f32
    %153 = vector.broadcast %cst_42 : f32 to vector<8x1xf32>
    %154 = arith.addf %152, %153 : vector<8x1xf32>
    %155 = math.rsqrt %154 : vector<8x1xf32>
    %156 = vector.broadcast %155 : vector<8x1xf32> to vector<8x32xf32>
    %157 = arith.mulf %145, %156 : vector<8x32xf32>
    %158 = vector.broadcast %147 : vector<1x32xf32> to vector<8x32xf32>
    %159 = arith.mulf %157, %158 : vector<8x32xf32>
    %160 = arith.truncf %159 : vector<8x32xf32> to vector<8x32xbf16>
    %c0_43 = arith.constant 0 : index
    %c0_44 = arith.constant 0 : index
    %c0_45 = arith.constant 0 : index
    %161 = vector.load %arg8[%c0_43, %c0_44, %c0_45] : memref<2x32x128xbf16, #tpu.memory_space<vmem>>, vector<1x32x128xbf16>
    %162 = vector.shape_cast %161 : vector<1x32x128xbf16> to vector<32x128xbf16>
    %cst_46 = arith.constant dense<0.000000e+00> : vector<8x128xf32>
    %163 = tpu.matmul %160, %162, %cst_46 {dimension_numbers = #tpu.dot_dimension_numbers<[1], [0], [0], [1], [0, 0, 1, 1], [], []>} : vector<8x32xbf16>, vector<32x128xbf16>, vector<8x128xf32> -> vector<8x128xf32>
    %164 = vector.extract_strided_slice %163 {offsets = [0, 0], sizes = [8, 64], strides = [1, 1]} : vector<8x128xf32> to vector<8x64xf32>
    %165 = vector.extract_strided_slice %163 {offsets = [0, 64], sizes = [8, 64], strides = [1, 1]} : vector<8x128xf32> to vector<8x64xf32>
    %cst_47 = arith.constant 5.000000e-01 : f32
    %166 = vector.broadcast %cst_47 : f32 to vector<8x64xf32>
    %167 = arith.mulf %166, %164 : vector<8x64xf32>
    %cst_48 = arith.constant 4.471500e-02 : f32
    %168 = vector.broadcast %cst_48 : f32 to vector<8x64xf32>
    %169 = arith.mulf %168, %164 : vector<8x64xf32>
    %170 = arith.mulf %169, %164 : vector<8x64xf32>
    %171 = arith.mulf %170, %164 : vector<8x64xf32>
    %172 = arith.addf %164, %171 : vector<8x64xf32>
    %cst_49 = arith.constant 0.797884583 : f32
    %173 = vector.broadcast %cst_49 : f32 to vector<8x64xf32>
    %174 = arith.mulf %173, %172 : vector<8x64xf32>
    %175 = math.tanh %174 : vector<8x64xf32>
    %cst_50 = arith.constant 1.000000e+00 : f32
    %176 = vector.broadcast %cst_50 : f32 to vector<8x64xf32>
    %177 = arith.addf %176, %175 : vector<8x64xf32>
    %178 = arith.mulf %167, %177 : vector<8x64xf32>
    %179 = arith.mulf %178, %165 : vector<8x64xf32>
    %180 = arith.truncf %179 : vector<8x64xf32> to vector<8x64xbf16>
    %c0_51 = arith.constant 0 : index
    %c0_52 = arith.constant 0 : index
    %c0_53 = arith.constant 0 : index
    %181 = vector.load %arg9[%c0_51, %c0_52, %c0_53] : memref<2x64x32xbf16, #tpu.memory_space<vmem>>, vector<1x64x32xbf16>
    %182 = vector.shape_cast %181 : vector<1x64x32xbf16> to vector<64x32xbf16>
    %cst_54 = arith.constant dense<0.000000e+00> : vector<8x32xf32>
    %183 = tpu.matmul %180, %182, %cst_54 {dimension_numbers = #tpu.dot_dimension_numbers<[1], [0], [0], [1], [0, 0, 1, 1], [], []>} : vector<8x64xbf16>, vector<64x32xbf16>, vector<8x32xf32> -> vector<8x32xf32>
    %184 = arith.addf %145, %183 : vector<8x32xf32>
    %c1 = arith.constant 1 : index
    %c0_55 = arith.constant 0 : index
    %c0_56 = arith.constant 0 : index
    %185 = vector.load %arg4[%c1, %c0_55, %c0_56] : memref<2x1x32xf32, #tpu.memory_space<vmem>>, vector<1x1x32xf32>
    %186 = vector.shape_cast %185 : vector<1x1x32xf32> to vector<1x32xf32>
    %187 = arith.mulf %184, %184 : vector<8x32xf32>
    %cst_57 = arith.constant dense<0.000000e+00> : vector<8xf32>
    %188 = vector.multi_reduction <add>, %187, %cst_57 [1] : vector<8x32xf32> to vector<8xf32>
    %189 = vector.shape_cast %188 : vector<8xf32> to vector<8x1xf32>
    %cst_58 = arith.constant 3.200000e+01 : f32
    %190 = vector.broadcast %cst_58 : f32 to vector<8x1xf32>
    %191 = arith.divf %189, %190 : vector<8x1xf32>
    %cst_59 = arith.constant 9.99999997E-7 : f32
    %192 = vector.broadcast %cst_59 : f32 to vector<8x1xf32>
    %193 = arith.addf %191, %192 : vector<8x1xf32>
    %194 = math.rsqrt %193 : vector<8x1xf32>
    %195 = vector.broadcast %194 : vector<8x1xf32> to vector<8x32xf32>
    %196 = arith.mulf %184, %195 : vector<8x32xf32>
    %197 = vector.broadcast %186 : vector<1x32xf32> to vector<8x32xf32>
    %198 = arith.mulf %196, %197 : vector<8x32xf32>
    %199 = arith.truncf %198 : vector<8x32xf32> to vector<8x32xbf16>
    %c1_60 = arith.constant 1 : index
    %c0_61 = arith.constant 0 : index
    %c0_62 = arith.constant 0 : index
    %200 = vector.load %arg5[%c1_60, %c0_61, %c0_62] : memref<2x32x96xbf16, #tpu.memory_space<vmem>>, vector<1x32x96xbf16>
    %201 = vector.shape_cast %200 : vector<1x32x96xbf16> to vector<32x96xbf16>
    %cst_63 = arith.constant dense<0.000000e+00> : vector<8x96xf32>
    %202 = tpu.matmul %199, %201, %cst_63 {dimension_numbers = #tpu.dot_dimension_numbers<[1], [0], [0], [1], [0, 0, 1, 1], [], []>} : vector<8x32xbf16>, vector<32x96xbf16>, vector<8x96xf32> -> vector<8x96xf32>
    %203 = vector.extract_strided_slice %202 {offsets = [0, 0], sizes = [8, 8], strides = [1, 1]} : vector<8x96xf32> to vector<8x8xf32>
    %204 = vector.extract_strided_slice %202 {offsets = [0, 32], sizes = [8, 8], strides = [1, 1]} : vector<8x96xf32> to vector<8x8xf32>
    %205 = vector.extract_strided_slice %202 {offsets = [0, 64], sizes = [8, 8], strides = [1, 1]} : vector<8x96xf32> to vector<8x8xf32>
    %206 = vector.shape_cast %203 : vector<8x8xf32> to vector<8x1x8xf32>
    %207 = vector.shape_cast %204 : vector<8x8xf32> to vector<1x8x8xf32>
    %208 = vector.broadcast %206 : vector<8x1x8xf32> to vector<8x8x8xf32>
    %209 = vector.broadcast %207 : vector<1x8x8xf32> to vector<8x8x8xf32>
    %210 = arith.mulf %208, %209 : vector<8x8x8xf32>
    %cst_64 = arith.constant dense<0.000000e+00> : vector<8x8xf32>
    %211 = vector.multi_reduction <add>, %210, %cst_64 [2] : vector<8x8x8xf32> to vector<8x8xf32>
    %212 = vector.extract_strided_slice %9 {offsets = [0, 0, 0], sizes = [1, 8, 8], strides = [1, 1, 1]} : vector<4x8x8xf32> to vector<1x8x8xf32>
    %213 = vector.shape_cast %212 : vector<1x8x8xf32> to vector<8x8xf32>
    %214 = arith.addf %211, %213 : vector<8x8xf32>
    %cst_65 = arith.constant dense<0xFF800000> : vector<8xf32>
    %215 = vector.multi_reduction <maximumf>, %214, %cst_65 [1] : vector<8x8xf32> to vector<8xf32>
    %216 = vector.shape_cast %215 : vector<8xf32> to vector<8x1xf32>
    %217 = vector.broadcast %216 : vector<8x1xf32> to vector<8x8xf32>
    %218 = arith.subf %214, %217 : vector<8x8xf32>
    %219 = math.exp %218 : vector<8x8xf32>
    %cst_66 = arith.constant dense<0.000000e+00> : vector<8xf32>
    %220 = vector.multi_reduction <add>, %219, %cst_66 [1] : vector<8x8xf32> to vector<8xf32>
    %221 = vector.shape_cast %220 : vector<8xf32> to vector<8x1xf32>
    %222 = tpu.reciprocal %221 {approx = true} : vector<8x1xf32> -> vector<8x1xf32>
    %223 = vector.broadcast %222 : vector<8x1xf32> to vector<8x8xf32>
    %224 = arith.mulf %219, %223 : vector<8x8xf32>
    %225 = vector.shape_cast %224 : vector<8x8xf32> to vector<8x8x1xf32>
    %226 = vector.shape_cast %205 : vector<8x8xf32> to vector<1x8x8xf32>
    %227 = vector.broadcast %225 : vector<8x8x1xf32> to vector<8x8x8xf32>
    %228 = vector.broadcast %226 : vector<1x8x8xf32> to vector<8x8x8xf32>
    %229 = arith.mulf %227, %228 : vector<8x8x8xf32>
    %cst_67 = arith.constant dense<0.000000e+00> : vector<8x8xf32>
    %230 = vector.multi_reduction <add>, %229, %cst_67 [1] : vector<8x8x8xf32> to vector<8x8xf32>
    %231 = vector.extract_strided_slice %202 {offsets = [0, 8], sizes = [8, 8], strides = [1, 1]} : vector<8x96xf32> to vector<8x8xf32>
    %232 = vector.extract_strided_slice %202 {offsets = [0, 40], sizes = [8, 8], strides = [1, 1]} : vector<8x96xf32> to vector<8x8xf32>
    %233 = vector.extract_strided_slice %202 {offsets = [0, 72], sizes = [8, 8], strides = [1, 1]} : vector<8x96xf32> to vector<8x8xf32>
    %234 = vector.shape_cast %231 : vector<8x8xf32> to vector<8x1x8xf32>
    %235 = vector.shape_cast %232 : vector<8x8xf32> to vector<1x8x8xf32>
    %236 = vector.broadcast %234 : vector<8x1x8xf32> to vector<8x8x8xf32>
    %237 = vector.broadcast %235 : vector<1x8x8xf32> to vector<8x8x8xf32>
    %238 = arith.mulf %236, %237 : vector<8x8x8xf32>
    %cst_68 = arith.constant dense<0.000000e+00> : vector<8x8xf32>
    %239 = vector.multi_reduction <add>, %238, %cst_68 [2] : vector<8x8x8xf32> to vector<8x8xf32>
    %240 = vector.extract_strided_slice %9 {offsets = [1, 0, 0], sizes = [1, 8, 8], strides = [1, 1, 1]} : vector<4x8x8xf32> to vector<1x8x8xf32>
    %241 = vector.shape_cast %240 : vector<1x8x8xf32> to vector<8x8xf32>
    %242 = arith.addf %239, %241 : vector<8x8xf32>
    %cst_69 = arith.constant dense<0xFF800000> : vector<8xf32>
    %243 = vector.multi_reduction <maximumf>, %242, %cst_69 [1] : vector<8x8xf32> to vector<8xf32>
    %244 = vector.shape_cast %243 : vector<8xf32> to vector<8x1xf32>
    %245 = vector.broadcast %244 : vector<8x1xf32> to vector<8x8xf32>
    %246 = arith.subf %242, %245 : vector<8x8xf32>
    %247 = math.exp %246 : vector<8x8xf32>
    %cst_70 = arith.constant dense<0.000000e+00> : vector<8xf32>
    %248 = vector.multi_reduction <add>, %247, %cst_70 [1] : vector<8x8xf32> to vector<8xf32>
    %249 = vector.shape_cast %248 : vector<8xf32> to vector<8x1xf32>
    %250 = tpu.reciprocal %249 {approx = true} : vector<8x1xf32> -> vector<8x1xf32>
    %251 = vector.broadcast %250 : vector<8x1xf32> to vector<8x8xf32>
    %252 = arith.mulf %247, %251 : vector<8x8xf32>
    %253 = vector.shape_cast %252 : vector<8x8xf32> to vector<8x8x1xf32>
    %254 = vector.shape_cast %233 : vector<8x8xf32> to vector<1x8x8xf32>
    %255 = vector.broadcast %253 : vector<8x8x1xf32> to vector<8x8x8xf32>
    %256 = vector.broadcast %254 : vector<1x8x8xf32> to vector<8x8x8xf32>
    %257 = arith.mulf %255, %256 : vector<8x8x8xf32>
    %cst_71 = arith.constant dense<0.000000e+00> : vector<8x8xf32>
    %258 = vector.multi_reduction <add>, %257, %cst_71 [1] : vector<8x8x8xf32> to vector<8x8xf32>
    %259 = vector.extract_strided_slice %202 {offsets = [0, 16], sizes = [8, 8], strides = [1, 1]} : vector<8x96xf32> to vector<8x8xf32>
    %260 = vector.extract_strided_slice %202 {offsets = [0, 48], sizes = [8, 8], strides = [1, 1]} : vector<8x96xf32> to vector<8x8xf32>
    %261 = vector.extract_strided_slice %202 {offsets = [0, 80], sizes = [8, 8], strides = [1, 1]} : vector<8x96xf32> to vector<8x8xf32>
    %262 = vector.shape_cast %259 : vector<8x8xf32> to vector<8x1x8xf32>
    %263 = vector.shape_cast %260 : vector<8x8xf32> to vector<1x8x8xf32>
    %264 = vector.broadcast %262 : vector<8x1x8xf32> to vector<8x8x8xf32>
    %265 = vector.broadcast %263 : vector<1x8x8xf32> to vector<8x8x8xf32>
    %266 = arith.mulf %264, %265 : vector<8x8x8xf32>
    %cst_72 = arith.constant dense<0.000000e+00> : vector<8x8xf32>
    %267 = vector.multi_reduction <add>, %266, %cst_72 [2] : vector<8x8x8xf32> to vector<8x8xf32>
    %268 = vector.extract_strided_slice %9 {offsets = [2, 0, 0], sizes = [1, 8, 8], strides = [1, 1, 1]} : vector<4x8x8xf32> to vector<1x8x8xf32>
    %269 = vector.shape_cast %268 : vector<1x8x8xf32> to vector<8x8xf32>
    %270 = arith.addf %267, %269 : vector<8x8xf32>
    %cst_73 = arith.constant dense<0xFF800000> : vector<8xf32>
    %271 = vector.multi_reduction <maximumf>, %270, %cst_73 [1] : vector<8x8xf32> to vector<8xf32>
    %272 = vector.shape_cast %271 : vector<8xf32> to vector<8x1xf32>
    %273 = vector.broadcast %272 : vector<8x1xf32> to vector<8x8xf32>
    %274 = arith.subf %270, %273 : vector<8x8xf32>
    %275 = math.exp %274 : vector<8x8xf32>
    %cst_74 = arith.constant dense<0.000000e+00> : vector<8xf32>
    %276 = vector.multi_reduction <add>, %275, %cst_74 [1] : vector<8x8xf32> to vector<8xf32>
    %277 = vector.shape_cast %276 : vector<8xf32> to vector<8x1xf32>
    %278 = tpu.reciprocal %277 {approx = true} : vector<8x1xf32> -> vector<8x1xf32>
    %279 = vector.broadcast %278 : vector<8x1xf32> to vector<8x8xf32>
    %280 = arith.mulf %275, %279 : vector<8x8xf32>
    %281 = vector.shape_cast %280 : vector<8x8xf32> to vector<8x8x1xf32>
    %282 = vector.shape_cast %261 : vector<8x8xf32> to vector<1x8x8xf32>
    %283 = vector.broadcast %281 : vector<8x8x1xf32> to vector<8x8x8xf32>
    %284 = vector.broadcast %282 : vector<1x8x8xf32> to vector<8x8x8xf32>
    %285 = arith.mulf %283, %284 : vector<8x8x8xf32>
    %cst_75 = arith.constant dense<0.000000e+00> : vector<8x8xf32>
    %286 = vector.multi_reduction <add>, %285, %cst_75 [1] : vector<8x8x8xf32> to vector<8x8xf32>
    %287 = vector.extract_strided_slice %202 {offsets = [0, 24], sizes = [8, 8], strides = [1, 1]} : vector<8x96xf32> to vector<8x8xf32>
    %288 = vector.extract_strided_slice %202 {offsets = [0, 56], sizes = [8, 8], strides = [1, 1]} : vector<8x96xf32> to vector<8x8xf32>
    %289 = vector.extract_strided_slice %202 {offsets = [0, 88], sizes = [8, 8], strides = [1, 1]} : vector<8x96xf32> to vector<8x8xf32>
    %290 = vector.shape_cast %287 : vector<8x8xf32> to vector<8x1x8xf32>
    %291 = vector.shape_cast %288 : vector<8x8xf32> to vector<1x8x8xf32>
    %292 = vector.broadcast %290 : vector<8x1x8xf32> to vector<8x8x8xf32>
    %293 = vector.broadcast %291 : vector<1x8x8xf32> to vector<8x8x8xf32>
    %294 = arith.mulf %292, %293 : vector<8x8x8xf32>
    %cst_76 = arith.constant dense<0.000000e+00> : vector<8x8xf32>
    %295 = vector.multi_reduction <add>, %294, %cst_76 [2] : vector<8x8x8xf32> to vector<8x8xf32>
    %296 = vector.extract_strided_slice %9 {offsets = [3, 0, 0], sizes = [1, 8, 8], strides = [1, 1, 1]} : vector<4x8x8xf32> to vector<1x8x8xf32>
    %297 = vector.shape_cast %296 : vector<1x8x8xf32> to vector<8x8xf32>
    %298 = arith.addf %295, %297 : vector<8x8xf32>
    %cst_77 = arith.constant dense<0xFF800000> : vector<8xf32>
    %299 = vector.multi_reduction <maximumf>, %298, %cst_77 [1] : vector<8x8xf32> to vector<8xf32>
    %300 = vector.shape_cast %299 : vector<8xf32> to vector<8x1xf32>
    %301 = vector.broadcast %300 : vector<8x1xf32> to vector<8x8xf32>
    %302 = arith.subf %298, %301 : vector<8x8xf32>
    %303 = math.exp %302 : vector<8x8xf32>
    %cst_78 = arith.constant dense<0.000000e+00> : vector<8xf32>
    %304 = vector.multi_reduction <add>, %303, %cst_78 [1] : vector<8x8xf32> to vector<8xf32>
    %305 = vector.shape_cast %304 : vector<8xf32> to vector<8x1xf32>
    %306 = tpu.reciprocal %305 {approx = true} : vector<8x1xf32> -> vector<8x1xf32>
    %307 = vector.broadcast %306 : vector<8x1xf32> to vector<8x8xf32>
    %308 = arith.mulf %303, %307 : vector<8x8xf32>
    %309 = vector.shape_cast %308 : vector<8x8xf32> to vector<8x8x1xf32>
    %310 = vector.shape_cast %289 : vector<8x8xf32> to vector<1x8x8xf32>
    %311 = vector.broadcast %309 : vector<8x8x1xf32> to vector<8x8x8xf32>
    %312 = vector.broadcast %310 : vector<1x8x8xf32> to vector<8x8x8xf32>
    %313 = arith.mulf %311, %312 : vector<8x8x8xf32>
    %cst_79 = arith.constant dense<0.000000e+00> : vector<8x8xf32>
    %314 = vector.multi_reduction <add>, %313, %cst_79 [1] : vector<8x8x8xf32> to vector<8x8xf32>
    %315 = tpu.concatenate %230, %258, %286, %314 in 1 : vector<8x8xf32>, vector<8x8xf32>, vector<8x8xf32>, vector<8x8xf32> -> vector<8x32xf32>
    %316 = arith.truncf %315 : vector<8x32xf32> to vector<8x32xbf16>
    %c1_80 = arith.constant 1 : index
    %c0_81 = arith.constant 0 : index
    %c0_82 = arith.constant 0 : index
    %317 = vector.load %arg6[%c1_80, %c0_81, %c0_82] : memref<2x32x32xbf16, #tpu.memory_space<vmem>>, vector<1x32x32xbf16>
    %318 = vector.shape_cast %317 : vector<1x32x32xbf16> to vector<32x32xbf16>
    %cst_83 = arith.constant dense<0.000000e+00> : vector<8x32xf32>
    %319 = tpu.matmul %316, %318, %cst_83 {dimension_numbers = #tpu.dot_dimension_numbers<[1], [0], [0], [1], [0, 0, 1, 1], [], []>} : vector<8x32xbf16>, vector<32x32xbf16>, vector<8x32xf32> -> vector<8x32xf32>
    %320 = arith.addf %184, %319 : vector<8x32xf32>
    %c1_84 = arith.constant 1 : index
    %c0_85 = arith.constant 0 : index
    %c0_86 = arith.constant 0 : index
    %321 = vector.load %arg7[%c1_84, %c0_85, %c0_86] : memref<2x1x32xf32, #tpu.memory_space<vmem>>, vector<1x1x32xf32>
    %322 = vector.shape_cast %321 : vector<1x1x32xf32> to vector<1x32xf32>
    %323 = arith.mulf %320, %320 : vector<8x32xf32>
    %cst_87 = arith.constant dense<0.000000e+00> : vector<8xf32>
    %324 = vector.multi_reduction <add>, %323, %cst_87 [1] : vector<8x32xf32> to vector<8xf32>
    %325 = vector.shape_cast %324 : vector<8xf32> to vector<8x1xf32>
    %cst_88 = arith.constant 3.200000e+01 : f32
    %326 = vector.broadcast %cst_88 : f32 to vector<8x1xf32>
    %327 = arith.divf %325, %326 : vector<8x1xf32>
    %cst_89 = arith.constant 9.99999997E-7 : f32
    %328 = vector.broadcast %cst_89 : f32 to vector<8x1xf32>
    %329 = arith.addf %327, %328 : vector<8x1xf32>
    %330 = math.rsqrt %329 : vector<8x1xf32>
    %331 = vector.broadcast %330 : vector<8x1xf32> to vector<8x32xf32>
    %332 = arith.mulf %320, %331 : vector<8x32xf32>
    %333 = vector.broadcast %322 : vector<1x32xf32> to vector<8x32xf32>
    %334 = arith.mulf %332, %333 : vector<8x32xf32>
    %335 = arith.truncf %334 : vector<8x32xf32> to vector<8x32xbf16>
    %c1_90 = arith.constant 1 : index
    %c0_91 = arith.constant 0 : index
    %c0_92 = arith.constant 0 : index
    %336 = vector.load %arg8[%c1_90, %c0_91, %c0_92] : memref<2x32x128xbf16, #tpu.memory_space<vmem>>, vector<1x32x128xbf16>
    %337 = vector.shape_cast %336 : vector<1x32x128xbf16> to vector<32x128xbf16>
    %cst_93 = arith.constant dense<0.000000e+00> : vector<8x128xf32>
    %338 = tpu.matmul %335, %337, %cst_93 {dimension_numbers = #tpu.dot_dimension_numbers<[1], [0], [0], [1], [0, 0, 1, 1], [], []>} : vector<8x32xbf16>, vector<32x128xbf16>, vector<8x128xf32> -> vector<8x128xf32>
    %339 = vector.extract_strided_slice %338 {offsets = [0, 0], sizes = [8, 64], strides = [1, 1]} : vector<8x128xf32> to vector<8x64xf32>
    %340 = vector.extract_strided_slice %338 {offsets = [0, 64], sizes = [8, 64], strides = [1, 1]} : vector<8x128xf32> to vector<8x64xf32>
    %cst_94 = arith.constant 5.000000e-01 : f32
    %341 = vector.broadcast %cst_94 : f32 to vector<8x64xf32>
    %342 = arith.mulf %341, %339 : vector<8x64xf32>
    %cst_95 = arith.constant 4.471500e-02 : f32
    %343 = vector.broadcast %cst_95 : f32 to vector<8x64xf32>
    %344 = arith.mulf %343, %339 : vector<8x64xf32>
    %345 = arith.mulf %344, %339 : vector<8x64xf32>
    %346 = arith.mulf %345, %339 : vector<8x64xf32>
    %347 = arith.addf %339, %346 : vector<8x64xf32>
    %cst_96 = arith.constant 0.797884583 : f32
    %348 = vector.broadcast %cst_96 : f32 to vector<8x64xf32>
    %349 = arith.mulf %348, %347 : vector<8x64xf32>
    %350 = math.tanh %349 : vector<8x64xf32>
    %cst_97 = arith.constant 1.000000e+00 : f32
    %351 = vector.broadcast %cst_97 : f32 to vector<8x64xf32>
    %352 = arith.addf %351, %350 : vector<8x64xf32>
    %353 = arith.mulf %342, %352 : vector<8x64xf32>
    %354 = arith.mulf %353, %340 : vector<8x64xf32>
    %355 = arith.truncf %354 : vector<8x64xf32> to vector<8x64xbf16>
    %c1_98 = arith.constant 1 : index
    %c0_99 = arith.constant 0 : index
    %c0_100 = arith.constant 0 : index
    %356 = vector.load %arg9[%c1_98, %c0_99, %c0_100] : memref<2x64x32xbf16, #tpu.memory_space<vmem>>, vector<1x64x32xbf16>
    %357 = vector.shape_cast %356 : vector<1x64x32xbf16> to vector<64x32xbf16>
    %cst_101 = arith.constant dense<0.000000e+00> : vector<8x32xf32>
    %358 = tpu.matmul %355, %357, %cst_101 {dimension_numbers = #tpu.dot_dimension_numbers<[1], [0], [0], [1], [0, 0, 1, 1], [], []>} : vector<8x64xbf16>, vector<64x32xbf16>, vector<8x32xf32> -> vector<8x32xf32>
    %359 = arith.addf %320, %358 : vector<8x32xf32>
    %360 = vector.extract_strided_slice %359 {offsets = [0, 0], sizes = [1, 32], strides = [1, 1]} : vector<8x32xf32> to vector<1x32xf32>
    %c0_102 = arith.constant 0 : index
    %c0_103 = arith.constant 0 : index
    %361 = vector.load %arg10[%c0_102, %c0_103] : memref<1x32xf32, #tpu.memory_space<vmem>>, vector<1x32xf32>
    %362 = arith.mulf %360, %360 : vector<1x32xf32>
    %cst_104 = arith.constant dense<0.000000e+00> : vector<1xf32>
    %363 = vector.multi_reduction <add>, %362, %cst_104 [1] : vector<1x32xf32> to vector<1xf32>
    %364 = vector.shape_cast %363 : vector<1xf32> to vector<1x1xf32>
    %cst_105 = arith.constant 3.200000e+01 : f32
    %365 = vector.broadcast %cst_105 : f32 to vector<1x1xf32>
    %366 = arith.divf %364, %365 : vector<1x1xf32>
    %cst_106 = arith.constant 9.99999997E-7 : f32
    %367 = vector.broadcast %cst_106 : f32 to vector<1x1xf32>
    %368 = arith.addf %366, %367 : vector<1x1xf32>
    %369 = math.rsqrt %368 : vector<1x1xf32>
    %370 = vector.broadcast %369 : vector<1x1xf32> to vector<1x32xf32>
    %371 = arith.mulf %360, %370 : vector<1x32xf32>
    %372 = arith.mulf %371, %361 : vector<1x32xf32>
    %373 = arith.truncf %372 : vector<1x32xf32> to vector<1x32xbf16>
    %c0_107 = arith.constant 0 : index
    %c0_108 = arith.constant 0 : index
    %374 = vector.load %arg11[%c0_107, %c0_108] : memref<32x128xbf16, #tpu.memory_space<vmem>>, vector<32x128xbf16>
    %cst_109 = arith.constant dense<0.000000e+00> : vector<1x128xf32>
    %375 = tpu.matmul %373, %374, %cst_109 {dimension_numbers = #tpu.dot_dimension_numbers<[1], [0], [0], [1], [0, 0, 1, 1], [], []>} : vector<1x32xbf16>, vector<32x128xbf16>, vector<1x128xf32> -> vector<1x128xf32>
    %c0_110 = arith.constant 0 : index
    %c0_111 = arith.constant 0 : index
    %376 = vector.load %arg12[%c0_110, %c0_111] : memref<1x128xf32, #tpu.memory_space<vmem>>, vector<1x128xf32>
    %377 = arith.addf %375, %376 : vector<1x128xf32>
    %c0_112 = arith.constant 0 : index
    %c0_113 = arith.constant 0 : index
    %c0_114 = arith.constant 0 : index
    %378 = vector.load %arg13[%c0_112, %c0_113, %c0_114] : memref<1x1x128xf32, #tpu.memory_space<vmem>>, vector<1x1x128xf32>
    %379 = vector.shape_cast %378 : vector<1x1x128xf32> to vector<1x128xf32>
    %380 = vector.shape_cast %377 : vector<1x128xf32> to vector<1x1x128xf32>
    tpu.vector_store %arg13[%c0_112, %c0_113, %c0_114], %380 {strides = array<i32>} : memref<1x1x128xf32, #tpu.memory_space<vmem>>, vector<1x1x128xf32>,
    return
  }
  func.func @transform_0(%arg0: i32) -> (i32, i32, i32) {
    %c0_i32 = arith.constant 0 : i32
    %c0_i32_0 = arith.constant 0 : i32
    %c0_i32_1 = arith.constant 0 : i32
    return %arg0, %c0_i32, %c0_i32_0 : i32, i32, i32
  }
  func.func @transform_1(%arg0: i32) -> (i32, i32, i32) {
    %c0_i32 = arith.constant 0 : i32
    %c0_i32_0 = arith.constant 0 : i32
    %c0_i32_1 = arith.constant 0 : i32
    %c0_i32_2 = arith.constant 0 : i32
    return %c0_i32, %c0_i32_0, %c0_i32_1 : i32, i32, i32
  }
  func.func @transform_2(%arg0: i32) -> (i32, i32) {
    %c0_i32 = arith.constant 0 : i32
    %c0_i32_0 = arith.constant 0 : i32
    %c0_i32_1 = arith.constant 0 : i32
    return %c0_i32, %c0_i32_0 : i32, i32
  }
  func.func @transform_3(%arg0: i32) -> (i32, i32, i32) {
    %c0_i32 = arith.constant 0 : i32
    %c0_i32_0 = arith.constant 0 : i32
    %c0_i32_1 = arith.constant 0 : i32
    %c0_i32_2 = arith.constant 0 : i32
    return %c0_i32, %c0_i32_0, %c0_i32_1 : i32, i32, i32
  }
  func.func @transform_4(%arg0: i32) -> (i32, i32, i32) {
    %c0_i32 = arith.constant 0 : i32
    %c0_i32_0 = arith.constant 0 : i32
    %c0_i32_1 = arith.constant 0 : i32
    %c0_i32_2 = arith.constant 0 : i32
    return %c0_i32, %c0_i32_0, %c0_i32_1 : i32, i32, i32
  }
  func.func @transform_5(%arg0: i32) -> (i32, i32, i32) {
    %c0_i32 = arith.constant 0 : i32
    %c0_i32_0 = arith.constant 0 : i32
    %c0_i32_1 = arith.constant 0 : i32
    %c0_i32_2 = arith.constant 0 : i32
    return %c0_i32, %c0_i32_0, %c0_i32_1 : i32, i32, i32
  }
  func.func @transform_6(%arg0: i32) -> (i32, i32, i32) {
    %c0_i32 = arith.constant 0 : i32
    %c0_i32_0 = arith.constant 0 : i32
    %c0_i32_1 = arith.constant 0 : i32
    %c0_i32_2 = arith.constant 0 : i32
    return %c0_i32, %c0_i32_0, %c0_i32_1 : i32, i32, i32
  }
  func.func @transform_7(%arg0: i32) -> (i32, i32, i32) {
    %c0_i32 = arith.constant 0 : i32
    %c0_i32_0 = arith.constant 0 : i32
    %c0_i32_1 = arith.constant 0 : i32
    %c0_i32_2 = arith.constant 0 : i32
    return %c0_i32, %c0_i32_0, %c0_i32_1 : i32, i32, i32
  }
  func.func @transform_8(%arg0: i32) -> (i32, i32, i32) {
    %c0_i32 = arith.constant 0 : i32
    %c0_i32_0 = arith.constant 0 : i32
    %c0_i32_1 = arith.constant 0 : i32
    %c0_i32_2 = arith.constant 0 : i32
    return %c0_i32, %c0_i32_0, %c0_i32_1 : i32, i32, i32
  }
  func.func @transform_9(%arg0: i32) -> (i32, i32) {
    %c0_i32 = arith.constant 0 : i32
    %c0_i32_0 = arith.constant 0 : i32
    %c0_i32_1 = arith.constant 0 : i32
    return %c0_i32, %c0_i32_0 : i32, i32
  }
  func.func @transform_10(%arg0: i32) -> (i32, i32) {
    %c0_i32 = arith.constant 0 : i32
    %c0_i32_0 = arith.constant 0 : i32
    %c0_i32_1 = arith.constant 0 : i32
    return %c0_i32, %c0_i32_0 : i32, i32
  }
  func.func @transform_11(%arg0: i32) -> (i32, i32) {
    %c0_i32 = arith.constant 0 : i32
    %c0_i32_0 = arith.constant 0 : i32
    %c0_i32_1 = arith.constant 0 : i32
    return %c0_i32, %c0_i32_0 : i32, i32
  }
  func.func @transform_12(%arg0: i32) -> (i32, i32, i32) {
    %c0_i32 = arith.constant 0 : i32
    %c0_i32_0 = arith.constant 0 : i32
    %c0_i32_1 = arith.constant 0 : i32
    return %arg0, %c0_i32, %c0_i32_0 : i32, i32, i32
  }
}

</mosaic_0001>

<llo_original>
// kernel: byt5_classifier_forward.1
$region0: #{byt5_classifier_forward.1}
  #allocation0 [shape = 'u32[]', space=smem, size = 0x4, offset = 0x4, fixed_abs, tag = 'smem constant byte address 0x4 - core index']
  #allocation1 [shape = 'u32[144,128]{1,0:T(1,128)}', space=vmem, size = 0x12000, scoped, tag = 'internal scratch']
  %s0 = inlined_call_operand.vmem [shape: s32[2,8,1], index: 0, kind: input, shape index: {}]
  %s1 = inlined_call_operand.vmem [shape: f32[4,8,8], index: 1, kind: input, shape index: {}]
  %s2 = inlined_call_operand.vmem [shape: f32[64,32], index: 2, kind: input, shape index: {}]
  %s3 = inlined_call_operand.vmem [shape: f32[2,1,32], index: 3, kind: input, shape index: {}]
  %s4 = inlined_call_operand.vmem [shape: bf16[2,32,96], index: 4, kind: input, shape index: {}]
  %s5 = inlined_call_operand.vmem [shape: bf16[2,32,32], index: 5, kind: input, shape index: {}]
  %s6 = inlined_call_operand.vmem [shape: f32[2,1,32], index: 6, kind: input, shape index: {}]
  %s7 = inlined_call_operand.vmem [shape: bf16[2,32,128], index: 7, kind: input, shape index: {}]
  %s8 = inlined_call_operand.vmem [shape: bf16[2,64,32], index: 8, kind: input, shape index: {}]
  %s9 = inlined_call_operand.vmem [shape: f32[1,32], index: 9, kind: input, shape index: {}]
  %s10 = inlined_call_operand.vmem [shape: bf16[32,128], index: 10, kind: input, shape index: {}]
  %s11 = inlined_call_operand.vmem [shape: f32[1,128], index: 11, kind: input, shape index: {}]
  %s12 = inlined_call_operand.hbm [shape: f32[2,1,128], index: 12, kind: output, shape index: {}]
  %s13 = sld [smem:[#allocation0]]
  $region81: #{byt5_classifier_forward.1} parent=0
    _
  %s15 = ssub.s32 1, %s13
  %s16 = scalar_select 0, %s15, %s13
  $region1: #{byt5_classifier_forward.1} parent=0
    #allocation2 [shape = 'u8[1024]{0}', space=vmem, size = 0x400, scoped, tag = 'output window, operand 0']
    #allocation3 [shape = 's32[2]{0}', space=sflag, size = 0x8, scoped, tag = 'scoped memory for byt5_classifier_forward.1']
    %17 = vsyncpa [#allocation3], 0
    %s18 = scalar_lea.sflag [#allocation3], 1
    %19 = vsyncpa %s18, 0
    loop: start=0, step=1, limit=4
    $region2: #{byt5_classifier_forward.1} parent=1 // loop_pre_header
      _
    $region3: #{byt5_classifier_forward.1} parent=1 // loop_header
      %s21 = sphi 0, %s25
      %p22 = scmp.ge.s32.totalorder %s21, 4
      %s31 = sphi 0, %s33
      %s34 = sphi 0, %s31
      %s35 = sphi 0, %s34
      %s51 = sphi 0, %s35
      %s55 = sphi 0, %s55
      %s57 = sphi 0, %s55
      %s58 = sphi 0, %s57
      %s72 = sphi 0, %s58
      %s76 = sphi 0, %s76
      %s78 = sphi 0, %s76
      %s79 = sphi 0, %s78
      %s93 = sphi 0, %s79
      %s97 = sphi 0, %s97
      %s99 = sphi 0, %s97
      %s100 = sphi 0, %s99
      %s114 = sphi 0, %s100
      %s118 = sphi 0, %s118
      %s120 = sphi 0, %s118
      %s121 = sphi 0, %s120
      %s135 = sphi 0, %s121
      %s139 = sphi 0, %s139
      %s141 = sphi 0, %s139
      %s142 = sphi 0, %s141
      %s156 = sphi 0, %s142
      %s160 = sphi 0, %s160
      %s162 = sphi 0, %s160
      %s163 = sphi 0, %s162
      %s177 = sphi 0, %s163
      %s181 = sphi 0, %s181
      %s183 = sphi 0, %s181
      %s184 = sphi 0, %s183
      %s198 = sphi 0, %s184
      %s202 = sphi 0, %s202
      %s204 = sphi 0, %s202
      %s205 = sphi 0, %s204
      %s219 = sphi 0, %s205
      %s223 = sphi 0, %s223
      %s225 = sphi 0, %s223
      %s226 = sphi 0, %s225
      %s240 = sphi 0, %s226
      %s244 = sphi 0, %s244
      %s246 = sphi 0, %s244
      %s247 = sphi 0, %s246
      %s261 = sphi 0, %s247
      %s265 = sphi 0, %s265
      %s267 = sphi 0, %s265
      %s268 = sphi 0, %s267
      %s282 = sphi 0, %s268
      %s288 = sphi 0, %s290
      %s291 = sphi 0, %s288
      %s292 = sphi 0, %s291
      %s308 = sphi 0, %s292
    $region4: #{byt5_classifier_forward.1} parent=1 // loop_header_branch
      %24 = sbr.rel (%p22) target = $region8
    $region5: #{byt5_classifier_forward.1} parent=1 // loop_body
      %s26 = ssub.s32 %s21, 1
      %s27 = ssub.s32 %s21, 2
      %s28 = sadd.s32 %s21, 1
      %s29 = ssub.s32 %s21, %s28
      %p30 = scmp.eq.s32.totalorder %s29, 0
      %s32 = sadd.s32 %s31, 1
      %s33 = scalar_select %p30, %s31, %s32
      %p36 = pneg %p30
      %p37 = scmp.eq.s32.totalorder %s21, 1
      %p38 = por %p36, %p37
      %p39 = scmp.ne.s32.totalorder %s31, %s34
      %p40 = scmp.eq.s32.totalorder %s21, 0
      %p41 = por %p39, %p40
      %p42 = scmp.ne.s32.totalorder %s31, %s34
      %p43 = scmp.eq.s32.totalorder %s26, 1
      %p44 = por %p42, %p43
      %p45 = scmp.ne.s32.totalorder %s34, %s35
      %p46 = scmp.eq.s32.totalorder %s26, 0
      %p47 = por %p45, %p46
      %p48 = scmp.ne.s32.totalorder %s34, %s35
      %p49 = scmp.eq.s32.totalorder %s27, 1
      %p50 = por %p48, %p49
      %p52 = scmp.ne.s32.totalorder %s35, %s51
      %p53 = scmp.eq.s32.totalorder %s27, 0
      %p54 = por %p52, %p53
      %s56 = sadd.s32 %s55, 1
      %p59 = scmp.eq.s32.totalorder %s21, 1
      %p60 = scmp.ne.s32.totalorder %s55, %s57
      %p61 = scmp.eq.s32.totalorder %s21, 0
      %p62 = por %p60, %p61
      %p63 = scmp.ne.s32.totalorder %s55, %s57
      %p64 = scmp.eq.s32.totalorder %s26, 1
      %p65 = por %p63, %p64
      %p66 = scmp.ne.s32.totalorder %s57, %s58
      %p67 = scmp.eq.s32.totalorder %s26, 0
      %p68 = por %p66, %p67
      %p69 = scmp.ne.s32.totalorder %s57, %s58
      %p70 = scmp.eq.s32.totalorder %s27, 1
      %p71 = por %p69, %p70
      %p73 = scmp.ne.s32.totalorder %s58, %s72
      %p74 = scmp.eq.s32.totalorder %s27, 0
      %p75 = por %p73, %p74
      %s77 = sadd.s32 %s76, 1
      %p80 = scmp.eq.s32.totalorder %s21, 1
      %p81 = scmp.ne.s32.totalorder %s76, %s78
      %p82 = scmp.eq.s32.totalorder %s21, 0
      %p83 = por %p81, %p82
      %p84 = scmp.ne.s32.totalorder %s76, %s78
      %p85 = scmp.eq.s32.totalorder %s26, 1
      %p86 = por %p84, %p85
      %p87 = scmp.ne.s32.totalorder %s78, %s79
      %p88 = scmp.eq.s32.totalorder %s26, 0
      %p89 = por %p87, %p88
      %p90 = scmp.ne.s32.totalorder %s78, %s79
      %p91 = scmp.eq.s32.totalorder %s27, 1
      %p92 = por %p90, %p91
      %p94 = scmp.ne.s32.totalorder %s79, %s93
      %p95 = scmp.eq.s32.totalorder %s27, 0
      %p96 = por %p94, %p95
      %s98 = sadd.s32 %s97, 1
      %p101 = scmp.eq.s32.totalorder %s21, 1
      %p102 = scmp.ne.s32.totalorder %s97, %s99
      %p103 = scmp.eq.s32.totalorder %s21, 0
      %p104 = por %p102, %p103
      %p105 = scmp.ne.s32.totalorder %s97, %s99
      %p106 = scmp.eq.s32.totalorder %s26, 1
      %p107 = por %p105, %p106
      %p108 = scmp.ne.s32.totalorder %s99, %s100
      %p109 = scmp.eq.s32.totalorder %s26, 0
      %p110 = por %p108, %p109
      %p111 = scmp.ne.s32.totalorder %s99, %s100
      %p112 = scmp.eq.s32.totalorder %s27, 1
      %p113 = por %p111, %p112
      %p115 = scmp.ne.s32.totalorder %s100, %s114
      %p116 = scmp.eq.s32.totalorder %s27, 0
      %p117 = por %p115, %p116
      %s119 = sadd.s32 %s118, 1
      %p122 = scmp.eq.s32.totalorder %s21, 1
      %p123 = scmp.ne.s32.totalorder %s118, %s120
      %p124 = scmp.eq.s32.totalorder %s21, 0
      %p125 = por %p123, %p124
      %p126 = scmp.ne.s32.totalorder %s118, %s120
      %p127 = scmp.eq.s32.totalorder %s26, 1
      %p128 = por %p126, %p127
      %p129 = scmp.ne.s32.totalorder %s120, %s121
      %p130 = scmp.eq.s32.totalorder %s26, 0
      %p131 = por %p129, %p130
      %p132 = scmp.ne.s32.totalorder %s120, %s121
      %p133 = scmp.eq.s32.totalorder %s27, 1
      %p134 = por %p132, %p133
      %p136 = scmp.ne.s32.totalorder %s121, %s135
      %p137 = scmp.eq.s32.totalorder %s27, 0
      %p138 = por %p136, %p137
      %s140 = sadd.s32 %s139, 1
      %p143 = scmp.eq.s32.totalorder %s21, 1
      %p144 = scmp.ne.s32.totalorder %s139, %s141
      %p145 = scmp.eq.s32.totalorder %s21, 0
      %p146 = por %p144, %p145
      %p147 = scmp.ne.s32.totalorder %s139, %s141
      %p148 = scmp.eq.s32.totalorder %s26, 1
      %p149 = por %p147, %p148
      %p150 = scmp.ne.s32.totalorder %s141, %s142
      %p151 = scmp.eq.s32.totalorder %s26, 0
      %p152 = por %p150, %p151
      %p153 = scmp.ne.s32.totalorder %s141, %s142
      %p154 = scmp.eq.s32.totalorder %s27, 1
      %p155 = por %p153, %p154
      %p157 = scmp.ne.s32.totalorder %s142, %s156
      %p158 = scmp.eq.s32.totalorder %s27, 0
      %p159 = por %p157, %p158
      %s161 = sadd.s32 %s160, 1
      %p164 = scmp.eq.s32.totalorder %s21, 1
      %p165 = scmp.ne.s32.totalorder %s160, %s162
      %p166 = scmp.eq.s32.totalorder %s21, 0
      %p167 = por %p165, %p166
      %p168 = scmp.ne.s32.totalorder %s160, %s162
      %p169 = scmp.eq.s32.totalorder %s26, 1
      %p170 = por %p168, %p169
      %p171 = scmp.ne.s32.totalorder %s162, %s163
      %p172 = scmp.eq.s32.totalorder %s26, 0
      %p173 = por %p171, %p172
      %p174 = scmp.ne.s32.totalorder %s162, %s163
      %p175 = scmp.eq.s32.totalorder %s27, 1
      %p176 = por %p174, %p175
      %p178 = scmp.ne.s32.totalorder %s163, %s177
      %p179 = scmp.eq.s32.totalorder %s27, 0
      %p180 = por %p178, %p179
      %s182 = sadd.s32 %s181, 1
      %p185 = scmp.eq.s32.totalorder %s21, 1
      %p186 = scmp.ne.s32.totalorder %s181, %s183
      %p187 = scmp.eq.s32.totalorder %s21, 0
      %p188 = por %p186, %p187
      %p189 = scmp.ne.s32.totalorder %s181, %s183
      %p190 = scmp.eq.s32.totalorder %s26, 1
      %p191 = por %p189, %p190
      %p192 = scmp.ne.s32.totalorder %s183, %s184
      %p193 = scmp.eq.s32.totalorder %s26, 0
      %p194 = por %p192, %p193
      %p195 = scmp.ne.s32.totalorder %s183, %s184
      %p196 = scmp.eq.s32.totalorder %s27, 1
      %p197 = por %p195, %p196
      %p199 = scmp.ne.s32.totalorder %s184, %s198
      %p200 = scmp.eq.s32.totalorder %s27, 0
      %p201 = por %p199, %p200
      %s203 = sadd.s32 %s202, 1
      %p206 = scmp.eq.s32.totalorder %s21, 1
      %p207 = scmp.ne.s32.totalorder %s202, %s204
      %p208 = scmp.eq.s32.totalorder %s21, 0
      %p209 = por %p207, %p208
      %p210 = scmp.ne.s32.totalorder %s202, %s204
      %p211 = scmp.eq.s32.totalorder %s26, 1
      %p212 = por %p210, %p211
      %p213 = scmp.ne.s32.totalorder %s204, %s205
      %p214 = scmp.eq.s32.totalorder %s26, 0
      %p215 = por %p213, %p214
      %p216 = scmp.ne.s32.totalorder %s204, %s205
      %p217 = scmp.eq.s32.totalorder %s27, 1
      %p218 = por %p216, %p217
      %p220 = scmp.ne.s32.totalorder %s205, %s219
      %p221 = scmp.eq.s32.totalorder %s27, 0
      %p222 = por %p220, %p221
      %s224 = sadd.s32 %s223, 1
      %p227 = scmp.eq.s32.totalorder %s21, 1
      %p228 = scmp.ne.s32.totalorder %s223, %s225
      %p229 = scmp.eq.s32.totalorder %s21, 0
      %p230 = por %p228, %p229
      %p231 = scmp.ne.s32.totalorder %s223, %s225
      %p232 = scmp.eq.s32.totalorder %s26, 1
      %p233 = por %p231, %p232
      %p234 = scmp.ne.s32.totalorder %s225, %s226
      %p235 = scmp.eq.s32.totalorder %s26, 0
      %p236 = por %p234, %p235
      %p237 = scmp.ne.s32.totalorder %s225, %s226
      %p238 = scmp.eq.s32.totalorder %s27, 1
      %p239 = por %p237, %p238
      %p241 = scmp.ne.s32.totalorder %s226, %s240
      %p242 = scmp.eq.s32.totalorder %s27, 0
      %p243 = por %p241, %p242
      %s245 = sadd.s32 %s244, 1
      %p248 = scmp.eq.s32.totalorder %s21, 1
      %p249 = scmp.ne.s32.totalorder %s244, %s246
      %p250 = scmp.eq.s32.totalorder %s21, 0
      %p251 = por %p249, %p250
      %p252 = scmp.ne.s32.totalorder %s244, %s246
      %p253 = scmp.eq.s32.totalorder %s26, 1
      %p254 = por %p252, %p253
      %p255 = scmp.ne.s32.totalorder %s246, %s247
      %p256 = scmp.eq.s32.totalorder %s26, 0
      %p257 = por %p255, %p256
      %p258 = scmp.ne.s32.totalorder %s246, %s247
      %p259 = scmp.eq.s32.totalorder %s27, 1
      %p260 = por %p258, %p259
      %p262 = scmp.ne.s32.totalorder %s247, %s261
      %p263 = scmp.eq.s32.totalorder %s27, 0
      %p264 = por %p262, %p263
      %s266 = sadd.s32 %s265, 1
      %p269 = scmp.eq.s32.totalorder %s21, 1
      %p270 = scmp.ne.s32.totalorder %s265, %s267
      %p271 = scmp.eq.s32.totalorder %s21, 0
      %p272 = por %p270, %p271
      %p273 = scmp.ne.s32.totalorder %s265, %s267
      %p274 = scmp.eq.s32.totalorder %s26, 1
      %p275 = por %p273, %p274
      %p276 = scmp.ne.s32.totalorder %s267, %s268
      %p277 = scmp.eq.s32.totalorder %s26, 0
      %p278 = por %p276, %p277
      %p279 = scmp.ne.s32.totalorder %s267, %s268
      %p280 = scmp.eq.s32.totalorder %s27, 1
      %p281 = por %p279, %p280
      %p283 = scmp.ne.s32.totalorder %s268, %s282
      %p284 = scmp.eq.s32.totalorder %s27, 0
      %p285 = por %p283, %p284
      %s286 = ssub.s32 %s21, %s28
      %p287 = scmp.eq.s32.totalorder %s286, 0
      %s289 = sadd.s32 %s288, 1
      %s290 = scalar_select %p287, %s288, %s289
      %p293 = pneg %p287
      %p294 = scmp.eq.s32.totalorder %s21, 1
      %p295 = por %p293, %p294
      %p296 = scmp.ne.s32.totalorder %s288, %s291
      %p297 = scmp.eq.s32.totalorder %s21, 0
      %p298 = por %p296, %p297
      %p299 = scmp.ne.s32.totalorder %s288, %s291
      %p300 = scmp.eq.s32.totalorder %s26, 1
      %p301 = por %p299, %p300
      %p302 = scmp.ne.s32.totalorder %s291, %s292
      %p303 = scmp.eq.s32.totalorder %s26, 0
      %p304 = por %p302, %p303
      %p305 = scmp.ne.s32.totalorder %s291, %s292
      %p306 = scmp.eq.s32.totalorder %s27, 1
      %p307 = por %p305, %p306
      %p309 = scmp.ne.s32.totalorder %s292, %s308
      %p310 = scmp.eq.s32.totalorder %s27, 0
      %p311 = por %p309, %p310
      %p312 = scmp.le.s32.totalorder 1, %s21
      %p313 = scmp.lt.s32.totalorder %s21, 3
      %p314 = pnand %p312, %p313
      %p315 = pneg %p314
      // Predicated region
      $region9: #{byt5_classifier_forward.1} parent=5 // pred_check
        _
      $region10: #{byt5_classifier_forward.1} parent=5 // pred_check_branch
        %317 = sbr.rel (%p314) target = $region12
      $region11: #{byt5_classifier_forward.1} parent=5 // pred_region
        %s318 = ssub.s32 %s21, 1
        // Predicated region
        $region13: #{byt5_classifier_forward.1} parent=11 // pred_check
          %p319 = pneg %p68
        $region14: #{byt5_classifier_forward.1} parent=11 // pred_check_branch
          %321 = sbr.rel (%p319) target = $region16
        $region15: #{byt5_classifier_forward.1} parent=11 // pred_region
          _
        $region16: #{byt5_classifier_forward.1} parent=11 // pred_fallthru
          _
        // Predicated region
        $region17: #{byt5_classifier_forward.1} parent=11 // pred_check
          %p322 = pneg %p89
        $region18: #{byt5_classifier_forward.1} parent=11 // pred_check_branch
          %324 = sbr.rel (%p322) target = $region20
        $region19: #{byt5_classifier_forward.1} parent=11 // pred_region
          _
        $region20: #{byt5_classifier_forward.1} parent=11 // pred_fallthru
          _
        // Predicated region
        $region21: #{byt5_classifier_forward.1} parent=11 // pred_check
          %p325 = pneg %p110
        $region22: #{byt5_classifier_forward.1} parent=11 // pred_check_branch
          %327 = sbr.rel (%p325) target = $region24
        $region23: #{byt5_classifier_forward.1} parent=11 // pred_region
          _
        $region24: #{byt5_classifier_forward.1} parent=11 // pred_fallthru
          _
        // Predicated region
        $region25: #{byt5_classifier_forward.1} parent=11 // pred_check
          %p328 = pneg %p131
        $region26: #{byt5_classifier_forward.1} parent=11 // pred_check_branch
          %330 = sbr.rel (%p328) target = $region28
        $region27: #{byt5_classifier_forward.1} parent=11 // pred_region
          _
        $region28: #{byt5_classifier_forward.1} parent=11 // pred_fallthru
          _
        // Predicated region
        $region29: #{byt5_classifier_forward.1} parent=11 // pred_check
          %p331 = pneg %p152
        $region30: #{byt5_classifier_forward.1} parent=11 // pred_check_branch
          %333 = sbr.rel (%p331) target = $region32
        $region31: #{byt5_classifier_forward.1} parent=11 // pred_region
          _
        $region32: #{byt5_classifier_forward.1} parent=11 // pred_fallthru
          _
        // Predicated region
        $region33: #{byt5_classifier_forward.1} parent=11 // pred_check
          %p334 = pneg %p173
        $region34: #{byt5_classifier_forward.1} parent=11 // pred_check_branch
          %336 = sbr.rel (%p334) target = $region36
        $region35: #{byt5_classifier_forward.1} parent=11 // pred_region
          _
        $region36: #{byt5_classifier_forward.1} parent=11 // pred_fallthru
          _
        // Predicated region
        $region37: #{byt5_classifier_forward.1} parent=11 // pred_check
          %p337 = pneg %p194
        $region38: #{byt5_classifier_forward.1} parent=11 // pred_check_branch
          %339 = sbr.rel (%p337) target = $region40
        $region39: #{byt5_classifier_forward.1} parent=11 // pred_region
          _
        $region40: #{byt5_classifier_forward.1} parent=11 // pred_fallthru
          _
        // Predicated region
        $region41: #{byt5_classifier_forward.1} parent=11 // pred_check
          %p340 = pneg %p215
        $region42: #{byt5_classifier_forward.1} parent=11 // pred_check_branch
          %342 = sbr.rel (%p340) target = $region44
        $region43: #{byt5_classifier_forward.1} parent=11 // pred_region
          _
        $region44: #{byt5_classifier_forward.1} parent=11 // pred_fallthru
          _
        // Predicated region
        $region45: #{byt5_classifier_forward.1} parent=11 // pred_check
          %p343 = pneg %p236
        $region46: #{byt5_classifier_forward.1} parent=11 // pred_check_branch
          %345 = sbr.rel (%p343) target = $region48
        $region47: #{byt5_classifier_forward.1} parent=11 // pred_region
          _
        $region48: #{byt5_classifier_forward.1} parent=11 // pred_fallthru
          _
        // Predicated region
        $region49: #{byt5_classifier_forward.1} parent=11 // pred_check
          %p346 = pneg %p257
        $region50: #{byt5_classifier_forward.1} parent=11 // pred_check_branch
          %348 = sbr.rel (%p346) target = $region52
        $region51: #{byt5_classifier_forward.1} parent=11 // pred_region
          _
        $region52: #{byt5_classifier_forward.1} parent=11 // pred_fallthru
          _
        // Predicated region
        $region53: #{byt5_classifier_forward.1} parent=11 // pred_check
          %p349 = pneg %p278
        $region54: #{byt5_classifier_forward.1} parent=11 // pred_check_branch
          %351 = sbr.rel (%p349) target = $region56
        $region55: #{byt5_classifier_forward.1} parent=11 // pred_region
          _
        $region56: #{byt5_classifier_forward.1} parent=11 // pred_fallthru
          _
      $region12: #{byt5_classifier_forward.1} parent=5 // pred_fallthru
        _
      %p352 = scmp.lt.s32.totalorder %s21, 2
      // Predicated region
      $region57: #{byt5_classifier_forward.1} parent=5 // pred_check
        %p353 = pneg %p352
      $region58: #{byt5_classifier_forward.1} parent=5 // pred_check_branch
        %355 = sbr.rel (%p353) target = $region60
      $region59: #{byt5_classifier_forward.1} parent=5 // pred_region
        // Predicated region
        $region61: #{byt5_classifier_forward.1} parent=59 // pred_check
          %p356 = pneg %p41
        $region62: #{byt5_classifier_forward.1} parent=59 // pred_check_branch
          %358 = sbr.rel (%p356) target = $region64
        $region63: #{byt5_classifier_forward.1} parent=59 // pred_region
          %p359 = scmp.lt.s32.totalorder %s21, 1
          %s360 = scalar_select %p359, %s21, 1
          %s361 = smul.addr %s360, 8
          %s362 = scalar_lea.vmem %s0, %s361
        $region64: #{byt5_classifier_forward.1} parent=59 // pred_fallthru
          _
      $region60: #{byt5_classifier_forward.1} parent=5 // pred_fallthru
        _
      %p363 = scmp.le.s32.totalorder 1, %s21
      %p364 = scmp.lt.s32.totalorder %s21, 3
      %p365 = pnand %p363, %p364
      %p366 = pneg %p365
      // Predicated region
      $region65: #{byt5_classifier_forward.1} parent=5 // pred_check
        _
      $region66: #{byt5_classifier_forward.1} parent=5 // pred_check_branch
        %368 = sbr.rel (%p365) target = $region68
      $region67: #{byt5_classifier_forward.1} parent=5 // pred_region
        %s369 = ssub.s32 %s21, 1
        %p370 = scmp.lt.s32.totalorder %s26, 1
        %s371 = scalar_select %p370, %s26, 1
        %s372 = smul.addr %s371, 8
        %s373 = scalar_lea.vmem %s0, %s372
        %p374 = pneg %p47
        %p375 = pneg %p44
        %p376 = pneg %p68
        %p377 = pneg %p65
        %p378 = pneg %p89
        %p379 = pneg %p86
        %p380 = pneg %p110
        %p381 = pneg %p107
        %p382 = pneg %p131
        %p383 = pneg %p128
        %p384 = pneg %p152
        %p385 = pneg %p149
        %p386 = pneg %p173
        %p387 = pneg %p170
        %p388 = pneg %p194
        %p389 = pneg %p191
        %p390 = pneg %p215
        %p391 = pneg %p212
        %p392 = pneg %p236
        %p393 = pneg %p233
        %p394 = pneg %p257
        %p395 = pneg %p254
        %p396 = pneg %p278
        %p397 = pneg %p275
        %p398 = pneg %p304
        %p399 = pneg %p301
        %s400 = sand.u32 %s291, 1
        %s401 = scalar_lea.sflag [#allocation3], %s400
        %s402 = sand.u32 %s291, 1
        %s403 = scalar_lea.vmem [#allocation2], %s402
        %p404 = scmp.lt.s32.totalorder %s26, 1
        %s405 = scalar_select %p404, %s26, 1
        %s406 = smul.addr %s405, 8
        %s407 = scalar_lea.vmem %s0, %s406
        %v409 = vld [vmem:[%s407] sm:$0xff]
        %v410 = vlaneseq
        %v411 = vand.u32 %v410, 127
        %412 = vset.pattern.permute.xlu0 0
        %413 = vperm.xlu0 %412, %v409
        %v414 = vpop.permute.xlu0 %413
        %vm415 = vcmp.eq.s32.totalorder %v414, %v411
        %v416 = vsel %vm415, 1, 0
        %v417 = vcvt.s32.f32 %v416
        %v418 = vld [vmem:[%s2] sm:$0xff]
        %v419 = vld [vmem:[%s2 + $0x8] sm:$0xff]
        %v420 = vld [vmem:[%s2 + $0x10] sm:$0xff]
        %v421 = vld [vmem:[%s2 + $0x18] sm:$0xff]
        %v422 = vld [vmem:[%s2 + $0x20] sm:$0xff]
        %v423 = vld [vmem:[%s2 + $0x28] sm:$0xff]
        %v424 = vld [vmem:[%s2 + $0x30] sm:$0xff]
        %v425 = vld [vmem:[%s2 + $0x38] sm:$0xff]
        %vm426 = vcmask 523264
        %v428 = vsel %vm426, %v417, 0
        %430 = vmatprep.subr.mxu0 0.0
        %431 = vmatpush1.msra.mxu0 0.0
        %432 = vmatprep.subr.mxu0 0.0
        %433 = vmatpush1.msra.mxu0 0.0
        %434 = vmatprep.subr.mxu0 0.0
        %435 = vmatpush1.msra.mxu0 0.0
        %436 = vmatprep.subr.mxu0 0.0
        %437 = vmatpush1.msra.mxu0 0.0
        %438 = vmatprep.subr.mxu0 0.0
        %439 = vmatpush1.msra.mxu0 0.0
        %440 = vmatprep.subr.mxu0 0.0
        %441 = vmatpush1.msra.mxu0 0.0
        %442 = vmatprep.subr.mxu0 0.0
        %443 = vmatpush1.msra.mxu0 0.0
        %444 = vmatprep.subr.mxu0 0.0
        %445 = vmatpush1.msra.mxu0 0.0
        %446 = vmatprep.subr.mxu0 0.0
        %447 = vmatpush1.msra.mxu0 %v425
        %448 = vmatprep.subr.mxu0 0.0
        %449 = vmatpush1.msra.mxu0 %v424
        %450 = vmatprep.subr.mxu0 0.0
        %451 = vmatpush1.msra.mxu0 %v423
        %452 = vmatprep.subr.mxu0 0.0
        %453 = vmatpush1.msra.mxu0 %v422
        %454 = vmatprep.subr.mxu0 0.0
        %455 = vmatpush1.msra.mxu0 %v421
        %456 = vmatprep.subr.mxu0 0.0
        %457 = vmatpush1.msra.mxu0 %v420
        %458 = vmatprep.subr.mxu0 0.0
        %459 = vmatpush1.msra.mxu0 %v419
        %460 = vmatprep.subr.mxu0 0.0
        %461 = vmatpush1.msra.mxu0 %v418
        %462 = vmatprep.subr.mxu0 0.0
        %463 = vmatpush2.msra.mxu0 0.0
        %464 = vmatprep.subr.mxu0 0.0
        %465 = vmatpush2.msra.mxu0 0.0
        %466 = vmatprep.subr.mxu0 0.0
        %467 = vmatpush2.msra.mxu0 0.0
        %468 = vmatprep.subr.mxu0 0.0
        %469 = vmatpush2.msra.mxu0 0.0
        %470 = vmatprep.subr.mxu0 0.0
        %471 = vmatpush2.msra.mxu0 0.0
        %472 = vmatprep.subr.mxu0 0.0
        %473 = vmatpush2.msra.mxu0 0.0
        %474 = vmatprep.subr.mxu0 0.0
        %475 = vmatpush2.msra.mxu0 0.0
        %476 = vmatprep.subr.mxu0 0.0
        %477 = vmatpush2.msra.mxu0 0.0
        %478 = vmatprep.subr.mxu0 0.0
        %479 = vmatpush2.msra.mxu0 0.0
        %480 = vmatprep.subr.mxu0 0.0
        %481 = vmatpush2.msra.mxu0 0.0
        %482 = vmatprep.subr.mxu0 0.0
        %483 = vmatpush2.msra.mxu0 0.0
        %484 = vmatprep.subr.mxu0 0.0
        %485 = vmatpush2.msra.mxu0 0.0
        %486 = vmatprep.subr.mxu0 0.0
        %487 = vmatpush2.msra.mxu0 0.0
        %488 = vmatprep.subr.mxu0 0.0
        %489 = vmatpush2.msra.mxu0 0.0
        %490 = vmatprep.subr.mxu0 0.0
        %491 = vmatpush2.msra.mxu0 0.0
        %492 = vmatprep.subr.mxu0 0.0
        %493 = vmatpush2.msra.mxu0 0.0
        %494 = vmatprep.mubr.f32.mxu0 0.0
        %495 = vmatmul.mubr.f32.gmra.mxu0 %v428
        %v496 = vpop.f32.mrf.mxu0
        %v497 = vadd.f32 0.0, %v496
        %v498 = vpop.f32.mrf.mxu0
        %499 = vdwg.mxu0
        %v500 = vld [vmem:[%s1] sm:$0xff]
        %v501 = vld [vmem:[%s1 + $0x8] sm:$0xff]
        %v502 = vld [vmem:[%s1 + $0x10] sm:$0xff]
        %v503 = vld [vmem:[%s1 + $0x18] sm:$0xff]
        %v504 = vld [vmem:[%s3] sm:$0x1]
        %v505 = vmul.f32 %v497, %v497
        %vm506 = vcmask 261120
        %v507 = vsel %vm506, %v505, 0.0
        %508 = vadd.xlane.f32.xlu0 %v507
        %v509 = vpop.xlane.xlu0 %508
        %v510 = vrcp.pop 32.0
        %v511 = vmul.f32 %v509, %v510
        %v512 = vadd.f32 %v511, 1e-06
        %v513 = vrsqrt.pop %v512
        %v514 = vmul.f32 %v497, %v513
        %v516 = vlaneseq
        %v517 = vshrl.u32 %v516, 7
        %v518 = vsub.s32 0, %v517
        %v519 = vrot.slane %v504, %v518
        %v521 = vmul.f32 %v514, %v519
        %v522 = vpack.c.bf16 %v521, %v521
        %v523 = vld [vmem:[%s4] sm:$0xf]
        %v524 = vld [vmem:[%s4 + $0x4] sm:$0xf]
        %v525 = vld [vmem:[%s4 + $0x8] sm:$0xf]
        %v526 = vld [vmem:[%s4 + $0xc] sm:$0xf]
        %v531 = vunpack.c.l.b16 %v523
        %v532 = vunpack.c.l.b16 %v524
        %v533 = vunpack.c.l.b16 %v525
        %v534 = vunpack.c.l.b16 %v526
        %v535 = vpack.c.b16 %v532, %v531
        %v536 = vpack.c.b16 %v534, %v533
        %v540 = vsel %vm506, %v522, 0
        %542 = vmatprep.subr.bf16.mxu0 0
        %543 = vmatpush1.bf16.msra.mxu0 0
        %544 = vmatprep.subr.bf16.mxu0 0
        %545 = vmatpush1.bf16.msra.mxu0 0
        %546 = vmatprep.subr.bf16.mxu0 0
        %547 = vmatpush1.bf16.msra.mxu0 0
        %548 = vmatprep.subr.bf16.mxu0 0
        %549 = vmatpush1.bf16.msra.mxu0 0
        %550 = vmatprep.subr.bf16.mxu0 0
        %551 = vmatpush1.bf16.msra.mxu0 0
        %552 = vmatprep.subr.bf16.mxu0 0
        %553 = vmatpush1.bf16.msra.mxu0 0
        %554 = vmatprep.subr.bf16.mxu0 0
        %555 = vmatpush1.bf16.msra.mxu0 %v536
        %556 = vmatprep.subr.bf16.mxu0 0
        %557 = vmatpush1.bf16.msra.mxu0 %v535
        %558 = vmatprep.subr.bf16.mxu0 0
        %559 = vmatpush2.bf16.msra.mxu0 0
        %560 = vmatprep.subr.bf16.mxu0 0
        %561 = vmatpush2.bf16.msra.mxu0 0
        %562 = vmatprep.subr.bf16.mxu0 0
        %563 = vmatpush2.bf16.msra.mxu0 0
        %564 = vmatprep.subr.bf16.mxu0 0
        %565 = vmatpush2.bf16.msra.mxu0 0
        %566 = vmatprep.subr.bf16.mxu0 0
        %567 = vmatpush2.bf16.msra.mxu0 0
        %568 = vmatprep.subr.bf16.mxu0 0
        %569 = vmatpush2.bf16.msra.mxu0 0
        %570 = vmatprep.subr.bf16.mxu0 0
        %571 = vmatpush2.bf16.msra.mxu0 0
        %572 = vmatprep.subr.bf16.mxu0 0
        %573 = vmatpush2.bf16.msra.mxu0 0
        %574 = vmatprep.mubr.bf16.mxu0 0
        %575 = vmatmul.mubr.bf16.gmra.mxu0 %v540
        %v576 = vpop.f32.mrf.mxu0
        %v577 = vadd.f32 0.0, %v576
        %v578 = vpop.f32.mrf.mxu0
        %v579 = vpop.f32.mrf.mxu0
        %v580 = vpop.f32.mrf.mxu0
        %581 = vdwg.mxu0
        %v583 = vcombine.high %v577, %v577
        %v585 = vunpack.c.l.s4 1966171168
        %v586 = vunpack.c.0.s8 %v585
        %v587 = vlaneseq
        %v588 = vshrl.u32 %v587, 7
        %v589 = vsub.s32 %v586, %v588
        %v590 = vrot.slane %v577, %v589
        %v592 = vunpack.c.l.s4 1966171168
        %v593 = vunpack.c.0.s8 %v592
        %v594 = vlaneseq
        %v595 = vshrl.u32 %v594, 7
        %v596 = vsub.s32 %v593, %v595
        %v597 = vrot.slane %v583, %v596
        %v598 = vcombine.high %v590, %v590
        %v599 = vcombine.high %v597, %v597
        %v601 = vunpack.c.l.s4 1966171168
        %v602 = vunpack.c.0.s8 %v601
        %v603 = vlaneseq
        %v604 = vshrl.u32 %v603, 7
        %v605 = vsub.s32 %v602, %v604
        %v606 = vrot.slane %v590, %v605
        %v608 = vunpack.c.l.s4 1966171168
        %v609 = vunpack.c.0.s8 %v608
        %v610 = vlaneseq
        %v611 = vshrl.u32 %v610, 7
        %v612 = vsub.s32 %v609, %v611
        %v613 = vrot.slane %v597, %v612
        %v615 = vunpack.c.l.s4 1966171168
        %v616 = vunpack.c.0.s8 %v615
        %v617 = vlaneseq
        %v618 = vshrl.u32 %v617, 7
        %v619 = vsub.s32 %v616, %v618
        %v620 = vrot.slane %v598, %v619
        %v622 = vunpack.c.l.s4 1966171168
        %v623 = vunpack.c.0.s8 %v622
        %v624 = vlaneseq
        %v625 = vshrl.u32 %v624, 7
        %v626 = vsub.s32 %v623, %v625
        %v627 = vrot.slane %v599, %v626
        %v628 = vcombine.high %v606, %v606
        %v629 = vcombine.high %v613, %v613
        %v630 = vcombine.high %v620, %v620
        %v631 = vcombine.high %v627, %v627
        %v632 = vlaneseq
        %v633 = vshrl.u32 %v632, 7
        %v634 = vsub.s32 0, %v633
        %v635 = vrot.slane %v606, %v634
        %v636 = vlaneseq
        %v637 = vshrl.u32 %v636, 7
        %v638 = vsub.s32 0, %v637
        %v639 = vrot.slane %v620, %v638
        %v640 = vlaneseq
        %v641 = vshrl.u32 %v640, 7
        %v642 = vsub.s32 0, %v641
        %v643 = vrot.slane %v628, %v642
        %v644 = vlaneseq
        %v645 = vshrl.u32 %v644, 7
        %v646 = vsub.s32 0, %v645
        %v647 = vrot.slane %v630, %v646
        %v648 = vlaneseq
        %v649 = vshrl.u32 %v648, 7
        %v650 = vsub.s32 0, %v649
        %v651 = vrot.slane %v613, %v650
        %v652 = vlaneseq
        %v653 = vshrl.u32 %v652, 7
        %v654 = vsub.s32 0, %v653
        %v655 = vrot.slane %v627, %v654
        %v656 = vlaneseq
        %v657 = vshrl.u32 %v656, 7
        %v658 = vsub.s32 0, %v657
        %v659 = vrot.slane %v629, %v658
        %v660 = vlaneseq
        %v661 = vshrl.u32 %v660, 7
        %v662 = vsub.s32 0, %v661
        %v663 = vrot.slane %v631, %v662
        %672 = vrot.lane.b32.xlu0 %v577, 96
        %v673 = vpop.permute.xlu0 %672
        %v675 = vmul.f32 %v635, %v673
        %v676 = vmul.f32 %v639, %v673
        %v677 = vmul.f32 %v643, %v673
        %v678 = vmul.f32 %v647, %v673
        %v679 = vmul.f32 %v651, %v673
        %v680 = vmul.f32 %v655, %v673
        %v681 = vmul.f32 %v659, %v673
        %v682 = vmul.f32 %v663, %v673
        %vm683 = vcmask 64512
        %v684 = vsel %vm683, %v675, 0.0
        %685 = vadd.xlane.f32.xlu0 %v684
        %v686 = vpop.xlane.xlu0 %685
        %v687 = vsel %vm683, %v676, 0.0
        %688 = vadd.xlane.f32.xlu0 %v687
        %v689 = vpop.xlane.xlu0 %688
        %v690 = vsel %vm683, %v677, 0.0
        %691 = vadd.xlane.f32.xlu0 %v690
        %v692 = vpop.xlane.xlu0 %691
        %v693 = vsel %vm683, %v678, 0.0
        %694 = vadd.xlane.f32.xlu0 %v693
        %v695 = vpop.xlane.xlu0 %694
        %v696 = vsel %vm683, %v679, 0.0
        %697 = vadd.xlane.f32.xlu0 %v696
        %v698 = vpop.xlane.xlu0 %697
        %v699 = vsel %vm683, %v680, 0.0
        %700 = vadd.xlane.f32.xlu0 %v699
        %v701 = vpop.xlane.xlu0 %700
        %v702 = vsel %vm683, %v681, 0.0
        %703 = vadd.xlane.f32.xlu0 %v702
        %v704 = vpop.xlane.xlu0 %703
        %v705 = vsel %vm683, %v682, 0.0
        %706 = vadd.xlane.f32.xlu0 %v705
        %v707 = vpop.xlane.xlu0 %706
        %v709 = vlaneseq
        %v710 = vshrl.u32 %v709, 7
        %v711 = vsub.s32 0, %v710
        %v712 = vrot.slane %v500, %v711
        %714 = vbcast.lane.b32.xlu0 %v712, 256
        %v715 = vpop.permute.xlu0 %714
        %v716 = vlaneseq
        %v717 = vshrl.u32 %v716, 7
        %v718 = vsub.s32 1, %v717
        %v719 = vrot.slane %v500, %v718
        %721 = vbcast.lane.b32.xlu0 %v719, 256
        %v722 = vpop.permute.xlu0 %721
        %v723 = vlaneseq
        %v724 = vshrl.u32 %v723, 7
        %v725 = vsub.s32 2, %v724
        %v726 = vrot.slane %v500, %v725
        %728 = vbcast.lane.b32.xlu0 %v726, 256
        %v729 = vpop.permute.xlu0 %728
        %v730 = vlaneseq
        %v731 = vshrl.u32 %v730, 7
        %v732 = vsub.s32 3, %v731
        %v733 = vrot.slane %v500, %v732
        %735 = vbcast.lane.b32.xlu0 %v733, 256
        %v736 = vpop.permute.xlu0 %735
        %v737 = vlaneseq
        %v738 = vshrl.u32 %v737, 7
        %v739 = vsub.s32 4, %v738
        %v740 = vrot.slane %v500, %v739
        %742 = vbcast.lane.b32.xlu0 %v740, 256
        %v743 = vpop.permute.xlu0 %742
        %v744 = vlaneseq
        %v745 = vshrl.u32 %v744, 7
        %v746 = vsub.s32 5, %v745
        %v747 = vrot.slane %v500, %v746
        %749 = vbcast.lane.b32.xlu0 %v747, 256
        %v750 = vpop.permute.xlu0 %749
        %v751 = vlaneseq
        %v752 = vshrl.u32 %v751, 7
        %v753 = vsub.s32 6, %v752
        %v754 = vrot.slane %v500, %v753
        %756 = vbcast.lane.b32.xlu0 %v754, 256
        %v757 = vpop.permute.xlu0 %756
        %v758 = vlaneseq
        %v759 = vshrl.u32 %v758, 7
        %v760 = vsub.s32 7, %v759
        %v761 = vrot.slane %v500, %v760
        %763 = vbcast.lane.b32.xlu0 %v761, 256
        %v764 = vpop.permute.xlu0 %763
        %v773 = vadd.f32 %v686, %v715
        %v774 = vadd.f32 %v689, %v722
        %v775 = vadd.f32 %v692, %v729
        %v776 = vadd.f32 %v695, %v736
        %v777 = vadd.f32 %v698, %v743
        %v778 = vadd.f32 %v701, %v750
        %v779 = vadd.f32 %v704, %v757
        %v780 = vadd.f32 %v707, %v764
        %789 = vset.pattern.permute.xlu0 0
        %790 = vperm.xlu0 %789, %v773
        %v791 = vpop.permute.xlu0 %790
        %792 = vset.pattern.permute.xlu0 0
        %793 = vperm.xlu0 %792, %v774
        %v794 = vpop.permute.xlu0 %793
        %795 = vset.pattern.permute.xlu0 0
        %796 = vperm.xlu0 %795, %v775
        %v797 = vpop.permute.xlu0 %796
        %798 = vset.pattern.permute.xlu0 0
        %799 = vperm.xlu0 %798, %v776
        %v800 = vpop.permute.xlu0 %799
        %801 = vset.pattern.permute.xlu0 0
        %802 = vperm.xlu0 %801, %v777
        %v803 = vpop.permute.xlu0 %802
        %804 = vset.pattern.permute.xlu0 0
        %805 = vperm.xlu0 %804, %v778
        %v806 = vpop.permute.xlu0 %805
        %807 = vset.pattern.permute.xlu0 0
        %808 = vperm.xlu0 %807, %v779
        %v809 = vpop.permute.xlu0 %808
        %810 = vset.pattern.permute.xlu0 0
        %811 = vperm.xlu0 %810, %v780
        %v812 = vpop.permute.xlu0 %811
        %v813 = vlaneseq
        %v814 = vshrl.u32 %v813, 7
        %v815 = vsub.s32 %v411, %v814
        %v816 = vrot.slane %v791, %v815
        %v817 = vlaneseq
        %v818 = vshrl.u32 %v817, 7
        %v819 = vsub.s32 %v411, %v818
        %v820 = vrot.slane %v794, %v819
        %v821 = vlaneseq
        %v822 = vshrl.u32 %v821, 7
        %v823 = vsub.s32 %v411, %v822
        %v824 = vrot.slane %v797, %v823
        %v825 = vlaneseq
        %v826 = vshrl.u32 %v825, 7
        %v827 = vsub.s32 %v411, %v826
        %v828 = vrot.slane %v800, %v827
        %v829 = vlaneseq
        %v830 = vshrl.u32 %v829, 7
        %v831 = vsub.s32 %v411, %v830
        %v832 = vrot.slane %v803, %v831
        %v833 = vlaneseq
        %v834 = vshrl.u32 %v833, 7
        %v835 = vsub.s32 %v411, %v834
        %v836 = vrot.slane %v806, %v835
        %v837 = vlaneseq
        %v838 = vshrl.u32 %v837, 7
        %v839 = vsub.s32 %v411, %v838
        %v840 = vrot.slane %v809, %v839
        %v841 = vlaneseq
        %v842 = vshrl.u32 %v841, 7
        %v843 = vsub.s32 %v411, %v842
        %v844 = vrot.slane %v812, %v843
        %vm845 = vcmask 1041409
        %v846 = vsel %vm845, %v820, %v816
        %vm847 = vcmask 1042434
        %v848 = vsel %vm847, %v824, %v846
        %vm849 = vcmask 1043459
        %v850 = vsel %vm849, %v828, %v848
        %vm851 = vcmask 1044484
        %v852 = vsel %vm851, %v832, %v850
        %vm853 = vcmask 1045509
        %v854 = vsel %vm853, %v836, %v852
        %vm855 = vcmask 1046534
        %v856 = vsel %vm855, %v840, %v854
        %vm857 = vcmask 1047559
        %v858 = vsel %vm857, %v844, %v856
        %v860 = vsel %vm683, %v858, -inf
        %861 = vmax.xlane.f32.xlu0 %v860
        %v862 = vpop.xlane.xlu0 %861
        %v864 = vlaneseq
        %v865 = vshrl.u32 %v864, 7
        %v866 = vsub.s32 0, %v865
        %v867 = vrot.slane %v862, %v866
        %v868 = vlaneseq
        %v869 = vshrl.u32 %v868, 7
        %v870 = vsub.s32 1, %v869
        %v871 = vrot.slane %v862, %v870
        %v872 = vlaneseq
        %v873 = vshrl.u32 %v872, 7
        %v874 = vsub.s32 2, %v873
        %v875 = vrot.slane %v862, %v874
        %v876 = vlaneseq
        %v877 = vshrl.u32 %v876, 7
        %v878 = vsub.s32 3, %v877
        %v879 = vrot.slane %v862, %v878
        %v880 = vlaneseq
        %v881 = vshrl.u32 %v880, 7
        %v882 = vsub.s32 4, %v881
        %v883 = vrot.slane %v862, %v882
        %v884 = vlaneseq
        %v885 = vshrl.u32 %v884, 7
        %v886 = vsub.s32 5, %v885
        %v887 = vrot.slane %v862, %v886
        %v888 = vlaneseq
        %v889 = vshrl.u32 %v888, 7
        %v890 = vsub.s32 6, %v889
        %v891 = vrot.slane %v862, %v890
        %v892 = vlaneseq
        %v893 = vshrl.u32 %v892, 7
        %v894 = vsub.s32 7, %v893
        %v895 = vrot.slane %v862, %v894
        %v904 = vsub.f32 %v773, %v867
        %v905 = vsub.f32 %v774, %v871
        %v906 = vsub.f32 %v775, %v875
        %v907 = vsub.f32 %v776, %v879
        %v908 = vsub.f32 %v777, %v883
        %v909 = vsub.f32 %v778, %v887
        %v910 = vsub.f32 %v779, %v891
        %v911 = vsub.f32 %v780, %v895
        %v912 = vmul.f32 %v904, 1.442695
        %v913 = vpow.pop %v912
        %v914 = vmul.f32 %v905, 1.442695
        %v915 = vpow.pop %v914
        %v916 = vmul.f32 %v906, 1.442695
        %v917 = vpow.pop %v916
        %v918 = vmul.f32 %v907, 1.442695
        %v919 = vpow.pop %v918
        %v920 = vmul.f32 %v908, 1.442695
        %v921 = vpow.pop %v920
        %v922 = vmul.f32 %v909, 1.442695
        %v923 = vpow.pop %v922
        %v924 = vmul.f32 %v910, 1.442695
        %v925 = vpow.pop %v924
        %v926 = vmul.f32 %v911, 1.442695
        %v927 = vpow.pop %v926
        %936 = vset.pattern.permute.xlu0 0
        %937 = vperm.xlu0 %936, %v913
        %v938 = vpop.permute.xlu0 %937
        %939 = vset.pattern.permute.xlu0 0
        %940 = vperm.xlu0 %939, %v915
        %v941 = vpop.permute.xlu0 %940
        %942 = vset.pattern.permute.xlu0 0
        %943 = vperm.xlu0 %942, %v917
        %v944 = vpop.permute.xlu0 %943
        %945 = vset.pattern.permute.xlu0 0
        %946 = vperm.xlu0 %945, %v919
        %v947 = vpop.permute.xlu0 %946
        %948 = vset.pattern.permute.xlu0 0
        %949 = vperm.xlu0 %948, %v921
        %v950 = vpop.permute.xlu0 %949
        %951 = vset.pattern.permute.xlu0 0
        %952 = vperm.xlu0 %951, %v923
        %v953 = vpop.permute.xlu0 %952
        %954 = vset.pattern.permute.xlu0 0
        %955 = vperm.xlu0 %954, %v925
        %v956 = vpop.permute.xlu0 %955
        %957 = vset.pattern.permute.xlu0 0
        %958 = vperm.xlu0 %957, %v927
        %v959 = vpop.permute.xlu0 %958
        %v960 = vlaneseq
        %v961 = vshrl.u32 %v960, 7
        %v962 = vsub.s32 %v411, %v961
        %v963 = vrot.slane %v938, %v962
        %v964 = vlaneseq
        %v965 = vshrl.u32 %v964, 7
        %v966 = vsub.s32 %v411, %v965
        %v967 = vrot.slane %v941, %v966
        %v968 = vlaneseq
        %v969 = vshrl.u32 %v968, 7
        %v970 = vsub.s32 %v411, %v969
        %v971 = vrot.slane %v944, %v970
        %v972 = vlaneseq
        %v973 = vshrl.u32 %v972, 7
        %v974 = vsub.s32 %v411, %v973
        %v975 = vrot.slane %v947, %v974
        %v976 = vlaneseq
        %v977 = vshrl.u32 %v976, 7
        %v978 = vsub.s32 %v411, %v977
        %v979 = vrot.slane %v950, %v978
        %v980 = vlaneseq
        %v981 = vshrl.u32 %v980, 7
        %v982 = vsub.s32 %v411, %v981
        %v983 = vrot.slane %v953, %v982
        %v984 = vlaneseq
        %v985 = vshrl.u32 %v984, 7
        %v986 = vsub.s32 %v411, %v985
        %v987 = vrot.slane %v956, %v986
        %v988 = vlaneseq
        %v989 = vshrl.u32 %v988, 7
        %v990 = vsub.s32 %v411, %v989
        %v991 = vrot.slane %v959, %v990
        %v992 = vsel %vm845, %v967, %v963
        %v993 = vsel %vm847, %v971, %v992
        %v994 = vsel %vm849, %v975, %v993
        %v995 = vsel %vm851, %v979, %v994
        %v996 = vsel %vm853, %v983, %v995
        %v997 = vsel %vm855, %v987, %v996
        %v998 = vsel %vm857, %v991, %v997
        %v1000 = vsel %vm683, %v998, 0.0
        %1001 = vadd.xlane.f32.xlu0 %v1000
        %v1002 = vpop.xlane.xlu0 %1001
        %v1003 = vrcp.pop %v1002
        %v1005 = vlaneseq
        %v1006 = vshrl.u32 %v1005, 7
        %v1007 = vsub.s32 0, %v1006
        %v1008 = vrot.slane %v1003, %v1007
        %v1009 = vlaneseq
        %v1010 = vshrl.u32 %v1009, 7
        %v1011 = vsub.s32 1, %v1010
        %v1012 = vrot.slane %v1003, %v1011
        %v1013 = vlaneseq
        %v1014 = vshrl.u32 %v1013, 7
        %v1015 = vsub.s32 2, %v1014
        %v1016 = vrot.slane %v1003, %v1015
        %v1017 = vlaneseq
        %v1018 = vshrl.u32 %v1017, 7
        %v1019 = vsub.s32 3, %v1018
        %v1020 = vrot.slane %v1003, %v1019
        %v1021 = vlaneseq
        %v1022 = vshrl.u32 %v1021, 7
        %v1023 = vsub.s32 4, %v1022
        %v1024 = vrot.slane %v1003, %v1023
        %v1025 = vlaneseq
        %v1026 = vshrl.u32 %v1025, 7
        %v1027 = vsub.s32 5, %v1026
        %v1028 = vrot.slane %v1003, %v1027
        %v1029 = vlaneseq
        %v1030 = vshrl.u32 %v1029, 7
        %v1031 = vsub.s32 6, %v1030
        %v1032 = vrot.slane %v1003, %v1031
        %v1033 = vlaneseq
        %v1034 = vshrl.u32 %v1033, 7
        %v1035 = vsub.s32 7, %v1034
        %v1036 = vrot.slane %v1003, %v1035
        %v1045 = vmul.f32 %v913, %v1008
        %v1046 = vmul.f32 %v915, %v1012
        %v1047 = vmul.f32 %v917, %v1016
        %v1048 = vmul.f32 %v919, %v1020
        %v1049 = vmul.f32 %v921, %v1024
        %v1050 = vmul.f32 %v923, %v1028
        %v1051 = vmul.f32 %v925, %v1032
        %v1052 = vmul.f32 %v927, %v1036
        %1054 = vset.pattern.permute.xlu0 0
        %1055 = vperm.xlu0 %1054, %v1045
        %v1056 = vpop.permute.xlu0 %1055
        %1059 = vset.pattern.permute.xlu0 0
        %1060 = vperm.xlu0 %1059, %v1046
        %v1061 = vpop.permute.xlu0 %1060
        %1064 = vset.pattern.permute.xlu0 0
        %1065 = vperm.xlu0 %1064, %v1047
        %v1066 = vpop.permute.xlu0 %1065
        %1069 = vset.pattern.permute.xlu0 0
        %1070 = vperm.xlu0 %1069, %v1048
        %v1071 = vpop.permute.xlu0 %1070
        %1074 = vset.pattern.permute.xlu0 0
        %1075 = vperm.xlu0 %1074, %v1049
        %v1076 = vpop.permute.xlu0 %1075
        %1079 = vset.pattern.permute.xlu0 0
        %1080 = vperm.xlu0 %1079, %v1050
        %v1081 = vpop.permute.xlu0 %1080
        %1084 = vset.pattern.permute.xlu0 0
        %1085 = vperm.xlu0 %1084, %v1051
        %v1086 = vpop.permute.xlu0 %1085
        %1089 = vset.pattern.permute.xlu0 0
        %1090 = vperm.xlu0 %1089, %v1052
        %v1091 = vpop.permute.xlu0 %1090
        %v1093 = vmul.f32 %v1056, %v577
        %v1094 = vmul.f32 %v1061, %v577
        %v1095 = vmul.f32 %v1066, %v577
        %v1096 = vmul.f32 %v1071, %v577
        %v1097 = vmul.f32 %v1076, %v577
        %v1098 = vmul.f32 %v1081, %v577
        %v1099 = vmul.f32 %v1086, %v577
        %v1100 = vmul.f32 %v1091, %v577
        %vm1101 = vcmask 589312
        %v1102 = vsel %vm1101, %v1093, 0.0
        %v1103 = vrot.slane %v1102, 4
        %v1104 = vadd.f32 %v1102, %v1103
        %v1105 = vrot.slane %v1104, 2
        %v1106 = vadd.f32 %v1104, %v1105
        %v1107 = vrot.slane %v1106, 1
        %v1108 = vadd.f32 %v1106, %v1107
        %v1109 = vsel %vm1101, %v1094, 0.0
        %v1110 = vrot.slane %v1109, 4
        %v1111 = vadd.f32 %v1109, %v1110
        %v1112 = vrot.slane %v1111, 2
        %v1113 = vadd.f32 %v1111, %v1112
        %v1114 = vrot.slane %v1113, 1
        %v1115 = vadd.f32 %v1113, %v1114
        %v1116 = vsel %vm1101, %v1095, 0.0
        %v1117 = vrot.slane %v1116, 4
        %v1118 = vadd.f32 %v1116, %v1117
        %v1119 = vrot.slane %v1118, 2
        %v1120 = vadd.f32 %v1118, %v1119
        %v1121 = vrot.slane %v1120, 1
        %v1122 = vadd.f32 %v1120, %v1121
        %v1123 = vsel %vm1101, %v1096, 0.0
        %v1124 = vrot.slane %v1123, 4
        %v1125 = vadd.f32 %v1123, %v1124
        %v1126 = vrot.slane %v1125, 2
        %v1127 = vadd.f32 %v1125, %v1126
        %v1128 = vrot.slane %v1127, 1
        %v1129 = vadd.f32 %v1127, %v1128
        %v1130 = vsel %vm1101, %v1097, 0.0
        %v1131 = vrot.slane %v1130, 4
        %v1132 = vadd.f32 %v1130, %v1131
        %v1133 = vrot.slane %v1132, 2
        %v1134 = vadd.f32 %v1132, %v1133
        %v1135 = vrot.slane %v1134, 1
        %v1136 = vadd.f32 %v1134, %v1135
        %v1137 = vsel %vm1101, %v1098, 0.0
        %v1138 = vrot.slane %v1137, 4
        %v1139 = vadd.f32 %v1137, %v1138
        %v1140 = vrot.slane %v1139, 2
        %v1141 = vadd.f32 %v1139, %v1140
        %v1142 = vrot.slane %v1141, 1
        %v1143 = vadd.f32 %v1141, %v1142
        %v1144 = vsel %vm1101, %v1099, 0.0
        %v1145 = vrot.slane %v1144, 4
        %v1146 = vadd.f32 %v1144, %v1145
        %v1147 = vrot.slane %v1146, 2
        %v1148 = vadd.f32 %v1146, %v1147
        %v1149 = vrot.slane %v1148, 1
        %v1150 = vadd.f32 %v1148, %v1149
        %v1151 = vsel %vm1101, %v1100, 0.0
        %v1152 = vrot.slane %v1151, 4
        %v1153 = vadd.f32 %v1151, %v1152
        %v1154 = vrot.slane %v1153, 2
        %v1155 = vadd.f32 %v1153, %v1154
        %v1156 = vrot.slane %v1155, 1
        %v1157 = vadd.f32 %v1155, %v1156
        %1166 = vrot.lane.b32.xlu0 %v675, 120
        %v1167 = vpop.permute.xlu0 %1166
        %1168 = vrot.lane.b32.xlu0 %v676, 120
        %v1169 = vpop.permute.xlu0 %1168
        %1170 = vrot.lane.b32.xlu0 %v677, 120
        %v1171 = vpop.permute.xlu0 %1170
        %1172 = vrot.lane.b32.xlu0 %v678, 120
        %v1173 = vpop.permute.xlu0 %1172
        %1174 = vrot.lane.b32.xlu0 %v679, 120
        %v1175 = vpop.permute.xlu0 %1174
        %1176 = vrot.lane.b32.xlu0 %v680, 120
        %v1177 = vpop.permute.xlu0 %1176
        %1178 = vrot.lane.b32.xlu0 %v681, 120
        %v1179 = vpop.permute.xlu0 %1178
        %1180 = vrot.lane.b32.xlu0 %v682, 120
        %v1181 = vpop.permute.xlu0 %1180
        %v1190 = vsel %vm683, %v1167, 0.0
        %1191 = vadd.xlane.f32.xlu0 %v1190
        %v1192 = vpop.xlane.xlu0 %1191
        %v1193 = vsel %vm683, %v1169, 0.0
        %1194 = vadd.xlane.f32.xlu0 %v1193
        %v1195 = vpop.xlane.xlu0 %1194
        %v1196 = vsel %vm683, %v1171, 0.0
        %1197 = vadd.xlane.f32.xlu0 %v1196
        %v1198 = vpop.xlane.xlu0 %1197
        %v1199 = vsel %vm683, %v1173, 0.0
        %1200 = vadd.xlane.f32.xlu0 %v1199
        %v1201 = vpop.xlane.xlu0 %1200
        %v1202 = vsel %vm683, %v1175, 0.0
        %1203 = vadd.xlane.f32.xlu0 %v1202
        %v1204 = vpop.xlane.xlu0 %1203
        %v1205 = vsel %vm683, %v1177, 0.0
        %1206 = vadd.xlane.f32.xlu0 %v1205
        %v1207 = vpop.xlane.xlu0 %1206
        %v1208 = vsel %vm683, %v1179, 0.0
        %1209 = vadd.xlane.f32.xlu0 %v1208
        %v1210 = vpop.xlane.xlu0 %1209
        %v1211 = vsel %vm683, %v1181, 0.0
        %1212 = vadd.xlane.f32.xlu0 %v1211
        %v1213 = vpop.xlane.xlu0 %1212
        %v1215 = vlaneseq
        %v1216 = vshrl.u32 %v1215, 7
        %v1217 = vsub.s32 0, %v1216
        %v1218 = vrot.slane %v501, %v1217
        %1220 = vbcast.lane.b32.xlu0 %v1218, 256
        %v1221 = vpop.permute.xlu0 %1220
        %v1222 = vlaneseq
        %v1223 = vshrl.u32 %v1222, 7
        %v1224 = vsub.s32 1, %v1223
        %v1225 = vrot.slane %v501, %v1224
        %1227 = vbcast.lane.b32.xlu0 %v1225, 256
        %v1228 = vpop.permute.xlu0 %1227
        %v1229 = vlaneseq
        %v1230 = vshrl.u32 %v1229, 7
        %v1231 = vsub.s32 2, %v1230
        %v1232 = vrot.slane %v501, %v1231
        %1234 = vbcast.lane.b32.xlu0 %v1232, 256
        %v1235 = vpop.permute.xlu0 %1234
        %v1236 = vlaneseq
        %v1237 = vshrl.u32 %v1236, 7
        %v1238 = vsub.s32 3, %v1237
        %v1239 = vrot.slane %v501, %v1238
        %1241 = vbcast.lane.b32.xlu0 %v1239, 256
        %v1242 = vpop.permute.xlu0 %1241
        %v1243 = vlaneseq
        %v1244 = vshrl.u32 %v1243, 7
        %v1245 = vsub.s32 4, %v1244
        %v1246 = vrot.slane %v501, %v1245
        %1248 = vbcast.lane.b32.xlu0 %v1246, 256
        %v1249 = vpop.permute.xlu0 %1248
        %v1250 = vlaneseq
        %v1251 = vshrl.u32 %v1250, 7
        %v1252 = vsub.s32 5, %v1251
        %v1253 = vrot.slane %v501, %v1252
        %1255 = vbcast.lane.b32.xlu0 %v1253, 256
        %v1256 = vpop.permute.xlu0 %1255
        %v1257 = vlaneseq
        %v1258 = vshrl.u32 %v1257, 7
        %v1259 = vsub.s32 6, %v1258
        %v1260 = vrot.slane %v501, %v1259
        %1262 = vbcast.lane.b32.xlu0 %v1260, 256
        %v1263 = vpop.permute.xlu0 %1262
        %v1264 = vlaneseq
        %v1265 = vshrl.u32 %v1264, 7
        %v1266 = vsub.s32 7, %v1265
        %v1267 = vrot.slane %v501, %v1266
        %1269 = vbcast.lane.b32.xlu0 %v1267, 256
        %v1270 = vpop.permute.xlu0 %1269
        %v1279 = vadd.f32 %v1192, %v1221
        %v1280 = vadd.f32 %v1195, %v1228
        %v1281 = vadd.f32 %v1198, %v1235
        %v1282 = vadd.f32 %v1201, %v1242
        %v1283 = vadd.f32 %v1204, %v1249
        %v1284 = vadd.f32 %v1207, %v1256
        %v1285 = vadd.f32 %v1210, %v1263
        %v1286 = vadd.f32 %v1213, %v1270
        %1295 = vset.pattern.permute.xlu0 0
        %1296 = vperm.xlu0 %1295, %v1279
        %v1297 = vpop.permute.xlu0 %1296
        %1298 = vset.pattern.permute.xlu0 0
        %1299 = vperm.xlu0 %1298, %v1280
        %v1300 = vpop.permute.xlu0 %1299
        %1301 = vset.pattern.permute.xlu0 0
        %1302 = vperm.xlu0 %1301, %v1281
        %v1303 = vpop.permute.xlu0 %1302
        %1304 = vset.pattern.permute.xlu0 0
        %1305 = vperm.xlu0 %1304, %v1282
        %v1306 = vpop.permute.xlu0 %1305
        %1307 = vset.pattern.permute.xlu0 0
        %1308 = vperm.xlu0 %1307, %v1283
        %v1309 = vpop.permute.xlu0 %1308
        %1310 = vset.pattern.permute.xlu0 0
        %1311 = vperm.xlu0 %1310, %v1284
        %v1312 = vpop.permute.xlu0 %1311
        %1313 = vset.pattern.permute.xlu0 0
        %1314 = vperm.xlu0 %1313, %v1285
        %v1315 = vpop.permute.xlu0 %1314
        %1316 = vset.pattern.permute.xlu0 0
        %1317 = vperm.xlu0 %1316, %v1286
        %v1318 = vpop.permute.xlu0 %1317
        %v1319 = vlaneseq
        %v1320 = vshrl.u32 %v1319, 7
        %v1321 = vsub.s32 %v411, %v1320
        %v1322 = vrot.slane %v1297, %v1321
        %v1323 = vlaneseq
        %v1324 = vshrl.u32 %v1323, 7
        %v1325 = vsub.s32 %v411, %v1324
        %v1326 = vrot.slane %v1300, %v1325
        %v1327 = vlaneseq
        %v1328 = vshrl.u32 %v1327, 7
        %v1329 = vsub.s32 %v411, %v1328
        %v1330 = vrot.slane %v1303, %v1329
        %v1331 = vlaneseq
        %v1332 = vshrl.u32 %v1331, 7
        %v1333 = vsub.s32 %v411, %v1332
        %v1334 = vrot.slane %v1306, %v1333
        %v1335 = vlaneseq
        %v1336 = vshrl.u32 %v1335, 7
        %v1337 = vsub.s32 %v411, %v1336
        %v1338 = vrot.slane %v1309, %v1337
        %v1339 = vlaneseq
        %v1340 = vshrl.u32 %v1339, 7
        %v1341 = vsub.s32 %v411, %v1340
        %v1342 = vrot.slane %v1312, %v1341
        %v1343 = vlaneseq
        %v1344 = vshrl.u32 %v1343, 7
        %v1345 = vsub.s32 %v411, %v1344
        %v1346 = vrot.slane %v1315, %v1345
        %v1347 = vlaneseq
        %v1348 = vshrl.u32 %v1347, 7
        %v1349 = vsub.s32 %v411, %v1348
        %v1350 = vrot.slane %v1318, %v1349
        %v1351 = vsel %vm845, %v1326, %v1322
        %v1352 = vsel %vm847, %v1330, %v1351
        %v1353 = vsel %vm849, %v1334, %v1352
        %v1354 = vsel %vm851, %v1338, %v1353
        %v1355 = vsel %vm853, %v1342, %v1354
        %v1356 = vsel %vm855, %v1346, %v1355
        %v1357 = vsel %vm857, %v1350, %v1356
        %v1359 = vsel %vm683, %v1357, -inf
        %1360 = vmax.xlane.f32.xlu0 %v1359
        %v1361 = vpop.xlane.xlu0 %1360
        %v1363 = vlaneseq
        %v1364 = vshrl.u32 %v1363, 7
        %v1365 = vsub.s32 0, %v1364
        %v1366 = vrot.slane %v1361, %v1365
        %v1367 = vlaneseq
        %v1368 = vshrl.u32 %v1367, 7
        %v1369 = vsub.s32 1, %v1368
        %v1370 = vrot.slane %v1361, %v1369
        %v1371 = vlaneseq
        %v1372 = vshrl.u32 %v1371, 7
        %v1373 = vsub.s32 2, %v1372
        %v1374 = vrot.slane %v1361, %v1373
        %v1375 = vlaneseq
        %v1376 = vshrl.u32 %v1375, 7
        %v1377 = vsub.s32 3, %v1376
        %v1378 = vrot.slane %v1361, %v1377
        %v1379 = vlaneseq
        %v1380 = vshrl.u32 %v1379, 7
        %v1381 = vsub.s32 4, %v1380
        %v1382 = vrot.slane %v1361, %v1381
        %v1383 = vlaneseq
        %v1384 = vshrl.u32 %v1383, 7
        %v1385 = vsub.s32 5, %v1384
        %v1386 = vrot.slane %v1361, %v1385
        %v1387 = vlaneseq
        %v1388 = vshrl.u32 %v1387, 7
        %v1389 = vsub.s32 6, %v1388
        %v1390 = vrot.slane %v1361, %v1389
        %v1391 = vlaneseq
        %v1392 = vshrl.u32 %v1391, 7
        %v1393 = vsub.s32 7, %v1392
        %v1394 = vrot.slane %v1361, %v1393
        %v1403 = vsub.f32 %v1279, %v1366
        %v1404 = vsub.f32 %v1280, %v1370
        %v1405 = vsub.f32 %v1281, %v1374
        %v1406 = vsub.f32 %v1282, %v1378
        %v1407 = vsub.f32 %v1283, %v1382
        %v1408 = vsub.f32 %v1284, %v1386
        %v1409 = vsub.f32 %v1285, %v1390
        %v1410 = vsub.f32 %v1286, %v1394
        %v1411 = vmul.f32 %v1403, 1.442695
        %v1412 = vpow.pop %v1411
        %v1413 = vmul.f32 %v1404, 1.442695
        %v1414 = vpow.pop %v1413
        %v1415 = vmul.f32 %v1405, 1.442695
        %v1416 = vpow.pop %v1415
        %v1417 = vmul.f32 %v1406, 1.442695
        %v1418 = vpow.pop %v1417
        %v1419 = vmul.f32 %v1407, 1.442695
        %v1420 = vpow.pop %v1419
        %v1421 = vmul.f32 %v1408, 1.442695
        %v1422 = vpow.pop %v1421
        %v1423 = vmul.f32 %v1409, 1.442695
        %v1424 = vpow.pop %v1423
        %v1425 = vmul.f32 %v1410, 1.442695
        %v1426 = vpow.pop %v1425
        %1435 = vset.pattern.permute.xlu0 0
        %1436 = vperm.xlu0 %1435, %v1412
        %v1437 = vpop.permute.xlu0 %1436
        %1438 = vset.pattern.permute.xlu0 0
        %1439 = vperm.xlu0 %1438, %v1414
        %v1440 = vpop.permute.xlu0 %1439
        %1441 = vset.pattern.permute.xlu0 0
        %1442 = vperm.xlu0 %1441, %v1416
        %v1443 = vpop.permute.xlu0 %1442
        %1444 = vset.pattern.permute.xlu0 0
        %1445 = vperm.xlu0 %1444, %v1418
        %v1446 = vpop.permute.xlu0 %1445
        %1447 = vset.pattern.permute.xlu0 0
        %1448 = vperm.xlu0 %1447, %v1420
        %v1449 = vpop.permute.xlu0 %1448
        %1450 = vset.pattern.permute.xlu0 0
        %1451 = vperm.xlu0 %1450, %v1422
        %v1452 = vpop.permute.xlu0 %1451
        %1453 = vset.pattern.permute.xlu0 0
        %1454 = vperm.xlu0 %1453, %v1424
        %v1455 = vpop.permute.xlu0 %1454
        %1456 = vset.pattern.permute.xlu0 0
        %1457 = vperm.xlu0 %1456, %v1426
        %v1458 = vpop.permute.xlu0 %1457
        %v1459 = vlaneseq
        %v1460 = vshrl.u32 %v1459, 7
        %v1461 = vsub.s32 %v411, %v1460
        %v1462 = vrot.slane %v1437, %v1461
        %v1463 = vlaneseq
        %v1464 = vshrl.u32 %v1463, 7
        %v1465 = vsub.s32 %v411, %v1464
        %v1466 = vrot.slane %v1440, %v1465
        %v1467 = vlaneseq
        %v1468 = vshrl.u32 %v1467, 7
        %v1469 = vsub.s32 %v411, %v1468
        %v1470 = vrot.slane %v1443, %v1469
        %v1471 = vlaneseq
        %v1472 = vshrl.u32 %v1471, 7
        %v1473 = vsub.s32 %v411, %v1472
        %v1474 = vrot.slane %v1446, %v1473
        %v1475 = vlaneseq
        %v1476 = vshrl.u32 %v1475, 7
        %v1477 = vsub.s32 %v411, %v1476
        %v1478 = vrot.slane %v1449, %v1477
        %v1479 = vlaneseq
        %v1480 = vshrl.u32 %v1479, 7
        %v1481 = vsub.s32 %v411, %v1480
        %v1482 = vrot.slane %v1452, %v1481
        %v1483 = vlaneseq
        %v1484 = vshrl.u32 %v1483, 7
        %v1485 = vsub.s32 %v411, %v1484
        %v1486 = vrot.slane %v1455, %v1485
        %v1487 = vlaneseq
        %v1488 = vshrl.u32 %v1487, 7
        %v1489 = vsub.s32 %v411, %v1488
        %v1490 = vrot.slane %v1458, %v1489
        %v1491 = vsel %vm845, %v1466, %v1462
        %v1492 = vsel %vm847, %v1470, %v1491
        %v1493 = vsel %vm849, %v1474, %v1492
        %v1494 = vsel %vm851, %v1478, %v1493
        %v1495 = vsel %vm853, %v1482, %v1494
        %v1496 = vsel %vm855, %v1486, %v1495
        %v1497 = vsel %vm857, %v1490, %v1496
        %v1499 = vsel %vm683, %v1497, 0.0
        %1500 = vadd.xlane.f32.xlu0 %v1499
        %v1501 = vpop.xlane.xlu0 %1500
        %v1502 = vrcp.pop %v1501
        %v1504 = vlaneseq
        %v1505 = vshrl.u32 %v1504, 7
        %v1506 = vsub.s32 0, %v1505
        %v1507 = vrot.slane %v1502, %v1506
        %v1508 = vlaneseq
        %v1509 = vshrl.u32 %v1508, 7
        %v1510 = vsub.s32 1, %v1509
        %v1511 = vrot.slane %v1502, %v1510
        %v1512 = vlaneseq
        %v1513 = vshrl.u32 %v1512, 7
        %v1514 = vsub.s32 2, %v1513
        %v1515 = vrot.slane %v1502, %v1514
        %v1516 = vlaneseq
        %v1517 = vshrl.u32 %v1516, 7
        %v1518 = vsub.s32 3, %v1517
        %v1519 = vrot.slane %v1502, %v1518
        %v1520 = vlaneseq
        %v1521 = vshrl.u32 %v1520, 7
        %v1522 = vsub.s32 4, %v1521
        %v1523 = vrot.slane %v1502, %v1522
        %v1524 = vlaneseq
        %v1525 = vshrl.u32 %v1524, 7
        %v1526 = vsub.s32 5, %v1525
        %v1527 = vrot.slane %v1502, %v1526
        %v1528 = vlaneseq
        %v1529 = vshrl.u32 %v1528, 7
        %v1530 = vsub.s32 6, %v1529
        %v1531 = vrot.slane %v1502, %v1530
        %v1532 = vlaneseq
        %v1533 = vshrl.u32 %v1532, 7
        %v1534 = vsub.s32 7, %v1533
        %v1535 = vrot.slane %v1502, %v1534
        %v1544 = vmul.f32 %v1412, %v1507
        %v1545 = vmul.f32 %v1414, %v1511
        %v1546 = vmul.f32 %v1416, %v1515
        %v1547 = vmul.f32 %v1418, %v1519
        %v1548 = vmul.f32 %v1420, %v1523
        %v1549 = vmul.f32 %v1422, %v1527
        %v1550 = vmul.f32 %v1424, %v1531
        %v1551 = vmul.f32 %v1426, %v1535
        %1553 = vset.pattern.permute.xlu0 0
        %1554 = vperm.xlu0 %1553, %v1544
        %v1555 = vpop.permute.xlu0 %1554
        %1558 = vset.pattern.permute.xlu0 0
        %1559 = vperm.xlu0 %1558, %v1545
        %v1560 = vpop.permute.xlu0 %1559
        %1563 = vset.pattern.permute.xlu0 0
        %1564 = vperm.xlu0 %1563, %v1546
        %v1565 = vpop.permute.xlu0 %1564
        %1568 = vset.pattern.permute.xlu0 0
        %1569 = vperm.xlu0 %1568, %v1547
        %v1570 = vpop.permute.xlu0 %1569
        %1573 = vset.pattern.permute.xlu0 0
        %1574 = vperm.xlu0 %1573, %v1548
        %v1575 = vpop.permute.xlu0 %1574
        %1578 = vset.pattern.permute.xlu0 0
        %1579 = vperm.xlu0 %1578, %v1549
        %v1580 = vpop.permute.xlu0 %1579
        %1583 = vset.pattern.permute.xlu0 0
        %1584 = vperm.xlu0 %1583, %v1550
        %v1585 = vpop.permute.xlu0 %1584
        %1588 = vset.pattern.permute.xlu0 0
        %1589 = vperm.xlu0 %1588, %v1551
        %v1590 = vpop.permute.xlu0 %1589
        %v1592 = vmul.f32 %v1555, %v577
        %v1593 = vmul.f32 %v1560, %v577
        %v1594 = vmul.f32 %v1565, %v577
        %v1595 = vmul.f32 %v1570, %v577
        %v1596 = vmul.f32 %v1575, %v577
        %v1597 = vmul.f32 %v1580, %v577
        %v1598 = vmul.f32 %v1585, %v577
        %v1599 = vmul.f32 %v1590, %v577
        %vm1600 = vcmask 654912
        %v1601 = vsel %vm1600, %v1592, 0.0
        %v1602 = vrot.slane %v1601, 4
        %v1603 = vadd.f32 %v1601, %v1602
        %v1604 = vrot.slane %v1603, 2
        %v1605 = vadd.f32 %v1603, %v1604
        %v1606 = vrot.slane %v1605, 1
        %v1607 = vadd.f32 %v1605, %v1606
        %v1608 = vsel %vm1600, %v1593, 0.0
        %v1609 = vrot.slane %v1608, 4
        %v1610 = vadd.f32 %v1608, %v1609
        %v1611 = vrot.slane %v1610, 2
        %v1612 = vadd.f32 %v1610, %v1611
        %v1613 = vrot.slane %v1612, 1
        %v1614 = vadd.f32 %v1612, %v1613
        %v1615 = vsel %vm1600, %v1594, 0.0
        %v1616 = vrot.slane %v1615, 4
        %v1617 = vadd.f32 %v1615, %v1616
        %v1618 = vrot.slane %v1617, 2
        %v1619 = vadd.f32 %v1617, %v1618
        %v1620 = vrot.slane %v1619, 1
        %v1621 = vadd.f32 %v1619, %v1620
        %v1622 = vsel %vm1600, %v1595, 0.0
        %v1623 = vrot.slane %v1622, 4
        %v1624 = vadd.f32 %v1622, %v1623
        %v1625 = vrot.slane %v1624, 2
        %v1626 = vadd.f32 %v1624, %v1625
        %v1627 = vrot.slane %v1626, 1
        %v1628 = vadd.f32 %v1626, %v1627
        %v1629 = vsel %vm1600, %v1596, 0.0
        %v1630 = vrot.slane %v1629, 4
        %v1631 = vadd.f32 %v1629, %v1630
        %v1632 = vrot.slane %v1631, 2
        %v1633 = vadd.f32 %v1631, %v1632
        %v1634 = vrot.slane %v1633, 1
        %v1635 = vadd.f32 %v1633, %v1634
        %v1636 = vsel %vm1600, %v1597, 0.0
        %v1637 = vrot.slane %v1636, 4
        %v1638 = vadd.f32 %v1636, %v1637
        %v1639 = vrot.slane %v1638, 2
        %v1640 = vadd.f32 %v1638, %v1639
        %v1641 = vrot.slane %v1640, 1
        %v1642 = vadd.f32 %v1640, %v1641
        %v1643 = vsel %vm1600, %v1598, 0.0
        %v1644 = vrot.slane %v1643, 4
        %v1645 = vadd.f32 %v1643, %v1644
        %v1646 = vrot.slane %v1645, 2
        %v1647 = vadd.f32 %v1645, %v1646
        %v1648 = vrot.slane %v1647, 1
        %v1649 = vadd.f32 %v1647, %v1648
        %v1650 = vsel %vm1600, %v1599, 0.0
        %v1651 = vrot.slane %v1650, 4
        %v1652 = vadd.f32 %v1650, %v1651
        %v1653 = vrot.slane %v1652, 2
        %v1654 = vadd.f32 %v1652, %v1653
        %v1655 = vrot.slane %v1654, 1
        %v1656 = vadd.f32 %v1654, %v1655
        %1657 = vrot.lane.b32.xlu0 %v675, 112
        %v1658 = vpop.permute.xlu0 %1657
        %1659 = vrot.lane.b32.xlu0 %v676, 112
        %v1660 = vpop.permute.xlu0 %1659
        %1661 = vrot.lane.b32.xlu0 %v677, 112
        %v1662 = vpop.permute.xlu0 %1661
        %1663 = vrot.lane.b32.xlu0 %v678, 112
        %v1664 = vpop.permute.xlu0 %1663
        %1665 = vrot.lane.b32.xlu0 %v679, 112
        %v1666 = vpop.permute.xlu0 %1665
        %1667 = vrot.lane.b32.xlu0 %v680, 112
        %v1668 = vpop.permute.xlu0 %1667
        %1669 = vrot.lane.b32.xlu0 %v681, 112
        %v1670 = vpop.permute.xlu0 %1669
        %1671 = vrot.lane.b32.xlu0 %v682, 112
        %v1672 = vpop.permute.xlu0 %1671
        %v1681 = vsel %vm683, %v1658, 0.0
        %1682 = vadd.xlane.f32.xlu0 %v1681
        %v1683 = vpop.xlane.xlu0 %1682
        %v1684 = vsel %vm683, %v1660, 0.0
        %1685 = vadd.xlane.f32.xlu0 %v1684
        %v1686 = vpop.xlane.xlu0 %1685
        %v1687 = vsel %vm683, %v1662, 0.0
        %1688 = vadd.xlane.f32.xlu0 %v1687
        %v1689 = vpop.xlane.xlu0 %1688
        %v1690 = vsel %vm683, %v1664, 0.0
        %1691 = vadd.xlane.f32.xlu0 %v1690
        %v1692 = vpop.xlane.xlu0 %1691
        %v1693 = vsel %vm683, %v1666, 0.0
        %1694 = vadd.xlane.f32.xlu0 %v1693
        %v1695 = vpop.xlane.xlu0 %1694
        %v1696 = vsel %vm683, %v1668, 0.0
        %1697 = vadd.xlane.f32.xlu0 %v1696
        %v1698 = vpop.xlane.xlu0 %1697
        %v1699 = vsel %vm683, %v1670, 0.0
        %1700 = vadd.xlane.f32.xlu0 %v1699
        %v1701 = vpop.xlane.xlu0 %1700
        %v1702 = vsel %vm683, %v1672, 0.0
        %1703 = vadd.xlane.f32.xlu0 %v1702
        %v1704 = vpop.xlane.xlu0 %1703
        %v1706 = vlaneseq
        %v1707 = vshrl.u32 %v1706, 7
        %v1708 = vsub.s32 0, %v1707
        %v1709 = vrot.slane %v502, %v1708
        %1711 = vbcast.lane.b32.xlu0 %v1709, 256
        %v1712 = vpop.permute.xlu0 %1711
        %v1713 = vlaneseq
        %v1714 = vshrl.u32 %v1713, 7
        %v1715 = vsub.s32 1, %v1714
        %v1716 = vrot.slane %v502, %v1715
        %1718 = vbcast.lane.b32.xlu0 %v1716, 256
        %v1719 = vpop.permute.xlu0 %1718
        %v1720 = vlaneseq
        %v1721 = vshrl.u32 %v1720, 7
        %v1722 = vsub.s32 2, %v1721
        %v1723 = vrot.slane %v502, %v1722
        %1725 = vbcast.lane.b32.xlu0 %v1723, 256
        %v1726 = vpop.permute.xlu0 %1725
        %v1727 = vlaneseq
        %v1728 = vshrl.u32 %v1727, 7
        %v1729 = vsub.s32 3, %v1728
        %v1730 = vrot.slane %v502, %v1729
        %1732 = vbcast.lane.b32.xlu0 %v1730, 256
        %v1733 = vpop.permute.xlu0 %1732
        %v1734 = vlaneseq
        %v1735 = vshrl.u32 %v1734, 7
        %v1736 = vsub.s32 4, %v1735
        %v1737 = vrot.slane %v502, %v1736
        %1739 = vbcast.lane.b32.xlu0 %v1737, 256
        %v1740 = vpop.permute.xlu0 %1739
        %v1741 = vlaneseq
        %v1742 = vshrl.u32 %v1741, 7
        %v1743 = vsub.s32 5, %v1742
        %v1744 = vrot.slane %v502, %v1743
        %1746 = vbcast.lane.b32.xlu0 %v1744, 256
        %v1747 = vpop.permute.xlu0 %1746
        %v1748 = vlaneseq
        %v1749 = vshrl.u32 %v1748, 7
        %v1750 = vsub.s32 6, %v1749
        %v1751 = vrot.slane %v502, %v1750
        %1753 = vbcast.lane.b32.xlu0 %v1751, 256
        %v1754 = vpop.permute.xlu0 %1753
        %v1755 = vlaneseq
        %v1756 = vshrl.u32 %v1755, 7
        %v1757 = vsub.s32 7, %v1756
        %v1758 = vrot.slane %v502, %v1757
        %1760 = vbcast.lane.b32.xlu0 %v1758, 256
        %v1761 = vpop.permute.xlu0 %1760
        %v1770 = vadd.f32 %v1683, %v1712
        %v1771 = vadd.f32 %v1686, %v1719
        %v1772 = vadd.f32 %v1689, %v1726
        %v1773 = vadd.f32 %v1692, %v1733
        %v1774 = vadd.f32 %v1695, %v1740
        %v1775 = vadd.f32 %v1698, %v1747
        %v1776 = vadd.f32 %v1701, %v1754
        %v1777 = vadd.f32 %v1704, %v1761
        %1786 = vset.pattern.permute.xlu0 0
        %1787 = vperm.xlu0 %1786, %v1770
        %v1788 = vpop.permute.xlu0 %1787
        %1789 = vset.pattern.permute.xlu0 0
        %1790 = vperm.xlu0 %1789, %v1771
        %v1791 = vpop.permute.xlu0 %1790
        %1792 = vset.pattern.permute.xlu0 0
        %1793 = vperm.xlu0 %1792, %v1772
        %v1794 = vpop.permute.xlu0 %1793
        %1795 = vset.pattern.permute.xlu0 0
        %1796 = vperm.xlu0 %1795, %v1773
        %v1797 = vpop.permute.xlu0 %1796
        %1798 = vset.pattern.permute.xlu0 0
        %1799 = vperm.xlu0 %1798, %v1774
        %v1800 = vpop.permute.xlu0 %1799
        %1801 = vset.pattern.permute.xlu0 0
        %1802 = vperm.xlu0 %1801, %v1775
        %v1803 = vpop.permute.xlu0 %1802
        %1804 = vset.pattern.permute.xlu0 0
        %1805 = vperm.xlu0 %1804, %v1776
        %v1806 = vpop.permute.xlu0 %1805
        %1807 = vset.pattern.permute.xlu0 0
        %1808 = vperm.xlu0 %1807, %v1777
        %v1809 = vpop.permute.xlu0 %1808
        %v1810 = vlaneseq
        %v1811 = vshrl.u32 %v1810, 7
        %v1812 = vsub.s32 %v411, %v1811
        %v1813 = vrot.slane %v1788, %v1812
        %v1814 = vlaneseq
        %v1815 = vshrl.u32 %v1814, 7
        %v1816 = vsub.s32 %v411, %v1815
        %v1817 = vrot.slane %v1791, %v1816
        %v1818 = vlaneseq
        %v1819 = vshrl.u32 %v1818, 7
        %v1820 = vsub.s32 %v411, %v1819
        %v1821 = vrot.slane %v1794, %v1820
        %v1822 = vlaneseq
        %v1823 = vshrl.u32 %v1822, 7
        %v1824 = vsub.s32 %v411, %v1823
        %v1825 = vrot.slane %v1797, %v1824
        %v1826 = vlaneseq
        %v1827 = vshrl.u32 %v1826, 7
        %v1828 = vsub.s32 %v411, %v1827
        %v1829 = vrot.slane %v1800, %v1828
        %v1830 = vlaneseq
        %v1831 = vshrl.u32 %v1830, 7
        %v1832 = vsub.s32 %v411, %v1831
        %v1833 = vrot.slane %v1803, %v1832
        %v1834 = vlaneseq
        %v1835 = vshrl.u32 %v1834, 7
        %v1836 = vsub.s32 %v411, %v1835
        %v1837 = vrot.slane %v1806, %v1836
        %v1838 = vlaneseq
        %v1839 = vshrl.u32 %v1838, 7
        %v1840 = vsub.s32 %v411, %v1839
        %v1841 = vrot.slane %v1809, %v1840
        %v1842 = vsel %vm845, %v1817, %v1813
        %v1843 = vsel %vm847, %v1821, %v1842
        %v1844 = vsel %vm849, %v1825, %v1843
        %v1845 = vsel %vm851, %v1829, %v1844
        %v1846 = vsel %vm853, %v1833, %v1845
        %v1847 = vsel %vm855, %v1837, %v1846
        %v1848 = vsel %vm857, %v1841, %v1847
        %v1850 = vsel %vm683, %v1848, -inf
        %1851 = vmax.xlane.f32.xlu0 %v1850
        %v1852 = vpop.xlane.xlu0 %1851
        %v1854 = vlaneseq
        %v1855 = vshrl.u32 %v1854, 7
        %v1856 = vsub.s32 0, %v1855
        %v1857 = vrot.slane %v1852, %v1856
        %v1858 = vlaneseq
        %v1859 = vshrl.u32 %v1858, 7
        %v1860 = vsub.s32 1, %v1859
        %v1861 = vrot.slane %v1852, %v1860
        %v1862 = vlaneseq
        %v1863 = vshrl.u32 %v1862, 7
        %v1864 = vsub.s32 2, %v1863
        %v1865 = vrot.slane %v1852, %v1864
        %v1866 = vlaneseq
        %v1867 = vshrl.u32 %v1866, 7
        %v1868 = vsub.s32 3, %v1867
        %v1869 = vrot.slane %v1852, %v1868
        %v1870 = vlaneseq
        %v1871 = vshrl.u32 %v1870, 7
        %v1872 = vsub.s32 4, %v1871
        %v1873 = vrot.slane %v1852, %v1872
        %v1874 = vlaneseq
        %v1875 = vshrl.u32 %v1874, 7
        %v1876 = vsub.s32 5, %v1875
        %v1877 = vrot.slane %v1852, %v1876
        %v1878 = vlaneseq
        %v1879 = vshrl.u32 %v1878, 7
        %v1880 = vsub.s32 6, %v1879
        %v1881 = vrot.slane %v1852, %v1880
        %v1882 = vlaneseq
        %v1883 = vshrl.u32 %v1882, 7
        %v1884 = vsub.s32 7, %v1883
        %v1885 = vrot.slane %v1852, %v1884
        %v1894 = vsub.f32 %v1770, %v1857
        %v1895 = vsub.f32 %v1771, %v1861
        %v1896 = vsub.f32 %v1772, %v1865
        %v1897 = vsub.f32 %v1773, %v1869
        %v1898 = vsub.f32 %v1774, %v1873
        %v1899 = vsub.f32 %v1775, %v1877
        %v1900 = vsub.f32 %v1776, %v1881
        %v1901 = vsub.f32 %v1777, %v1885
        %v1902 = vmul.f32 %v1894, 1.442695
        %v1903 = vpow.pop %v1902
        %v1904 = vmul.f32 %v1895, 1.442695
        %v1905 = vpow.pop %v1904
        %v1906 = vmul.f32 %v1896, 1.442695
        %v1907 = vpow.pop %v1906
        %v1908 = vmul.f32 %v1897, 1.442695
        %v1909 = vpow.pop %v1908
        %v1910 = vmul.f32 %v1898, 1.442695
        %v1911 = vpow.pop %v1910
        %v1912 = vmul.f32 %v1899, 1.442695
        %v1913 = vpow.pop %v1912
        %v1914 = vmul.f32 %v1900, 1.442695
        %v1915 = vpow.pop %v1914
        %v1916 = vmul.f32 %v1901, 1.442695
        %v1917 = vpow.pop %v1916
        %1926 = vset.pattern.permute.xlu0 0
        %1927 = vperm.xlu0 %1926, %v1903
        %v1928 = vpop.permute.xlu0 %1927
        %1929 = vset.pattern.permute.xlu0 0
        %1930 = vperm.xlu0 %1929, %v1905
        %v1931 = vpop.permute.xlu0 %1930
        %1932 = vset.pattern.permute.xlu0 0
        %1933 = vperm.xlu0 %1932, %v1907
        %v1934 = vpop.permute.xlu0 %1933
        %1935 = vset.pattern.permute.xlu0 0
        %1936 = vperm.xlu0 %1935, %v1909
        %v1937 = vpop.permute.xlu0 %1936
        %1938 = vset.pattern.permute.xlu0 0
        %1939 = vperm.xlu0 %1938, %v1911
        %v1940 = vpop.permute.xlu0 %1939
        %1941 = vset.pattern.permute.xlu0 0
        %1942 = vperm.xlu0 %1941, %v1913
        %v1943 = vpop.permute.xlu0 %1942
        %1944 = vset.pattern.permute.xlu0 0
        %1945 = vperm.xlu0 %1944, %v1915
        %v1946 = vpop.permute.xlu0 %1945
        %1947 = vset.pattern.permute.xlu0 0
        %1948 = vperm.xlu0 %1947, %v1917
        %v1949 = vpop.permute.xlu0 %1948
        %v1950 = vlaneseq
        %v1951 = vshrl.u32 %v1950, 7
        %v1952 = vsub.s32 %v411, %v1951
        %v1953 = vrot.slane %v1928, %v1952
        %v1954 = vlaneseq
        %v1955 = vshrl.u32 %v1954, 7
        %v1956 = vsub.s32 %v411, %v1955
        %v1957 = vrot.slane %v1931, %v1956
        %v1958 = vlaneseq
        %v1959 = vshrl.u32 %v1958, 7
        %v1960 = vsub.s32 %v411, %v1959
        %v1961 = vrot.slane %v1934, %v1960
        %v1962 = vlaneseq
        %v1963 = vshrl.u32 %v1962, 7
        %v1964 = vsub.s32 %v411, %v1963
        %v1965 = vrot.slane %v1937, %v1964
        %v1966 = vlaneseq
        %v1967 = vshrl.u32 %v1966, 7
        %v1968 = vsub.s32 %v411, %v1967
        %v1969 = vrot.slane %v1940, %v1968
        %v1970 = vlaneseq
        %v1971 = vshrl.u32 %v1970, 7
        %v1972 = vsub.s32 %v411, %v1971
        %v1973 = vrot.slane %v1943, %v1972
        %v1974 = vlaneseq
        %v1975 = vshrl.u32 %v1974, 7
        %v1976 = vsub.s32 %v411, %v1975
        %v1977 = vrot.slane %v1946, %v1976
        %v1978 = vlaneseq
        %v1979 = vshrl.u32 %v1978, 7
        %v1980 = vsub.s32 %v411, %v1979
        %v1981 = vrot.slane %v1949, %v1980
        %v1982 = vsel %vm845, %v1957, %v1953
        %v1983 = vsel %vm847, %v1961, %v1982
        %v1984 = vsel %vm849, %v1965, %v1983
        %v1985 = vsel %vm851, %v1969, %v1984
        %v1986 = vsel %vm853, %v1973, %v1985
        %v1987 = vsel %vm855, %v1977, %v1986
        %v1988 = vsel %vm857, %v1981, %v1987
        %v1990 = vsel %vm683, %v1988, 0.0
        %1991 = vadd.xlane.f32.xlu0 %v1990
        %v1992 = vpop.xlane.xlu0 %1991
        %v1993 = vrcp.pop %v1992
        %v1995 = vlaneseq
        %v1996 = vshrl.u32 %v1995, 7
        %v1997 = vsub.s32 0, %v1996
        %v1998 = vrot.slane %v1993, %v1997
        %v1999 = vlaneseq
        %v2000 = vshrl.u32 %v1999, 7
        %v2001 = vsub.s32 1, %v2000
        %v2002 = vrot.slane %v1993, %v2001
        %v2003 = vlaneseq
        %v2004 = vshrl.u32 %v2003, 7
        %v2005 = vsub.s32 2, %v2004
        %v2006 = vrot.slane %v1993, %v2005
        %v2007 = vlaneseq
        %v2008 = vshrl.u32 %v2007, 7
        %v2009 = vsub.s32 3, %v2008
        %v2010 = vrot.slane %v1993, %v2009
        %v2011 = vlaneseq
        %v2012 = vshrl.u32 %v2011, 7
        %v2013 = vsub.s32 4, %v2012
        %v2014 = vrot.slane %v1993, %v2013
        %v2015 = vlaneseq
        %v2016 = vshrl.u32 %v2015, 7
        %v2017 = vsub.s32 5, %v2016
        %v2018 = vrot.slane %v1993, %v2017
        %v2019 = vlaneseq
        %v2020 = vshrl.u32 %v2019, 7
        %v2021 = vsub.s32 6, %v2020
        %v2022 = vrot.slane %v1993, %v2021
        %v2023 = vlaneseq
        %v2024 = vshrl.u32 %v2023, 7
        %v2025 = vsub.s32 7, %v2024
        %v2026 = vrot.slane %v1993, %v2025
        %v2035 = vmul.f32 %v1903, %v1998
        %v2036 = vmul.f32 %v1905, %v2002
        %v2037 = vmul.f32 %v1907, %v2006
        %v2038 = vmul.f32 %v1909, %v2010
        %v2039 = vmul.f32 %v1911, %v2014
        %v2040 = vmul.f32 %v1913, %v2018
        %v2041 = vmul.f32 %v1915, %v2022
        %v2042 = vmul.f32 %v1917, %v2026
        %2044 = vset.pattern.permute.xlu0 0
        %2045 = vperm.xlu0 %2044, %v2035
        %v2046 = vpop.permute.xlu0 %2045
        %2049 = vset.pattern.permute.xlu0 0
        %2050 = vperm.xlu0 %2049, %v2036
        %v2051 = vpop.permute.xlu0 %2050
        %2054 = vset.pattern.permute.xlu0 0
        %2055 = vperm.xlu0 %2054, %v2037
        %v2056 = vpop.permute.xlu0 %2055
        %2059 = vset.pattern.permute.xlu0 0
        %2060 = vperm.xlu0 %2059, %v2038
        %v2061 = vpop.permute.xlu0 %2060
        %2064 = vset.pattern.permute.xlu0 0
        %2065 = vperm.xlu0 %2064, %v2039
        %v2066 = vpop.permute.xlu0 %2065
        %2069 = vset.pattern.permute.xlu0 0
        %2070 = vperm.xlu0 %2069, %v2040
        %v2071 = vpop.permute.xlu0 %2070
        %2074 = vset.pattern.permute.xlu0 0
        %2075 = vperm.xlu0 %2074, %v2041
        %v2076 = vpop.permute.xlu0 %2075
        %2079 = vset.pattern.permute.xlu0 0
        %2080 = vperm.xlu0 %2079, %v2042
        %v2081 = vpop.permute.xlu0 %2080
        %v2083 = vmul.f32 %v2046, %v577
        %v2084 = vmul.f32 %v2051, %v577
        %v2085 = vmul.f32 %v2056, %v577
        %v2086 = vmul.f32 %v2061, %v577
        %v2087 = vmul.f32 %v2066, %v577
        %v2088 = vmul.f32 %v2071, %v577
        %v2089 = vmul.f32 %v2076, %v577
        %v2090 = vmul.f32 %v2081, %v577
        %vm2091 = vcmask 720512
        %v2092 = vsel %vm2091, %v2083, 0.0
        %v2093 = vrot.slane %v2092, 4
        %v2094 = vadd.f32 %v2092, %v2093
        %v2095 = vrot.slane %v2094, 2
        %v2096 = vadd.f32 %v2094, %v2095
        %v2097 = vrot.slane %v2096, 1
        %v2098 = vadd.f32 %v2096, %v2097
        %v2099 = vsel %vm2091, %v2084, 0.0
        %v2100 = vrot.slane %v2099, 4
        %v2101 = vadd.f32 %v2099, %v2100
        %v2102 = vrot.slane %v2101, 2
        %v2103 = vadd.f32 %v2101, %v2102
        %v2104 = vrot.slane %v2103, 1
        %v2105 = vadd.f32 %v2103, %v2104
        %v2106 = vsel %vm2091, %v2085, 0.0
        %v2107 = vrot.slane %v2106, 4
        %v2108 = vadd.f32 %v2106, %v2107
        %v2109 = vrot.slane %v2108, 2
        %v2110 = vadd.f32 %v2108, %v2109
        %v2111 = vrot.slane %v2110, 1
        %v2112 = vadd.f32 %v2110, %v2111
        %v2113 = vsel %vm2091, %v2086, 0.0
        %v2114 = vrot.slane %v2113, 4
        %v2115 = vadd.f32 %v2113, %v2114
        %v2116 = vrot.slane %v2115, 2
        %v2117 = vadd.f32 %v2115, %v2116
        %v2118 = vrot.slane %v2117, 1
        %v2119 = vadd.f32 %v2117, %v2118
        %v2120 = vsel %vm2091, %v2087, 0.0
        %v2121 = vrot.slane %v2120, 4
        %v2122 = vadd.f32 %v2120, %v2121
        %v2123 = vrot.slane %v2122, 2
        %v2124 = vadd.f32 %v2122, %v2123
        %v2125 = vrot.slane %v2124, 1
        %v2126 = vadd.f32 %v2124, %v2125
        %v2127 = vsel %vm2091, %v2088, 0.0
        %v2128 = vrot.slane %v2127, 4
        %v2129 = vadd.f32 %v2127, %v2128
        %v2130 = vrot.slane %v2129, 2
        %v2131 = vadd.f32 %v2129, %v2130
        %v2132 = vrot.slane %v2131, 1
        %v2133 = vadd.f32 %v2131, %v2132
        %v2134 = vsel %vm2091, %v2089, 0.0
        %v2135 = vrot.slane %v2134, 4
        %v2136 = vadd.f32 %v2134, %v2135
        %v2137 = vrot.slane %v2136, 2
        %v2138 = vadd.f32 %v2136, %v2137
        %v2139 = vrot.slane %v2138, 1
        %v2140 = vadd.f32 %v2138, %v2139
        %v2141 = vsel %vm2091, %v2090, 0.0
        %v2142 = vrot.slane %v2141, 4
        %v2143 = vadd.f32 %v2141, %v2142
        %v2144 = vrot.slane %v2143, 2
        %v2145 = vadd.f32 %v2143, %v2144
        %v2146 = vrot.slane %v2145, 1
        %v2147 = vadd.f32 %v2145, %v2146
        %2148 = vrot.lane.b32.xlu0 %v675, 104
        %v2149 = vpop.permute.xlu0 %2148
        %2150 = vrot.lane.b32.xlu0 %v676, 104
        %v2151 = vpop.permute.xlu0 %2150
        %2152 = vrot.lane.b32.xlu0 %v677, 104
        %v2153 = vpop.permute.xlu0 %2152
        %2154 = vrot.lane.b32.xlu0 %v678, 104
        %v2155 = vpop.permute.xlu0 %2154
        %2156 = vrot.lane.b32.xlu0 %v679, 104
        %v2157 = vpop.permute.xlu0 %2156
        %2158 = vrot.lane.b32.xlu0 %v680, 104
        %v2159 = vpop.permute.xlu0 %2158
        %2160 = vrot.lane.b32.xlu0 %v681, 104
        %v2161 = vpop.permute.xlu0 %2160
        %2162 = vrot.lane.b32.xlu0 %v682, 104
        %v2163 = vpop.permute.xlu0 %2162
        %v2172 = vsel %vm683, %v2149, 0.0
        %2173 = vadd.xlane.f32.xlu0 %v2172
        %v2174 = vpop.xlane.xlu0 %2173
        %v2175 = vsel %vm683, %v2151, 0.0
        %2176 = vadd.xlane.f32.xlu0 %v2175
        %v2177 = vpop.xlane.xlu0 %2176
        %v2178 = vsel %vm683, %v2153, 0.0
        %2179 = vadd.xlane.f32.xlu0 %v2178
        %v2180 = vpop.xlane.xlu0 %2179
        %v2181 = vsel %vm683, %v2155, 0.0
        %2182 = vadd.xlane.f32.xlu0 %v2181
        %v2183 = vpop.xlane.xlu0 %2182
        %v2184 = vsel %vm683, %v2157, 0.0
        %2185 = vadd.xlane.f32.xlu0 %v2184
        %v2186 = vpop.xlane.xlu0 %2185
        %v2187 = vsel %vm683, %v2159, 0.0
        %2188 = vadd.xlane.f32.xlu0 %v2187
        %v2189 = vpop.xlane.xlu0 %2188
        %v2190 = vsel %vm683, %v2161, 0.0
        %2191 = vadd.xlane.f32.xlu0 %v2190
        %v2192 = vpop.xlane.xlu0 %2191
        %v2193 = vsel %vm683, %v2163, 0.0
        %2194 = vadd.xlane.f32.xlu0 %v2193
        %v2195 = vpop.xlane.xlu0 %2194
        %v2197 = vlaneseq
        %v2198 = vshrl.u32 %v2197, 7
        %v2199 = vsub.s32 0, %v2198
        %v2200 = vrot.slane %v503, %v2199
        %2202 = vbcast.lane.b32.xlu0 %v2200, 256
        %v2203 = vpop.permute.xlu0 %2202
        %v2204 = vlaneseq
        %v2205 = vshrl.u32 %v2204, 7
        %v2206 = vsub.s32 1, %v2205
        %v2207 = vrot.slane %v503, %v2206
        %2209 = vbcast.lane.b32.xlu0 %v2207, 256
        %v2210 = vpop.permute.xlu0 %2209
        %v2211 = vlaneseq
        %v2212 = vshrl.u32 %v2211, 7
        %v2213 = vsub.s32 2, %v2212
        %v2214 = vrot.slane %v503, %v2213
        %2216 = vbcast.lane.b32.xlu0 %v2214, 256
        %v2217 = vpop.permute.xlu0 %2216
        %v2218 = vlaneseq
        %v2219 = vshrl.u32 %v2218, 7
        %v2220 = vsub.s32 3, %v2219
        %v2221 = vrot.slane %v503, %v2220
        %2223 = vbcast.lane.b32.xlu0 %v2221, 256
        %v2224 = vpop.permute.xlu0 %2223
        %v2225 = vlaneseq
        %v2226 = vshrl.u32 %v2225, 7
        %v2227 = vsub.s32 4, %v2226
        %v2228 = vrot.slane %v503, %v2227
        %2230 = vbcast.lane.b32.xlu0 %v2228, 256
        %v2231 = vpop.permute.xlu0 %2230
        %v2232 = vlaneseq
        %v2233 = vshrl.u32 %v2232, 7
        %v2234 = vsub.s32 5, %v2233
        %v2235 = vrot.slane %v503, %v2234
        %2237 = vbcast.lane.b32.xlu0 %v2235, 256
        %v2238 = vpop.permute.xlu0 %2237
        %v2239 = vlaneseq
        %v2240 = vshrl.u32 %v2239, 7
        %v2241 = vsub.s32 6, %v2240
        %v2242 = vrot.slane %v503, %v2241
        %2244 = vbcast.lane.b32.xlu0 %v2242, 256
        %v2245 = vpop.permute.xlu0 %2244
        %v2246 = vlaneseq
        %v2247 = vshrl.u32 %v2246, 7
        %v2248 = vsub.s32 7, %v2247
        %v2249 = vrot.slane %v503, %v2248
        %2251 = vbcast.lane.b32.xlu0 %v2249, 256
        %v2252 = vpop.permute.xlu0 %2251
        %v2261 = vadd.f32 %v2174, %v2203
        %v2262 = vadd.f32 %v2177, %v2210
        %v2263 = vadd.f32 %v2180, %v2217
        %v2264 = vadd.f32 %v2183, %v2224
        %v2265 = vadd.f32 %v2186, %v2231
        %v2266 = vadd.f32 %v2189, %v2238
        %v2267 = vadd.f32 %v2192, %v2245
        %v2268 = vadd.f32 %v2195, %v2252
        %2277 = vset.pattern.permute.xlu0 0
        %2278 = vperm.xlu0 %2277, %v2261
        %v2279 = vpop.permute.xlu0 %2278
        %2280 = vset.pattern.permute.xlu0 0
        %2281 = vperm.xlu0 %2280, %v2262
        %v2282 = vpop.permute.xlu0 %2281
        %2283 = vset.pattern.permute.xlu0 0
        %2284 = vperm.xlu0 %2283, %v2263
        %v2285 = vpop.permute.xlu0 %2284
        %2286 = vset.pattern.permute.xlu0 0
        %2287 = vperm.xlu0 %2286, %v2264
        %v2288 = vpop.permute.xlu0 %2287
        %2289 = vset.pattern.permute.xlu0 0
        %2290 = vperm.xlu0 %2289, %v2265
        %v2291 = vpop.permute.xlu0 %2290
        %2292 = vset.pattern.permute.xlu0 0
        %2293 = vperm.xlu0 %2292, %v2266
        %v2294 = vpop.permute.xlu0 %2293
        %2295 = vset.pattern.permute.xlu0 0
        %2296 = vperm.xlu0 %2295, %v2267
        %v2297 = vpop.permute.xlu0 %2296
        %2298 = vset.pattern.permute.xlu0 0
        %2299 = vperm.xlu0 %2298, %v2268
        %v2300 = vpop.permute.xlu0 %2299
        %v2301 = vlaneseq
        %v2302 = vshrl.u32 %v2301, 7
        %v2303 = vsub.s32 %v411, %v2302
        %v2304 = vrot.slane %v2279, %v2303
        %v2305 = vlaneseq
        %v2306 = vshrl.u32 %v2305, 7
        %v2307 = vsub.s32 %v411, %v2306
        %v2308 = vrot.slane %v2282, %v2307
        %v2309 = vlaneseq
        %v2310 = vshrl.u32 %v2309, 7
        %v2311 = vsub.s32 %v411, %v2310
        %v2312 = vrot.slane %v2285, %v2311
        %v2313 = vlaneseq
        %v2314 = vshrl.u32 %v2313, 7
        %v2315 = vsub.s32 %v411, %v2314
        %v2316 = vrot.slane %v2288, %v2315
        %v2317 = vlaneseq
        %v2318 = vshrl.u32 %v2317, 7
        %v2319 = vsub.s32 %v411, %v2318
        %v2320 = vrot.slane %v2291, %v2319
        %v2321 = vlaneseq
        %v2322 = vshrl.u32 %v2321, 7
        %v2323 = vsub.s32 %v411, %v2322
        %v2324 = vrot.slane %v2294, %v2323
        %v2325 = vlaneseq
        %v2326 = vshrl.u32 %v2325, 7
        %v2327 = vsub.s32 %v411, %v2326
        %v2328 = vrot.slane %v2297, %v2327
        %v2329 = vlaneseq
        %v2330 = vshrl.u32 %v2329, 7
        %v2331 = vsub.s32 %v411, %v2330
        %v2332 = vrot.slane %v2300, %v2331
        %v2333 = vsel %vm845, %v2308, %v2304
        %v2334 = vsel %vm847, %v2312, %v2333
        %v2335 = vsel %vm849, %v2316, %v2334
        %v2336 = vsel %vm851, %v2320, %v2335
        %v2337 = vsel %vm853, %v2324, %v2336
        %v2338 = vsel %vm855, %v2328, %v2337
        %v2339 = vsel %vm857, %v2332, %v2338
        %v2341 = vsel %vm683, %v2339, -inf
        %2342 = vmax.xlane.f32.xlu0 %v2341
        %v2343 = vpop.xlane.xlu0 %2342
        %v2345 = vlaneseq
        %v2346 = vshrl.u32 %v2345, 7
        %v2347 = vsub.s32 0, %v2346
        %v2348 = vrot.slane %v2343, %v2347
        %v2349 = vlaneseq
        %v2350 = vshrl.u32 %v2349, 7
        %v2351 = vsub.s32 1, %v2350
        %v2352 = vrot.slane %v2343, %v2351
        %v2353 = vlaneseq
        %v2354 = vshrl.u32 %v2353, 7
        %v2355 = vsub.s32 2, %v2354
        %v2356 = vrot.slane %v2343, %v2355
        %v2357 = vlaneseq
        %v2358 = vshrl.u32 %v2357, 7
        %v2359 = vsub.s32 3, %v2358
        %v2360 = vrot.slane %v2343, %v2359
        %v2361 = vlaneseq
        %v2362 = vshrl.u32 %v2361, 7
        %v2363 = vsub.s32 4, %v2362
        %v2364 = vrot.slane %v2343, %v2363
        %v2365 = vlaneseq
        %v2366 = vshrl.u32 %v2365, 7
        %v2367 = vsub.s32 5, %v2366
        %v2368 = vrot.slane %v2343, %v2367
        %v2369 = vlaneseq
        %v2370 = vshrl.u32 %v2369, 7
        %v2371 = vsub.s32 6, %v2370
        %v2372 = vrot.slane %v2343, %v2371
        %v2373 = vlaneseq
        %v2374 = vshrl.u32 %v2373, 7
        %v2375 = vsub.s32 7, %v2374
        %v2376 = vrot.slane %v2343, %v2375
        %v2385 = vsub.f32 %v2261, %v2348
        %v2386 = vsub.f32 %v2262, %v2352
        %v2387 = vsub.f32 %v2263, %v2356
        %v2388 = vsub.f32 %v2264, %v2360
        %v2389 = vsub.f32 %v2265, %v2364
        %v2390 = vsub.f32 %v2266, %v2368
        %v2391 = vsub.f32 %v2267, %v2372
        %v2392 = vsub.f32 %v2268, %v2376
        %v2393 = vmul.f32 %v2385, 1.442695
        %v2394 = vpow.pop %v2393
        %v2395 = vmul.f32 %v2386, 1.442695
        %v2396 = vpow.pop %v2395
        %v2397 = vmul.f32 %v2387, 1.442695
        %v2398 = vpow.pop %v2397
        %v2399 = vmul.f32 %v2388, 1.442695
        %v2400 = vpow.pop %v2399
        %v2401 = vmul.f32 %v2389, 1.442695
        %v2402 = vpow.pop %v2401
        %v2403 = vmul.f32 %v2390, 1.442695
        %v2404 = vpow.pop %v2403
        %v2405 = vmul.f32 %v2391, 1.442695
        %v2406 = vpow.pop %v2405
        %v2407 = vmul.f32 %v2392, 1.442695
        %v2408 = vpow.pop %v2407
        %2417 = vset.pattern.permute.xlu0 0
        %2418 = vperm.xlu0 %2417, %v2394
        %v2419 = vpop.permute.xlu0 %2418
        %2420 = vset.pattern.permute.xlu0 0
        %2421 = vperm.xlu0 %2420, %v2396
        %v2422 = vpop.permute.xlu0 %2421
        %2423 = vset.pattern.permute.xlu0 0
        %2424 = vperm.xlu0 %2423, %v2398
        %v2425 = vpop.permute.xlu0 %2424
        %2426 = vset.pattern.permute.xlu0 0
        %2427 = vperm.xlu0 %2426, %v2400
        %v2428 = vpop.permute.xlu0 %2427
        %2429 = vset.pattern.permute.xlu0 0
        %2430 = vperm.xlu0 %2429, %v2402
        %v2431 = vpop.permute.xlu0 %2430
        %2432 = vset.pattern.permute.xlu0 0
        %2433 = vperm.xlu0 %2432, %v2404
        %v2434 = vpop.permute.xlu0 %2433
        %2435 = vset.pattern.permute.xlu0 0
        %2436 = vperm.xlu0 %2435, %v2406
        %v2437 = vpop.permute.xlu0 %2436
        %2438 = vset.pattern.permute.xlu0 0
        %2439 = vperm.xlu0 %2438, %v2408
        %v2440 = vpop.permute.xlu0 %2439
        %v2441 = vlaneseq
        %v2442 = vshrl.u32 %v2441, 7
        %v2443 = vsub.s32 %v411, %v2442
        %v2444 = vrot.slane %v2419, %v2443
        %v2445 = vlaneseq
        %v2446 = vshrl.u32 %v2445, 7
        %v2447 = vsub.s32 %v411, %v2446
        %v2448 = vrot.slane %v2422, %v2447
        %v2449 = vlaneseq
        %v2450 = vshrl.u32 %v2449, 7
        %v2451 = vsub.s32 %v411, %v2450
        %v2452 = vrot.slane %v2425, %v2451
        %v2453 = vlaneseq
        %v2454 = vshrl.u32 %v2453, 7
        %v2455 = vsub.s32 %v411, %v2454
        %v2456 = vrot.slane %v2428, %v2455
        %v2457 = vlaneseq
        %v2458 = vshrl.u32 %v2457, 7
        %v2459 = vsub.s32 %v411, %v2458
        %v2460 = vrot.slane %v2431, %v2459
        %v2461 = vlaneseq
        %v2462 = vshrl.u32 %v2461, 7
        %v2463 = vsub.s32 %v411, %v2462
        %v2464 = vrot.slane %v2434, %v2463
        %v2465 = vlaneseq
        %v2466 = vshrl.u32 %v2465, 7
        %v2467 = vsub.s32 %v411, %v2466
        %v2468 = vrot.slane %v2437, %v2467
        %v2469 = vlaneseq
        %v2470 = vshrl.u32 %v2469, 7
        %v2471 = vsub.s32 %v411, %v2470
        %v2472 = vrot.slane %v2440, %v2471
        %v2473 = vsel %vm845, %v2448, %v2444
        %v2474 = vsel %vm847, %v2452, %v2473
        %v2475 = vsel %vm849, %v2456, %v2474
        %v2476 = vsel %vm851, %v2460, %v2475
        %v2477 = vsel %vm853, %v2464, %v2476
        %v2478 = vsel %vm855, %v2468, %v2477
        %v2479 = vsel %vm857, %v2472, %v2478
        %v2481 = vsel %vm683, %v2479, 0.0
        %2482 = vadd.xlane.f32.xlu0 %v2481
        %v2483 = vpop.xlane.xlu0 %2482
        %v2484 = vrcp.pop %v2483
        %v2486 = vlaneseq
        %v2487 = vshrl.u32 %v2486, 7
        %v2488 = vsub.s32 0, %v2487
        %v2489 = vrot.slane %v2484, %v2488
        %v2490 = vlaneseq
        %v2491 = vshrl.u32 %v2490, 7
        %v2492 = vsub.s32 1, %v2491
        %v2493 = vrot.slane %v2484, %v2492
        %v2494 = vlaneseq
        %v2495 = vshrl.u32 %v2494, 7
        %v2496 = vsub.s32 2, %v2495
        %v2497 = vrot.slane %v2484, %v2496
        %v2498 = vlaneseq
        %v2499 = vshrl.u32 %v2498, 7
        %v2500 = vsub.s32 3, %v2499
        %v2501 = vrot.slane %v2484, %v2500
        %v2502 = vlaneseq
        %v2503 = vshrl.u32 %v2502, 7
        %v2504 = vsub.s32 4, %v2503
        %v2505 = vrot.slane %v2484, %v2504
        %v2506 = vlaneseq
        %v2507 = vshrl.u32 %v2506, 7
        %v2508 = vsub.s32 5, %v2507
        %v2509 = vrot.slane %v2484, %v2508
        %v2510 = vlaneseq
        %v2511 = vshrl.u32 %v2510, 7
        %v2512 = vsub.s32 6, %v2511
        %v2513 = vrot.slane %v2484, %v2512
        %v2514 = vlaneseq
        %v2515 = vshrl.u32 %v2514, 7
        %v2516 = vsub.s32 7, %v2515
        %v2517 = vrot.slane %v2484, %v2516
        %v2526 = vmul.f32 %v2394, %v2489
        %v2527 = vmul.f32 %v2396, %v2493
        %v2528 = vmul.f32 %v2398, %v2497
        %v2529 = vmul.f32 %v2400, %v2501
        %v2530 = vmul.f32 %v2402, %v2505
        %v2531 = vmul.f32 %v2404, %v2509
        %v2532 = vmul.f32 %v2406, %v2513
        %v2533 = vmul.f32 %v2408, %v2517
        %2535 = vset.pattern.permute.xlu0 0
        %2536 = vperm.xlu0 %2535, %v2526
        %v2537 = vpop.permute.xlu0 %2536
        %2540 = vset.pattern.permute.xlu0 0
        %2541 = vperm.xlu0 %2540, %v2527
        %v2542 = vpop.permute.xlu0 %2541
        %2545 = vset.pattern.permute.xlu0 0
        %2546 = vperm.xlu0 %2545, %v2528
        %v2547 = vpop.permute.xlu0 %2546
        %2550 = vset.pattern.permute.xlu0 0
        %2551 = vperm.xlu0 %2550, %v2529
        %v2552 = vpop.permute.xlu0 %2551
        %2555 = vset.pattern.permute.xlu0 0
        %2556 = vperm.xlu0 %2555, %v2530
        %v2557 = vpop.permute.xlu0 %2556
        %2560 = vset.pattern.permute.xlu0 0
        %2561 = vperm.xlu0 %2560, %v2531
        %v2562 = vpop.permute.xlu0 %2561
        %2565 = vset.pattern.permute.xlu0 0
        %2566 = vperm.xlu0 %2565, %v2532
        %v2567 = vpop.permute.xlu0 %2566
        %2570 = vset.pattern.permute.xlu0 0
        %2571 = vperm.xlu0 %2570, %v2533
        %v2572 = vpop.permute.xlu0 %2571
        %v2574 = vmul.f32 %v2537, %v577
        %v2575 = vmul.f32 %v2542, %v577
        %v2576 = vmul.f32 %v2547, %v577
        %v2577 = vmul.f32 %v2552, %v577
        %v2578 = vmul.f32 %v2557, %v577
        %v2579 = vmul.f32 %v2562, %v577
        %v2580 = vmul.f32 %v2567, %v577
        %v2581 = vmul.f32 %v2572, %v577
        %vm2582 = vcmask 786112
        %v2583 = vsel %vm2582, %v2574, 0.0
        %v2584 = vrot.slane %v2583, 4
        %v2585 = vadd.f32 %v2583, %v2584
        %v2586 = vrot.slane %v2585, 2
        %v2587 = vadd.f32 %v2585, %v2586
        %v2588 = vrot.slane %v2587, 1
        %v2589 = vadd.f32 %v2587, %v2588
        %v2590 = vsel %vm2582, %v2575, 0.0
        %v2591 = vrot.slane %v2590, 4
        %v2592 = vadd.f32 %v2590, %v2591
        %v2593 = vrot.slane %v2592, 2
        %v2594 = vadd.f32 %v2592, %v2593
        %v2595 = vrot.slane %v2594, 1
        %v2596 = vadd.f32 %v2594, %v2595
        %v2597 = vsel %vm2582, %v2576, 0.0
        %v2598 = vrot.slane %v2597, 4
        %v2599 = vadd.f32 %v2597, %v2598
        %v2600 = vrot.slane %v2599, 2
        %v2601 = vadd.f32 %v2599, %v2600
        %v2602 = vrot.slane %v2601, 1
        %v2603 = vadd.f32 %v2601, %v2602
        %v2604 = vsel %vm2582, %v2577, 0.0
        %v2605 = vrot.slane %v2604, 4
        %v2606 = vadd.f32 %v2604, %v2605
        %v2607 = vrot.slane %v2606, 2
        %v2608 = vadd.f32 %v2606, %v2607
        %v2609 = vrot.slane %v2608, 1
        %v2610 = vadd.f32 %v2608, %v2609
        %v2611 = vsel %vm2582, %v2578, 0.0
        %v2612 = vrot.slane %v2611, 4
        %v2613 = vadd.f32 %v2611, %v2612
        %v2614 = vrot.slane %v2613, 2
        %v2615 = vadd.f32 %v2613, %v2614
        %v2616 = vrot.slane %v2615, 1
        %v2617 = vadd.f32 %v2615, %v2616
        %v2618 = vsel %vm2582, %v2579, 0.0
        %v2619 = vrot.slane %v2618, 4
        %v2620 = vadd.f32 %v2618, %v2619
        %v2621 = vrot.slane %v2620, 2
        %v2622 = vadd.f32 %v2620, %v2621
        %v2623 = vrot.slane %v2622, 1
        %v2624 = vadd.f32 %v2622, %v2623
        %v2625 = vsel %vm2582, %v2580, 0.0
        %v2626 = vrot.slane %v2625, 4
        %v2627 = vadd.f32 %v2625, %v2626
        %v2628 = vrot.slane %v2627, 2
        %v2629 = vadd.f32 %v2627, %v2628
        %v2630 = vrot.slane %v2629, 1
        %v2631 = vadd.f32 %v2629, %v2630
        %v2632 = vsel %vm2582, %v2581, 0.0
        %v2633 = vrot.slane %v2632, 4
        %v2634 = vadd.f32 %v2632, %v2633
        %v2635 = vrot.slane %v2634, 2
        %v2636 = vadd.f32 %v2634, %v2635
        %v2637 = vrot.slane %v2636, 1
        %v2638 = vadd.f32 %v2636, %v2637
        %v2647 = vsel %vm845, %v1115, %v1108
        %v2648 = vsel %vm847, %v1122, %v2647
        %v2649 = vsel %vm849, %v1129, %v2648
        %v2650 = vsel %vm851, %v1136, %v2649
        %v2651 = vsel %vm853, %v1143, %v2650
        %v2652 = vsel %vm855, %v1150, %v2651
        %v2653 = vsel %vm857, %v1157, %v2652
        %2654 = vrot.lane.b32.xlu0 %v2653, 64
        %v2655 = vpop.permute.xlu0 %2654
        %v2665 = vsel %vm845, %v1614, %v1607
        %v2666 = vsel %vm847, %v1621, %v2665
        %v2667 = vsel %vm849, %v1628, %v2666
        %v2668 = vsel %vm851, %v1635, %v2667
        %v2669 = vsel %vm853, %v1642, %v2668
        %v2670 = vsel %vm855, %v1649, %v2669
        %v2671 = vsel %vm857, %v1656, %v2670
        %2672 = vrot.lane.b32.xlu0 %v2671, 64
        %v2673 = vpop.permute.xlu0 %2672
        %v2683 = vsel %vm845, %v2105, %v2098
        %v2684 = vsel %vm847, %v2112, %v2683
        %v2685 = vsel %vm849, %v2119, %v2684
        %v2686 = vsel %vm851, %v2126, %v2685
        %v2687 = vsel %vm853, %v2133, %v2686
        %v2688 = vsel %vm855, %v2140, %v2687
        %v2689 = vsel %vm857, %v2147, %v2688
        %2690 = vrot.lane.b32.xlu0 %v2689, 64
        %v2691 = vpop.permute.xlu0 %2690
        %v2701 = vsel %vm845, %v2596, %v2589
        %v2702 = vsel %vm847, %v2603, %v2701
        %v2703 = vsel %vm849, %v2610, %v2702
        %v2704 = vsel %vm851, %v2617, %v2703
        %v2705 = vsel %vm853, %v2624, %v2704
        %v2706 = vsel %vm855, %v2631, %v2705
        %v2707 = vsel %vm857, %v2638, %v2706
        %2708 = vrot.lane.b32.xlu0 %v2707, 64
        %v2709 = vpop.permute.xlu0 %2708
        %v2711 = vsel %vm683, %v2655, %v2673
        %vm2712 = vcmask 130048
        %v2713 = vsel %vm2712, %v2711, %v2691
        %vm2714 = vcmask 195584
        %v2715 = vsel %vm2714, %v2713, %v2709
        %v2716 = vpack.c.bf16 %v2715, %v2715
        %v2717 = vld [vmem:[%s5] sm:$0xf]
        %v2718 = vld [vmem:[%s5 + $0x4] sm:$0xf]
        %v2719 = vld [vmem:[%s5 + $0x8] sm:$0xf]
        %v2720 = vld [vmem:[%s5 + $0xc] sm:$0xf]
        %v2725 = vunpack.c.l.b16 %v2717
        %v2726 = vunpack.c.l.b16 %v2718
        %v2727 = vunpack.c.l.b16 %v2719
        %v2728 = vunpack.c.l.b16 %v2720
        %v2729 = vpack.c.b16 %v2726, %v2725
        %v2730 = vpack.c.b16 %v2728, %v2727
        %v2734 = vsel %vm506, %v2716, 0
        %2736 = vmatprep.subr.bf16.mxu0 0
        %2737 = vmatpush1.bf16.msra.mxu0 0
        %2738 = vmatprep.subr.bf16.mxu0 0
        %2739 = vmatpush1.bf16.msra.mxu0 0
        %2740 = vmatprep.subr.bf16.mxu0 0
        %2741 = vmatpush1.bf16.msra.mxu0 0
        %2742 = vmatprep.subr.bf16.mxu0 0
        %2743 = vmatpush1.bf16.msra.mxu0 0
        %2744 = vmatprep.subr.bf16.mxu0 0
        %2745 = vmatpush1.bf16.msra.mxu0 0
        %2746 = vmatprep.subr.bf16.mxu0 0
        %2747 = vmatpush1.bf16.msra.mxu0 0
        %2748 = vmatprep.subr.bf16.mxu0 0
        %2749 = vmatpush1.bf16.msra.mxu0 %v2730
        %2750 = vmatprep.subr.bf16.mxu0 0
        %2751 = vmatpush1.bf16.msra.mxu0 %v2729
        %2752 = vmatprep.subr.bf16.mxu0 0
        %2753 = vmatpush2.bf16.msra.mxu0 0
        %2754 = vmatprep.subr.bf16.mxu0 0
        %2755 = vmatpush2.bf16.msra.mxu0 0
        %2756 = vmatprep.subr.bf16.mxu0 0
        %2757 = vmatpush2.bf16.msra.mxu0 0
        %2758 = vmatprep.subr.bf16.mxu0 0
        %2759 = vmatpush2.bf16.msra.mxu0 0
        %2760 = vmatprep.subr.bf16.mxu0 0
        %2761 = vmatpush2.bf16.msra.mxu0 0
        %2762 = vmatprep.subr.bf16.mxu0 0
        %2763 = vmatpush2.bf16.msra.mxu0 0
        %2764 = vmatprep.subr.bf16.mxu0 0
        %2765 = vmatpush2.bf16.msra.mxu0 0
        %2766 = vmatprep.subr.bf16.mxu0 0
        %2767 = vmatpush2.bf16.msra.mxu0 0
        %2768 = vmatprep.mubr.bf16.mxu0 0
        %2769 = vmatmul.mubr.bf16.gmra.mxu0 %v2734
        %v2770 = vpop.f32.mrf.mxu0
        %v2771 = vadd.f32 0.0, %v2770
        %v2772 = vpop.f32.mrf.mxu0
        %v2773 = vpop.f32.mrf.mxu0
        %v2774 = vpop.f32.mrf.mxu0
        %2775 = vdwg.mxu0
        %v2776 = vadd.f32 %v497, %v2771
        %v2777 = vld [vmem:[%s6] sm:$0x1]
        %v2778 = vmul.f32 %v2776, %v2776
        %v2779 = vsel %vm506, %v2778, 0.0
        %2780 = vadd.xlane.f32.xlu0 %v2779
        %v2781 = vpop.xlane.xlu0 %2780
        %v2782 = vmul.f32 %v2781, %v510
        %v2783 = vadd.f32 %v2782, 1e-06
        %v2784 = vrsqrt.pop %v2783
        %v2785 = vmul.f32 %v2776, %v2784
        %v2787 = vlaneseq
        %v2788 = vshrl.u32 %v2787, 7
        %v2789 = vsub.s32 0, %v2788
        %v2790 = vrot.slane %v2777, %v2789
        %v2792 = vmul.f32 %v2785, %v2790
        %v2793 = vpack.c.bf16 %v2792, %v2792
        %v2794 = vld [vmem:[%s7] sm:$0xf]
        %v2795 = vld [vmem:[%s7 + $0x4] sm:$0xf]
        %v2796 = vld [vmem:[%s7 + $0x8] sm:$0xf]
        %v2797 = vld [vmem:[%s7 + $0xc] sm:$0xf]
        %v2802 = vunpack.c.l.b16 %v2794
        %v2803 = vunpack.c.l.b16 %v2795
        %v2804 = vunpack.c.l.b16 %v2796
        %v2805 = vunpack.c.l.b16 %v2797
        %v2806 = vpack.c.b16 %v2803, %v2802
        %v2807 = vpack.c.b16 %v2805, %v2804
        %v2811 = vsel %vm506, %v2793, 0
        %2813 = vmatprep.subr.bf16.mxu0 0
        %2814 = vmatpush1.bf16.msra.mxu0 0
        %2815 = vmatprep.subr.bf16.mxu0 0
        %2816 = vmatpush1.bf16.msra.mxu0 0
        %2817 = vmatprep.subr.bf16.mxu0 0
        %2818 = vmatpush1.bf16.msra.mxu0 0
        %2819 = vmatprep.subr.bf16.mxu0 0
        %2820 = vmatpush1.bf16.msra.mxu0 0
        %2821 = vmatprep.subr.bf16.mxu0 0
        %2822 = vmatpush1.bf16.msra.mxu0 0
        %2823 = vmatprep.subr.bf16.mxu0 0
        %2824 = vmatpush1.bf16.msra.mxu0 0
        %2825 = vmatprep.subr.bf16.mxu0 0
        %2826 = vmatpush1.bf16.msra.mxu0 %v2807
        %2827 = vmatprep.subr.bf16.mxu0 0
        %2828 = vmatpush1.bf16.msra.mxu0 %v2806
        %2829 = vmatprep.subr.bf16.mxu0 0
        %2830 = vmatpush2.bf16.msra.mxu0 0
        %2831 = vmatprep.subr.bf16.mxu0 0
        %2832 = vmatpush2.bf16.msra.mxu0 0
        %2833 = vmatprep.subr.bf16.mxu0 0
        %2834 = vmatpush2.bf16.msra.mxu0 0
        %2835 = vmatprep.subr.bf16.mxu0 0
        %2836 = vmatpush2.bf16.msra.mxu0 0
        %2837 = vmatprep.subr.bf16.mxu0 0
        %2838 = vmatpush2.bf16.msra.mxu0 0
        %2839 = vmatprep.subr.bf16.mxu0 0
        %2840 = vmatpush2.bf16.msra.mxu0 0
        %2841 = vmatprep.subr.bf16.mxu0 0
        %2842 = vmatpush2.bf16.msra.mxu0 0
        %2843 = vmatprep.subr.bf16.mxu0 0
        %2844 = vmatpush2.bf16.msra.mxu0 0
        %2845 = vmatprep.mubr.bf16.mxu0 0
        %2846 = vmatmul.mubr.bf16.gmra.mxu0 %v2811
        %v2847 = vpop.f32.mrf.mxu0
        %v2848 = vadd.f32 0.0, %v2847
        %v2849 = vpop.f32.mrf.mxu0
        %v2850 = vpop.f32.mrf.mxu0
        %v2851 = vpop.f32.mrf.mxu0
        %2852 = vdwg.mxu0
        %v2853 = vmul.f32 %v2848, 0.5
        %v2854 = vmul.f32 %v2848, 0.044715
        %v2855 = vmul.f32 %v2854, %v2848
        %v2856 = vmul.f32 %v2855, %v2848
        %v2857 = vadd.f32 %v2848, %v2856
        %v2858 = vmul.f32 %v2857, 0.7978846
        %v2859 = vtanh.pop %v2858
        %v2860 = vadd.f32 %v2859, 1.0
        %v2861 = vmul.f32 %v2853, %v2860
        %2863 = vrot.lane.b32.xlu0 %v2848, 64
        %v2864 = vpop.permute.xlu0 %2863
        %v2866 = vmul.f32 %v2861, %v2864
        %v2867 = vpack.c.bf16 %v2866, %v2866
        %v2868 = vld [vmem:[%s8] sm:$0xf]
        %v2869 = vld [vmem:[%s8 + $0x4] sm:$0xf]
        %v2870 = vld [vmem:[%s8 + $0x8] sm:$0xf]
        %v2871 = vld [vmem:[%s8 + $0xc] sm:$0xf]
        %v2872 = vld [vmem:[%s8 + $0x10] sm:$0xf]
        %v2873 = vld [vmem:[%s8 + $0x14] sm:$0xf]
        %v2874 = vld [vmem:[%s8 + $0x18] sm:$0xf]
        %v2875 = vld [vmem:[%s8 + $0x1c] sm:$0xf]
        %v2884 = vunpack.c.l.b16 %v2868
        %v2885 = vunpack.c.l.b16 %v2869
        %v2886 = vunpack.c.l.b16 %v2870
        %v2887 = vunpack.c.l.b16 %v2871
        %v2888 = vunpack.c.l.b16 %v2872
        %v2889 = vunpack.c.l.b16 %v2873
        %v2890 = vunpack.c.l.b16 %v2874
        %v2891 = vunpack.c.l.b16 %v2875
        %v2892 = vpack.c.b16 %v2885, %v2884
        %v2893 = vpack.c.b16 %v2887, %v2886
        %v2894 = vpack.c.b16 %v2889, %v2888
        %v2895 = vpack.c.b16 %v2891, %v2890
        %v2901 = vsel %vm426, %v2867, 0
        %2903 = vmatprep.subr.bf16.mxu0 0
        %2904 = vmatpush1.bf16.msra.mxu0 0
        %2905 = vmatprep.subr.bf16.mxu0 0
        %2906 = vmatpush1.bf16.msra.mxu0 0
        %2907 = vmatprep.subr.bf16.mxu0 0
        %2908 = vmatpush1.bf16.msra.mxu0 0
        %2909 = vmatprep.subr.bf16.mxu0 0
        %2910 = vmatpush1.bf16.msra.mxu0 0
        %2911 = vmatprep.subr.bf16.mxu0 0
        %2912 = vmatpush1.bf16.msra.mxu0 %v2895
        %2913 = vmatprep.subr.bf16.mxu0 0
        %2914 = vmatpush1.bf16.msra.mxu0 %v2894
        %2915 = vmatprep.subr.bf16.mxu0 0
        %2916 = vmatpush1.bf16.msra.mxu0 %v2893
        %2917 = vmatprep.subr.bf16.mxu0 0
        %2918 = vmatpush1.bf16.msra.mxu0 %v2892
        %2919 = vmatprep.subr.bf16.mxu0 0
        %2920 = vmatpush2.bf16.msra.mxu0 0
        %2921 = vmatprep.subr.bf16.mxu0 0
        %2922 = vmatpush2.bf16.msra.mxu0 0
        %2923 = vmatprep.subr.bf16.mxu0 0
        %2924 = vmatpush2.bf16.msra.mxu0 0
        %2925 = vmatprep.subr.bf16.mxu0 0
        %2926 = vmatpush2.bf16.msra.mxu0 0
        %2927 = vmatprep.subr.bf16.mxu0 0
        %2928 = vmatpush2.bf16.msra.mxu0 0
        %2929 = vmatprep.subr.bf16.mxu0 0
        %2930 = vmatpush2.bf16.msra.mxu0 0
        %2931 = vmatprep.subr.bf16.mxu0 0
        %2932 = vmatpush2.bf16.msra.mxu0 0
        %2933 = vmatprep.subr.bf16.mxu0 0
        %2934 = vmatpush2.bf16.msra.mxu0 0
        %2935 = vmatprep.mubr.bf16.mxu0 0
        %2936 = vmatmul.mubr.bf16.gmra.mxu0 %v2901
        %v2937 = vpop.f32.mrf.mxu0
        %v2938 = vadd.f32 0.0, %v2937
        %v2939 = vpop.f32.mrf.mxu0
        %v2940 = vpop.f32.mrf.mxu0
        %v2941 = vpop.f32.mrf.mxu0
        %2942 = vdwg.mxu0
        %v2943 = vadd.f32 %v2776, %v2938
        %s2944 = scalar_lea.vmem %s3, 1
        %v2945 = vld [vmem:[%s2944] sm:$0x1]
        %v2946 = vmul.f32 %v2943, %v2943
        %v2947 = vsel %vm506, %v2946, 0.0
        %2948 = vadd.xlane.f32.xlu0 %v2947
        %v2949 = vpop.xlane.xlu0 %2948
        %v2950 = vmul.f32 %v2949, %v510
        %v2951 = vadd.f32 %v2950, 1e-06
        %v2952 = vrsqrt.pop %v2951
        %v2953 = vmul.f32 %v2943, %v2952
        %v2955 = vlaneseq
        %v2956 = vshrl.u32 %v2955, 7
        %v2957 = vsub.s32 0, %v2956
        %v2958 = vrot.slane %v2945, %v2957
        %v2960 = vmul.f32 %v2953, %v2958
        %v2961 = vpack.c.bf16 %v2960, %v2960
        %s2962 = scalar_lea.vmem %s4, 16
        %v2963 = vld [vmem:[%s2962] sm:$0xf]
        %v2964 = vld [vmem:[%s2962 + $0x4] sm:$0xf]
        %v2965 = vld [vmem:[%s2962 + $0x8] sm:$0xf]
        %v2966 = vld [vmem:[%s2962 + $0xc] sm:$0xf]
        %v2971 = vunpack.c.l.b16 %v2963
        %v2972 = vunpack.c.l.b16 %v2964
        %v2973 = vunpack.c.l.b16 %v2965
        %v2974 = vunpack.c.l.b16 %v2966
        %v2975 = vpack.c.b16 %v2972, %v2971
        %v2976 = vpack.c.b16 %v2974, %v2973
        %v2980 = vsel %vm506, %v2961, 0
        %2982 = vmatprep.subr.bf16.mxu0 0
        %2983 = vmatpush1.bf16.msra.mxu0 0
        %2984 = vmatprep.subr.bf16.mxu0 0
        %2985 = vmatpush1.bf16.msra.mxu0 0
        %2986 = vmatprep.subr.bf16.mxu0 0
        %2987 = vmatpush1.bf16.msra.mxu0 0
        %2988 = vmatprep.subr.bf16.mxu0 0
        %2989 = vmatpush1.bf16.msra.mxu0 0
        %2990 = vmatprep.subr.bf16.mxu0 0
        %2991 = vmatpush1.bf16.msra.mxu0 0
        %2992 = vmatprep.subr.bf16.mxu0 0
        %2993 = vmatpush1.bf16.msra.mxu0 0
        %2994 = vmatprep.subr.bf16.mxu0 0
        %2995 = vmatpush1.bf16.msra.mxu0 %v2976
        %2996 = vmatprep.subr.bf16.mxu0 0
        %2997 = vmatpush1.bf16.msra.mxu0 %v2975
        %2998 = vmatprep.subr.bf16.mxu0 0
        %2999 = vmatpush2.bf16.msra.mxu0 0
        %3000 = vmatprep.subr.bf16.mxu0 0
        %3001 = vmatpush2.bf16.msra.mxu0 0
        %3002 = vmatprep.subr.bf16.mxu0 0
        %3003 = vmatpush2.bf16.msra.mxu0 0
        %3004 = vmatprep.subr.bf16.mxu0 0
        %3005 = vmatpush2.bf16.msra.mxu0 0
        %3006 = vmatprep.subr.bf16.mxu0 0
        %3007 = vmatpush2.bf16.msra.mxu0 0
        %3008 = vmatprep.subr.bf16.mxu0 0
        %3009 = vmatpush2.bf16.msra.mxu0 0
        %3010 = vmatprep.subr.bf16.mxu0 0
        %3011 = vmatpush2.bf16.msra.mxu0 0
        %3012 = vmatprep.subr.bf16.mxu0 0
        %3013 = vmatpush2.bf16.msra.mxu0 0
        %3014 = vmatprep.mubr.bf16.mxu0 0
        %3015 = vmatmul.mubr.bf16.gmra.mxu0 %v2980
        %v3016 = vpop.f32.mrf.mxu0
        %v3017 = vadd.f32 0.0, %v3016
        %v3018 = vpop.f32.mrf.mxu0
        %v3019 = vpop.f32.mrf.mxu0
        %v3020 = vpop.f32.mrf.mxu0
        %3021 = vdwg.mxu0
        %v3023 = vcombine.high %v3017, %v3017
        %v3025 = vunpack.c.l.s4 1966171168
        %v3026 = vunpack.c.0.s8 %v3025
        %v3027 = vlaneseq
        %v3028 = vshrl.u32 %v3027, 7
        %v3029 = vsub.s32 %v3026, %v3028
        %v3030 = vrot.slane %v3017, %v3029
        %v3032 = vunpack.c.l.s4 1966171168
        %v3033 = vunpack.c.0.s8 %v3032
        %v3034 = vlaneseq
        %v3035 = vshrl.u32 %v3034, 7
        %v3036 = vsub.s32 %v3033, %v3035
        %v3037 = vrot.slane %v3023, %v3036
        %v3038 = vcombine.high %v3030, %v3030
        %v3039 = vcombine.high %v3037, %v3037
        %v3041 = vunpack.c.l.s4 1966171168
        %v3042 = vunpack.c.0.s8 %v3041
        %v3043 = vlaneseq
        %v3044 = vshrl.u32 %v3043, 7
        %v3045 = vsub.s32 %v3042, %v3044
        %v3046 = vrot.slane %v3030, %v3045
        %v3048 = vunpack.c.l.s4 1966171168
        %v3049 = vunpack.c.0.s8 %v3048
        %v3050 = vlaneseq
        %v3051 = vshrl.u32 %v3050, 7
        %v3052 = vsub.s32 %v3049, %v3051
        %v3053 = vrot.slane %v3037, %v3052
        %v3055 = vunpack.c.l.s4 1966171168
        %v3056 = vunpack.c.0.s8 %v3055
        %v3057 = vlaneseq
        %v3058 = vshrl.u32 %v3057, 7
        %v3059 = vsub.s32 %v3056, %v3058
        %v3060 = vrot.slane %v3038, %v3059
        %v3062 = vunpack.c.l.s4 1966171168
        %v3063 = vunpack.c.0.s8 %v3062
        %v3064 = vlaneseq
        %v3065 = vshrl.u32 %v3064, 7
        %v3066 = vsub.s32 %v3063, %v3065
        %v3067 = vrot.slane %v3039, %v3066
        %v3068 = vcombine.high %v3046, %v3046
        %v3069 = vcombine.high %v3053, %v3053
        %v3070 = vcombine.high %v3060, %v3060
        %v3071 = vcombine.high %v3067, %v3067
        %v3072 = vlaneseq
        %v3073 = vshrl.u32 %v3072, 7
        %v3074 = vsub.s32 0, %v3073
        %v3075 = vrot.slane %v3046, %v3074
        %v3076 = vlaneseq
        %v3077 = vshrl.u32 %v3076, 7
        %v3078 = vsub.s32 0, %v3077
        %v3079 = vrot.slane %v3060, %v3078
        %v3080 = vlaneseq
        %v3081 = vshrl.u32 %v3080, 7
        %v3082 = vsub.s32 0, %v3081
        %v3083 = vrot.slane %v3068, %v3082
        %v3084 = vlaneseq
        %v3085 = vshrl.u32 %v3084, 7
        %v3086 = vsub.s32 0, %v3085
        %v3087 = vrot.slane %v3070, %v3086
        %v3088 = vlaneseq
        %v3089 = vshrl.u32 %v3088, 7
        %v3090 = vsub.s32 0, %v3089
        %v3091 = vrot.slane %v3053, %v3090
        %v3092 = vlaneseq
        %v3093 = vshrl.u32 %v3092, 7
        %v3094 = vsub.s32 0, %v3093
        %v3095 = vrot.slane %v3067, %v3094
        %v3096 = vlaneseq
        %v3097 = vshrl.u32 %v3096, 7
        %v3098 = vsub.s32 0, %v3097
        %v3099 = vrot.slane %v3069, %v3098
        %v3100 = vlaneseq
        %v3101 = vshrl.u32 %v3100, 7
        %v3102 = vsub.s32 0, %v3101
        %v3103 = vrot.slane %v3071, %v3102
        %3112 = vrot.lane.b32.xlu0 %v3017, 96
        %v3113 = vpop.permute.xlu0 %3112
        %v3115 = vmul.f32 %v3075, %v3113
        %v3116 = vmul.f32 %v3079, %v3113
        %v3117 = vmul.f32 %v3083, %v3113
        %v3118 = vmul.f32 %v3087, %v3113
        %v3119 = vmul.f32 %v3091, %v3113
        %v3120 = vmul.f32 %v3095, %v3113
        %v3121 = vmul.f32 %v3099, %v3113
        %v3122 = vmul.f32 %v3103, %v3113
        %v3123 = vsel %vm683, %v3115, 0.0
        %3124 = vadd.xlane.f32.xlu0 %v3123
        %v3125 = vpop.xlane.xlu0 %3124
        %v3126 = vsel %vm683, %v3116, 0.0
        %3127 = vadd.xlane.f32.xlu0 %v3126
        %v3128 = vpop.xlane.xlu0 %3127
        %v3129 = vsel %vm683, %v3117, 0.0
        %3130 = vadd.xlane.f32.xlu0 %v3129
        %v3131 = vpop.xlane.xlu0 %3130
        %v3132 = vsel %vm683, %v3118, 0.0
        %3133 = vadd.xlane.f32.xlu0 %v3132
        %v3134 = vpop.xlane.xlu0 %3133
        %v3135 = vsel %vm683, %v3119, 0.0
        %3136 = vadd.xlane.f32.xlu0 %v3135
        %v3137 = vpop.xlane.xlu0 %3136
        %v3138 = vsel %vm683, %v3120, 0.0
        %3139 = vadd.xlane.f32.xlu0 %v3138
        %v3140 = vpop.xlane.xlu0 %3139
        %v3141 = vsel %vm683, %v3121, 0.0
        %3142 = vadd.xlane.f32.xlu0 %v3141
        %v3143 = vpop.xlane.xlu0 %3142
        %v3144 = vsel %vm683, %v3122, 0.0
        %3145 = vadd.xlane.f32.xlu0 %v3144
        %v3146 = vpop.xlane.xlu0 %3145
        %v3147 = vadd.f32 %v3125, %v715
        %v3148 = vadd.f32 %v3128, %v722
        %v3149 = vadd.f32 %v3131, %v729
        %v3150 = vadd.f32 %v3134, %v736
        %v3151 = vadd.f32 %v3137, %v743
        %v3152 = vadd.f32 %v3140, %v750
        %v3153 = vadd.f32 %v3143, %v757
        %v3154 = vadd.f32 %v3146, %v764
        %3163 = vset.pattern.permute.xlu0 0
        %3164 = vperm.xlu0 %3163, %v3147
        %v3165 = vpop.permute.xlu0 %3164
        %3166 = vset.pattern.permute.xlu0 0
        %3167 = vperm.xlu0 %3166, %v3148
        %v3168 = vpop.permute.xlu0 %3167
        %3169 = vset.pattern.permute.xlu0 0
        %3170 = vperm.xlu0 %3169, %v3149
        %v3171 = vpop.permute.xlu0 %3170
        %3172 = vset.pattern.permute.xlu0 0
        %3173 = vperm.xlu0 %3172, %v3150
        %v3174 = vpop.permute.xlu0 %3173
        %3175 = vset.pattern.permute.xlu0 0
        %3176 = vperm.xlu0 %3175, %v3151
        %v3177 = vpop.permute.xlu0 %3176
        %3178 = vset.pattern.permute.xlu0 0
        %3179 = vperm.xlu0 %3178, %v3152
        %v3180 = vpop.permute.xlu0 %3179
        %3181 = vset.pattern.permute.xlu0 0
        %3182 = vperm.xlu0 %3181, %v3153
        %v3183 = vpop.permute.xlu0 %3182
        %3184 = vset.pattern.permute.xlu0 0
        %3185 = vperm.xlu0 %3184, %v3154
        %v3186 = vpop.permute.xlu0 %3185
        %v3187 = vlaneseq
        %v3188 = vshrl.u32 %v3187, 7
        %v3189 = vsub.s32 %v411, %v3188
        %v3190 = vrot.slane %v3165, %v3189
        %v3191 = vlaneseq
        %v3192 = vshrl.u32 %v3191, 7
        %v3193 = vsub.s32 %v411, %v3192
        %v3194 = vrot.slane %v3168, %v3193
        %v3195 = vlaneseq
        %v3196 = vshrl.u32 %v3195, 7
        %v3197 = vsub.s32 %v411, %v3196
        %v3198 = vrot.slane %v3171, %v3197
        %v3199 = vlaneseq
        %v3200 = vshrl.u32 %v3199, 7
        %v3201 = vsub.s32 %v411, %v3200
        %v3202 = vrot.slane %v3174, %v3201
        %v3203 = vlaneseq
        %v3204 = vshrl.u32 %v3203, 7
        %v3205 = vsub.s32 %v411, %v3204
        %v3206 = vrot.slane %v3177, %v3205
        %v3207 = vlaneseq
        %v3208 = vshrl.u32 %v3207, 7
        %v3209 = vsub.s32 %v411, %v3208
        %v3210 = vrot.slane %v3180, %v3209
        %v3211 = vlaneseq
        %v3212 = vshrl.u32 %v3211, 7
        %v3213 = vsub.s32 %v411, %v3212
        %v3214 = vrot.slane %v3183, %v3213
        %v3215 = vlaneseq
        %v3216 = vshrl.u32 %v3215, 7
        %v3217 = vsub.s32 %v411, %v3216
        %v3218 = vrot.slane %v3186, %v3217
        %v3219 = vsel %vm845, %v3194, %v3190
        %v3220 = vsel %vm847, %v3198, %v3219
        %v3221 = vsel %vm849, %v3202, %v3220
        %v3222 = vsel %vm851, %v3206, %v3221
        %v3223 = vsel %vm853, %v3210, %v3222
        %v3224 = vsel %vm855, %v3214, %v3223
        %v3225 = vsel %vm857, %v3218, %v3224
        %v3227 = vsel %vm683, %v3225, -inf
        %3228 = vmax.xlane.f32.xlu0 %v3227
        %v3229 = vpop.xlane.xlu0 %3228
        %v3231 = vlaneseq
        %v3232 = vshrl.u32 %v3231, 7
        %v3233 = vsub.s32 0, %v3232
        %v3234 = vrot.slane %v3229, %v3233
        %v3235 = vlaneseq
        %v3236 = vshrl.u32 %v3235, 7
        %v3237 = vsub.s32 1, %v3236
        %v3238 = vrot.slane %v3229, %v3237
        %v3239 = vlaneseq
        %v3240 = vshrl.u32 %v3239, 7
        %v3241 = vsub.s32 2, %v3240
        %v3242 = vrot.slane %v3229, %v3241
        %v3243 = vlaneseq
        %v3244 = vshrl.u32 %v3243, 7
        %v3245 = vsub.s32 3, %v3244
        %v3246 = vrot.slane %v3229, %v3245
        %v3247 = vlaneseq
        %v3248 = vshrl.u32 %v3247, 7
        %v3249 = vsub.s32 4, %v3248
        %v3250 = vrot.slane %v3229, %v3249
        %v3251 = vlaneseq
        %v3252 = vshrl.u32 %v3251, 7
        %v3253 = vsub.s32 5, %v3252
        %v3254 = vrot.slane %v3229, %v3253
        %v3255 = vlaneseq
        %v3256 = vshrl.u32 %v3255, 7
        %v3257 = vsub.s32 6, %v3256
        %v3258 = vrot.slane %v3229, %v3257
        %v3259 = vlaneseq
        %v3260 = vshrl.u32 %v3259, 7
        %v3261 = vsub.s32 7, %v3260
        %v3262 = vrot.slane %v3229, %v3261
        %v3271 = vsub.f32 %v3147, %v3234
        %v3272 = vsub.f32 %v3148, %v3238
        %v3273 = vsub.f32 %v3149, %v3242
        %v3274 = vsub.f32 %v3150, %v3246
        %v3275 = vsub.f32 %v3151, %v3250
        %v3276 = vsub.f32 %v3152, %v3254
        %v3277 = vsub.f32 %v3153, %v3258
        %v3278 = vsub.f32 %v3154, %v3262
        %v3279 = vmul.f32 %v3271, 1.442695
        %v3280 = vpow.pop %v3279
        %v3281 = vmul.f32 %v3272, 1.442695
        %v3282 = vpow.pop %v3281
        %v3283 = vmul.f32 %v3273, 1.442695
        %v3284 = vpow.pop %v3283
        %v3285 = vmul.f32 %v3274, 1.442695
        %v3286 = vpow.pop %v3285
        %v3287 = vmul.f32 %v3275, 1.442695
        %v3288 = vpow.pop %v3287
        %v3289 = vmul.f32 %v3276, 1.442695
        %v3290 = vpow.pop %v3289
        %v3291 = vmul.f32 %v3277, 1.442695
        %v3292 = vpow.pop %v3291
        %v3293 = vmul.f32 %v3278, 1.442695
        %v3294 = vpow.pop %v3293
        %3303 = vset.pattern.permute.xlu0 0
        %3304 = vperm.xlu0 %3303, %v3280
        %v3305 = vpop.permute.xlu0 %3304
        %3306 = vset.pattern.permute.xlu0 0
        %3307 = vperm.xlu0 %3306, %v3282
        %v3308 = vpop.permute.xlu0 %3307
        %3309 = vset.pattern.permute.xlu0 0
        %3310 = vperm.xlu0 %3309, %v3284
        %v3311 = vpop.permute.xlu0 %3310
        %3312 = vset.pattern.permute.xlu0 0
        %3313 = vperm.xlu0 %3312, %v3286
        %v3314 = vpop.permute.xlu0 %3313
        %3315 = vset.pattern.permute.xlu0 0
        %3316 = vperm.xlu0 %3315, %v3288
        %v3317 = vpop.permute.xlu0 %3316
        %3318 = vset.pattern.permute.xlu0 0
        %3319 = vperm.xlu0 %3318, %v3290
        %v3320 = vpop.permute.xlu0 %3319
        %3321 = vset.pattern.permute.xlu0 0
        %3322 = vperm.xlu0 %3321, %v3292
        %v3323 = vpop.permute.xlu0 %3322
        %3324 = vset.pattern.permute.xlu0 0
        %3325 = vperm.xlu0 %3324, %v3294
        %v3326 = vpop.permute.xlu0 %3325
        %v3327 = vlaneseq
        %v3328 = vshrl.u32 %v3327, 7
        %v3329 = vsub.s32 %v411, %v3328
        %v3330 = vrot.slane %v3305, %v3329
        %v3331 = vlaneseq
        %v3332 = vshrl.u32 %v3331, 7
        %v3333 = vsub.s32 %v411, %v3332
        %v3334 = vrot.slane %v3308, %v3333
        %v3335 = vlaneseq
        %v3336 = vshrl.u32 %v3335, 7
        %v3337 = vsub.s32 %v411, %v3336
        %v3338 = vrot.slane %v3311, %v3337
        %v3339 = vlaneseq
        %v3340 = vshrl.u32 %v3339, 7
        %v3341 = vsub.s32 %v411, %v3340
        %v3342 = vrot.slane %v3314, %v3341
        %v3343 = vlaneseq
        %v3344 = vshrl.u32 %v3343, 7
        %v3345 = vsub.s32 %v411, %v3344
        %v3346 = vrot.slane %v3317, %v3345
        %v3347 = vlaneseq
        %v3348 = vshrl.u32 %v3347, 7
        %v3349 = vsub.s32 %v411, %v3348
        %v3350 = vrot.slane %v3320, %v3349
        %v3351 = vlaneseq
        %v3352 = vshrl.u32 %v3351, 7
        %v3353 = vsub.s32 %v411, %v3352
        %v3354 = vrot.slane %v3323, %v3353
        %v3355 = vlaneseq
        %v3356 = vshrl.u32 %v3355, 7
        %v3357 = vsub.s32 %v411, %v3356
        %v3358 = vrot.slane %v3326, %v3357
        %v3359 = vsel %vm845, %v3334, %v3330
        %v3360 = vsel %vm847, %v3338, %v3359
        %v3361 = vsel %vm849, %v3342, %v3360
        %v3362 = vsel %vm851, %v3346, %v3361
        %v3363 = vsel %vm853, %v3350, %v3362
        %v3364 = vsel %vm855, %v3354, %v3363
        %v3365 = vsel %vm857, %v3358, %v3364
        %v3367 = vsel %vm683, %v3365, 0.0
        %3368 = vadd.xlane.f32.xlu0 %v3367
        %v3369 = vpop.xlane.xlu0 %3368
        %v3370 = vrcp.pop %v3369
        %v3372 = vlaneseq
        %v3373 = vshrl.u32 %v3372, 7
        %v3374 = vsub.s32 0, %v3373
        %v3375 = vrot.slane %v3370, %v3374
        %v3376 = vlaneseq
        %v3377 = vshrl.u32 %v3376, 7
        %v3378 = vsub.s32 1, %v3377
        %v3379 = vrot.slane %v3370, %v3378
        %v3380 = vlaneseq
        %v3381 = vshrl.u32 %v3380, 7
        %v3382 = vsub.s32 2, %v3381
        %v3383 = vrot.slane %v3370, %v3382
        %v3384 = vlaneseq
        %v3385 = vshrl.u32 %v3384, 7
        %v3386 = vsub.s32 3, %v3385
        %v3387 = vrot.slane %v3370, %v3386
        %v3388 = vlaneseq
        %v3389 = vshrl.u32 %v3388, 7
        %v3390 = vsub.s32 4, %v3389
        %v3391 = vrot.slane %v3370, %v3390
        %v3392 = vlaneseq
        %v3393 = vshrl.u32 %v3392, 7
        %v3394 = vsub.s32 5, %v3393
        %v3395 = vrot.slane %v3370, %v3394
        %v3396 = vlaneseq
        %v3397 = vshrl.u32 %v3396, 7
        %v3398 = vsub.s32 6, %v3397
        %v3399 = vrot.slane %v3370, %v3398
        %v3400 = vlaneseq
        %v3401 = vshrl.u32 %v3400, 7
        %v3402 = vsub.s32 7, %v3401
        %v3403 = vrot.slane %v3370, %v3402
        %v3412 = vmul.f32 %v3280, %v3375
        %v3413 = vmul.f32 %v3282, %v3379
        %v3414 = vmul.f32 %v3284, %v3383
        %v3415 = vmul.f32 %v3286, %v3387
        %v3416 = vmul.f32 %v3288, %v3391
        %v3417 = vmul.f32 %v3290, %v3395
        %v3418 = vmul.f32 %v3292, %v3399
        %v3419 = vmul.f32 %v3294, %v3403
        %3421 = vset.pattern.permute.xlu0 0
        %3422 = vperm.xlu0 %3421, %v3412
        %v3423 = vpop.permute.xlu0 %3422
        %3426 = vset.pattern.permute.xlu0 0
        %3427 = vperm.xlu0 %3426, %v3413
        %v3428 = vpop.permute.xlu0 %3427
        %3431 = vset.pattern.permute.xlu0 0
        %3432 = vperm.xlu0 %3431, %v3414
        %v3433 = vpop.permute.xlu0 %3432
        %3436 = vset.pattern.permute.xlu0 0
        %3437 = vperm.xlu0 %3436, %v3415
        %v3438 = vpop.permute.xlu0 %3437
        %3441 = vset.pattern.permute.xlu0 0
        %3442 = vperm.xlu0 %3441, %v3416
        %v3443 = vpop.permute.xlu0 %3442
        %3446 = vset.pattern.permute.xlu0 0
        %3447 = vperm.xlu0 %3446, %v3417
        %v3448 = vpop.permute.xlu0 %3447
        %3451 = vset.pattern.permute.xlu0 0
        %3452 = vperm.xlu0 %3451, %v3418
        %v3453 = vpop.permute.xlu0 %3452
        %3456 = vset.pattern.permute.xlu0 0
        %3457 = vperm.xlu0 %3456, %v3419
        %v3458 = vpop.permute.xlu0 %3457
        %v3460 = vmul.f32 %v3423, %v3017
        %v3461 = vmul.f32 %v3428, %v3017
        %v3462 = vmul.f32 %v3433, %v3017
        %v3463 = vmul.f32 %v3438, %v3017
        %v3464 = vmul.f32 %v3443, %v3017
        %v3465 = vmul.f32 %v3448, %v3017
        %v3466 = vmul.f32 %v3453, %v3017
        %v3467 = vmul.f32 %v3458, %v3017
        %v3468 = vsel %vm1101, %v3460, 0.0
        %v3469 = vrot.slane %v3468, 4
        %v3470 = vadd.f32 %v3468, %v3469
        %v3471 = vrot.slane %v3470, 2
        %v3472 = vadd.f32 %v3470, %v3471
        %v3473 = vrot.slane %v3472, 1
        %v3474 = vadd.f32 %v3472, %v3473
        %v3475 = vsel %vm1101, %v3461, 0.0
        %v3476 = vrot.slane %v3475, 4
        %v3477 = vadd.f32 %v3475, %v3476
        %v3478 = vrot.slane %v3477, 2
        %v3479 = vadd.f32 %v3477, %v3478
        %v3480 = vrot.slane %v3479, 1
        %v3481 = vadd.f32 %v3479, %v3480
        %v3482 = vsel %vm1101, %v3462, 0.0
        %v3483 = vrot.slane %v3482, 4
        %v3484 = vadd.f32 %v3482, %v3483
        %v3485 = vrot.slane %v3484, 2
        %v3486 = vadd.f32 %v3484, %v3485
        %v3487 = vrot.slane %v3486, 1
        %v3488 = vadd.f32 %v3486, %v3487
        %v3489 = vsel %vm1101, %v3463, 0.0
        %v3490 = vrot.slane %v3489, 4
        %v3491 = vadd.f32 %v3489, %v3490
        %v3492 = vrot.slane %v3491, 2
        %v3493 = vadd.f32 %v3491, %v3492
        %v3494 = vrot.slane %v3493, 1
        %v3495 = vadd.f32 %v3493, %v3494
        %v3496 = vsel %vm1101, %v3464, 0.0
        %v3497 = vrot.slane %v3496, 4
        %v3498 = vadd.f32 %v3496, %v3497
        %v3499 = vrot.slane %v3498, 2
        %v3500 = vadd.f32 %v3498, %v3499
        %v3501 = vrot.slane %v3500, 1
        %v3502 = vadd.f32 %v3500, %v3501
        %v3503 = vsel %vm1101, %v3465, 0.0
        %v3504 = vrot.slane %v3503, 4
        %v3505 = vadd.f32 %v3503, %v3504
        %v3506 = vrot.slane %v3505, 2
        %v3507 = vadd.f32 %v3505, %v3506
        %v3508 = vrot.slane %v3507, 1
        %v3509 = vadd.f32 %v3507, %v3508
        %v3510 = vsel %vm1101, %v3466, 0.0
        %v3511 = vrot.slane %v3510, 4
        %v3512 = vadd.f32 %v3510, %v3511
        %v3513 = vrot.slane %v3512, 2
        %v3514 = vadd.f32 %v3512, %v3513
        %v3515 = vrot.slane %v3514, 1
        %v3516 = vadd.f32 %v3514, %v3515
        %v3517 = vsel %vm1101, %v3467, 0.0
        %v3518 = vrot.slane %v3517, 4
        %v3519 = vadd.f32 %v3517, %v3518
        %v3520 = vrot.slane %v3519, 2
        %v3521 = vadd.f32 %v3519, %v3520
        %v3522 = vrot.slane %v3521, 1
        %v3523 = vadd.f32 %v3521, %v3522
        %3532 = vrot.lane.b32.xlu0 %v3115, 120
        %v3533 = vpop.permute.xlu0 %3532
        %3534 = vrot.lane.b32.xlu0 %v3116, 120
        %v3535 = vpop.permute.xlu0 %3534
        %3536 = vrot.lane.b32.xlu0 %v3117, 120
        %v3537 = vpop.permute.xlu0 %3536
        %3538 = vrot.lane.b32.xlu0 %v3118, 120
        %v3539 = vpop.permute.xlu0 %3538
        %3540 = vrot.lane.b32.xlu0 %v3119, 120
        %v3541 = vpop.permute.xlu0 %3540
        %3542 = vrot.lane.b32.xlu0 %v3120, 120
        %v3543 = vpop.permute.xlu0 %3542
        %3544 = vrot.lane.b32.xlu0 %v3121, 120
        %v3545 = vpop.permute.xlu0 %3544
        %3546 = vrot.lane.b32.xlu0 %v3122, 120
        %v3547 = vpop.permute.xlu0 %3546
        %v3556 = vsel %vm683, %v3533, 0.0
        %3557 = vadd.xlane.f32.xlu0 %v3556
        %v3558 = vpop.xlane.xlu0 %3557
        %v3559 = vsel %vm683, %v3535, 0.0
        %3560 = vadd.xlane.f32.xlu0 %v3559
        %v3561 = vpop.xlane.xlu0 %3560
        %v3562 = vsel %vm683, %v3537, 0.0
        %3563 = vadd.xlane.f32.xlu0 %v3562
        %v3564 = vpop.xlane.xlu0 %3563
        %v3565 = vsel %vm683, %v3539, 0.0
        %3566 = vadd.xlane.f32.xlu0 %v3565
        %v3567 = vpop.xlane.xlu0 %3566
        %v3568 = vsel %vm683, %v3541, 0.0
        %3569 = vadd.xlane.f32.xlu0 %v3568
        %v3570 = vpop.xlane.xlu0 %3569
        %v3571 = vsel %vm683, %v3543, 0.0
        %3572 = vadd.xlane.f32.xlu0 %v3571
        %v3573 = vpop.xlane.xlu0 %3572
        %v3574 = vsel %vm683, %v3545, 0.0
        %3575 = vadd.xlane.f32.xlu0 %v3574
        %v3576 = vpop.xlane.xlu0 %3575
        %v3577 = vsel %vm683, %v3547, 0.0
        %3578 = vadd.xlane.f32.xlu0 %v3577
        %v3579 = vpop.xlane.xlu0 %3578
        %v3580 = vadd.f32 %v3558, %v1221
        %v3581 = vadd.f32 %v3561, %v1228
        %v3582 = vadd.f32 %v3564, %v1235
        %v3583 = vadd.f32 %v3567, %v1242
        %v3584 = vadd.f32 %v3570, %v1249
        %v3585 = vadd.f32 %v3573, %v1256
        %v3586 = vadd.f32 %v3576, %v1263
        %v3587 = vadd.f32 %v3579, %v1270
        %3596 = vset.pattern.permute.xlu0 0
        %3597 = vperm.xlu0 %3596, %v3580
        %v3598 = vpop.permute.xlu0 %3597
        %3599 = vset.pattern.permute.xlu0 0
        %3600 = vperm.xlu0 %3599, %v3581
        %v3601 = vpop.permute.xlu0 %3600
        %3602 = vset.pattern.permute.xlu0 0
        %3603 = vperm.xlu0 %3602, %v3582
        %v3604 = vpop.permute.xlu0 %3603
        %3605 = vset.pattern.permute.xlu0 0
        %3606 = vperm.xlu0 %3605, %v3583
        %v3607 = vpop.permute.xlu0 %3606
        %3608 = vset.pattern.permute.xlu0 0
        %3609 = vperm.xlu0 %3608, %v3584
        %v3610 = vpop.permute.xlu0 %3609
        %3611 = vset.pattern.permute.xlu0 0
        %3612 = vperm.xlu0 %3611, %v3585
        %v3613 = vpop.permute.xlu0 %3612
        %3614 = vset.pattern.permute.xlu0 0
        %3615 = vperm.xlu0 %3614, %v3586
        %v3616 = vpop.permute.xlu0 %3615
        %3617 = vset.pattern.permute.xlu0 0
        %3618 = vperm.xlu0 %3617, %v3587
        %v3619 = vpop.permute.xlu0 %3618
        %v3620 = vlaneseq
        %v3621 = vshrl.u32 %v3620, 7
        %v3622 = vsub.s32 %v411, %v3621
        %v3623 = vrot.slane %v3598, %v3622
        %v3624 = vlaneseq
        %v3625 = vshrl.u32 %v3624, 7
        %v3626 = vsub.s32 %v411, %v3625
        %v3627 = vrot.slane %v3601, %v3626
        %v3628 = vlaneseq
        %v3629 = vshrl.u32 %v3628, 7
        %v3630 = vsub.s32 %v411, %v3629
        %v3631 = vrot.slane %v3604, %v3630
        %v3632 = vlaneseq
        %v3633 = vshrl.u32 %v3632, 7
        %v3634 = vsub.s32 %v411, %v3633
        %v3635 = vrot.slane %v3607, %v3634
        %v3636 = vlaneseq
        %v3637 = vshrl.u32 %v3636, 7
        %v3638 = vsub.s32 %v411, %v3637
        %v3639 = vrot.slane %v3610, %v3638
        %v3640 = vlaneseq
        %v3641 = vshrl.u32 %v3640, 7
        %v3642 = vsub.s32 %v411, %v3641
        %v3643 = vrot.slane %v3613, %v3642
        %v3644 = vlaneseq
        %v3645 = vshrl.u32 %v3644, 7
        %v3646 = vsub.s32 %v411, %v3645
        %v3647 = vrot.slane %v3616, %v3646
        %v3648 = vlaneseq
        %v3649 = vshrl.u32 %v3648, 7
        %v3650 = vsub.s32 %v411, %v3649
        %v3651 = vrot.slane %v3619, %v3650
        %v3652 = vsel %vm845, %v3627, %v3623
        %v3653 = vsel %vm847, %v3631, %v3652
        %v3654 = vsel %vm849, %v3635, %v3653
        %v3655 = vsel %vm851, %v3639, %v3654
        %v3656 = vsel %vm853, %v3643, %v3655
        %v3657 = vsel %vm855, %v3647, %v3656
        %v3658 = vsel %vm857, %v3651, %v3657
        %v3660 = vsel %vm683, %v3658, -inf
        %3661 = vmax.xlane.f32.xlu0 %v3660
        %v3662 = vpop.xlane.xlu0 %3661
        %v3664 = vlaneseq
        %v3665 = vshrl.u32 %v3664, 7
        %v3666 = vsub.s32 0, %v3665
        %v3667 = vrot.slane %v3662, %v3666
        %v3668 = vlaneseq
        %v3669 = vshrl.u32 %v3668, 7
        %v3670 = vsub.s32 1, %v3669
        %v3671 = vrot.slane %v3662, %v3670
        %v3672 = vlaneseq
        %v3673 = vshrl.u32 %v3672, 7
        %v3674 = vsub.s32 2, %v3673
        %v3675 = vrot.slane %v3662, %v3674
        %v3676 = vlaneseq
        %v3677 = vshrl.u32 %v3676, 7
        %v3678 = vsub.s32 3, %v3677
        %v3679 = vrot.slane %v3662, %v3678
        %v3680 = vlaneseq
        %v3681 = vshrl.u32 %v3680, 7
        %v3682 = vsub.s32 4, %v3681
        %v3683 = vrot.slane %v3662, %v3682
        %v3684 = vlaneseq
        %v3685 = vshrl.u32 %v3684, 7
        %v3686 = vsub.s32 5, %v3685
        %v3687 = vrot.slane %v3662, %v3686
        %v3688 = vlaneseq
        %v3689 = vshrl.u32 %v3688, 7
        %v3690 = vsub.s32 6, %v3689
        %v3691 = vrot.slane %v3662, %v3690
        %v3692 = vlaneseq
        %v3693 = vshrl.u32 %v3692, 7
        %v3694 = vsub.s32 7, %v3693
        %v3695 = vrot.slane %v3662, %v3694
        %v3704 = vsub.f32 %v3580, %v3667
        %v3705 = vsub.f32 %v3581, %v3671
        %v3706 = vsub.f32 %v3582, %v3675
        %v3707 = vsub.f32 %v3583, %v3679
        %v3708 = vsub.f32 %v3584, %v3683
        %v3709 = vsub.f32 %v3585, %v3687
        %v3710 = vsub.f32 %v3586, %v3691
        %v3711 = vsub.f32 %v3587, %v3695
        %v3712 = vmul.f32 %v3704, 1.442695
        %v3713 = vpow.pop %v3712
        %v3714 = vmul.f32 %v3705, 1.442695
        %v3715 = vpow.pop %v3714
        %v3716 = vmul.f32 %v3706, 1.442695
        %v3717 = vpow.pop %v3716
        %v3718 = vmul.f32 %v3707, 1.442695
        %v3719 = vpow.pop %v3718
        %v3720 = vmul.f32 %v3708, 1.442695
        %v3721 = vpow.pop %v3720
        %v3722 = vmul.f32 %v3709, 1.442695
        %v3723 = vpow.pop %v3722
        %v3724 = vmul.f32 %v3710, 1.442695
        %v3725 = vpow.pop %v3724
        %v3726 = vmul.f32 %v3711, 1.442695
        %v3727 = vpow.pop %v3726
        %3736 = vset.pattern.permute.xlu0 0
        %3737 = vperm.xlu0 %3736, %v3713
        %v3738 = vpop.permute.xlu0 %3737
        %3739 = vset.pattern.permute.xlu0 0
        %3740 = vperm.xlu0 %3739, %v3715
        %v3741 = vpop.permute.xlu0 %3740
        %3742 = vset.pattern.permute.xlu0 0
        %3743 = vperm.xlu0 %3742, %v3717
        %v3744 = vpop.permute.xlu0 %3743
        %3745 = vset.pattern.permute.xlu0 0
        %3746 = vperm.xlu0 %3745, %v3719
        %v3747 = vpop.permute.xlu0 %3746
        %3748 = vset.pattern.permute.xlu0 0
        %3749 = vperm.xlu0 %3748, %v3721
        %v3750 = vpop.permute.xlu0 %3749
        %3751 = vset.pattern.permute.xlu0 0
        %3752 = vperm.xlu0 %3751, %v3723
        %v3753 = vpop.permute.xlu0 %3752
        %3754 = vset.pattern.permute.xlu0 0
        %3755 = vperm.xlu0 %3754, %v3725
        %v3756 = vpop.permute.xlu0 %3755
        %3757 = vset.pattern.permute.xlu0 0
        %3758 = vperm.xlu0 %3757, %v3727
        %v3759 = vpop.permute.xlu0 %3758
        %v3760 = vlaneseq
        %v3761 = vshrl.u32 %v3760, 7
        %v3762 = vsub.s32 %v411, %v3761
        %v3763 = vrot.slane %v3738, %v3762
        %v3764 = vlaneseq
        %v3765 = vshrl.u32 %v3764, 7
        %v3766 = vsub.s32 %v411, %v3765
        %v3767 = vrot.slane %v3741, %v3766
        %v3768 = vlaneseq
        %v3769 = vshrl.u32 %v3768, 7
        %v3770 = vsub.s32 %v411, %v3769
        %v3771 = vrot.slane %v3744, %v3770
        %v3772 = vlaneseq
        %v3773 = vshrl.u32 %v3772, 7
        %v3774 = vsub.s32 %v411, %v3773
        %v3775 = vrot.slane %v3747, %v3774
        %v3776 = vlaneseq
        %v3777 = vshrl.u32 %v3776, 7
        %v3778 = vsub.s32 %v411, %v3777
        %v3779 = vrot.slane %v3750, %v3778
        %v3780 = vlaneseq
        %v3781 = vshrl.u32 %v3780, 7
        %v3782 = vsub.s32 %v411, %v3781
        %v3783 = vrot.slane %v3753, %v3782
        %v3784 = vlaneseq
        %v3785 = vshrl.u32 %v3784, 7
        %v3786 = vsub.s32 %v411, %v3785
        %v3787 = vrot.slane %v3756, %v3786
        %v3788 = vlaneseq
        %v3789 = vshrl.u32 %v3788, 7
        %v3790 = vsub.s32 %v411, %v3789
        %v3791 = vrot.slane %v3759, %v3790
        %v3792 = vsel %vm845, %v3767, %v3763
        %v3793 = vsel %vm847, %v3771, %v3792
        %v3794 = vsel %vm849, %v3775, %v3793
        %v3795 = vsel %vm851, %v3779, %v3794
        %v3796 = vsel %vm853, %v3783, %v3795
        %v3797 = vsel %vm855, %v3787, %v3796
        %v3798 = vsel %vm857, %v3791, %v3797
        %v3800 = vsel %vm683, %v3798, 0.0
        %3801 = vadd.xlane.f32.xlu0 %v3800
        %v3802 = vpop.xlane.xlu0 %3801
        %v3803 = vrcp.pop %v3802
        %v3805 = vlaneseq
        %v3806 = vshrl.u32 %v3805, 7
        %v3807 = vsub.s32 0, %v3806
        %v3808 = vrot.slane %v3803, %v3807
        %v3809 = vlaneseq
        %v3810 = vshrl.u32 %v3809, 7
        %v3811 = vsub.s32 1, %v3810
        %v3812 = vrot.slane %v3803, %v3811
        %v3813 = vlaneseq
        %v3814 = vshrl.u32 %v3813, 7
        %v3815 = vsub.s32 2, %v3814
        %v3816 = vrot.slane %v3803, %v3815
        %v3817 = vlaneseq
        %v3818 = vshrl.u32 %v3817, 7
        %v3819 = vsub.s32 3, %v3818
        %v3820 = vrot.slane %v3803, %v3819
        %v3821 = vlaneseq
        %v3822 = vshrl.u32 %v3821, 7
        %v3823 = vsub.s32 4, %v3822
        %v3824 = vrot.slane %v3803, %v3823
        %v3825 = vlaneseq
        %v3826 = vshrl.u32 %v3825, 7
        %v3827 = vsub.s32 5, %v3826
        %v3828 = vrot.slane %v3803, %v3827
        %v3829 = vlaneseq
        %v3830 = vshrl.u32 %v3829, 7
        %v3831 = vsub.s32 6, %v3830
        %v3832 = vrot.slane %v3803, %v3831
        %v3833 = vlaneseq
        %v3834 = vshrl.u32 %v3833, 7
        %v3835 = vsub.s32 7, %v3834
        %v3836 = vrot.slane %v3803, %v3835
        %v3845 = vmul.f32 %v3713, %v3808
        %v3846 = vmul.f32 %v3715, %v3812
        %v3847 = vmul.f32 %v3717, %v3816
        %v3848 = vmul.f32 %v3719, %v3820
        %v3849 = vmul.f32 %v3721, %v3824
        %v3850 = vmul.f32 %v3723, %v3828
        %v3851 = vmul.f32 %v3725, %v3832
        %v3852 = vmul.f32 %v3727, %v3836
        %3854 = vset.pattern.permute.xlu0 0
        %3855 = vperm.xlu0 %3854, %v3845
        %v3856 = vpop.permute.xlu0 %3855
        %3859 = vset.pattern.permute.xlu0 0
        %3860 = vperm.xlu0 %3859, %v3846
        %v3861 = vpop.permute.xlu0 %3860
        %3864 = vset.pattern.permute.xlu0 0
        %3865 = vperm.xlu0 %3864, %v3847
        %v3866 = vpop.permute.xlu0 %3865
        %3869 = vset.pattern.permute.xlu0 0
        %3870 = vperm.xlu0 %3869, %v3848
        %v3871 = vpop.permute.xlu0 %3870
        %3874 = vset.pattern.permute.xlu0 0
        %3875 = vperm.xlu0 %3874, %v3849
        %v3876 = vpop.permute.xlu0 %3875
        %3879 = vset.pattern.permute.xlu0 0
        %3880 = vperm.xlu0 %3879, %v3850
        %v3881 = vpop.permute.xlu0 %3880
        %3884 = vset.pattern.permute.xlu0 0
        %3885 = vperm.xlu0 %3884, %v3851
        %v3886 = vpop.permute.xlu0 %3885
        %3889 = vset.pattern.permute.xlu0 0
        %3890 = vperm.xlu0 %3889, %v3852
        %v3891 = vpop.permute.xlu0 %3890
        %v3893 = vmul.f32 %v3856, %v3017
        %v3894 = vmul.f32 %v3861, %v3017
        %v3895 = vmul.f32 %v3866, %v3017
        %v3896 = vmul.f32 %v3871, %v3017
        %v3897 = vmul.f32 %v3876, %v3017
        %v3898 = vmul.f32 %v3881, %v3017
        %v3899 = vmul.f32 %v3886, %v3017
        %v3900 = vmul.f32 %v3891, %v3017
        %v3901 = vsel %vm1600, %v3893, 0.0
        %v3902 = vrot.slane %v3901, 4
        %v3903 = vadd.f32 %v3901, %v3902
        %v3904 = vrot.slane %v3903, 2
        %v3905 = vadd.f32 %v3903, %v3904
        %v3906 = vrot.slane %v3905, 1
        %v3907 = vadd.f32 %v3905, %v3906
        %v3908 = vsel %vm1600, %v3894, 0.0
        %v3909 = vrot.slane %v3908, 4
        %v3910 = vadd.f32 %v3908, %v3909
        %v3911 = vrot.slane %v3910, 2
        %v3912 = vadd.f32 %v3910, %v3911
        %v3913 = vrot.slane %v3912, 1
        %v3914 = vadd.f32 %v3912, %v3913
        %v3915 = vsel %vm1600, %v3895, 0.0
        %v3916 = vrot.slane %v3915, 4
        %v3917 = vadd.f32 %v3915, %v3916
        %v3918 = vrot.slane %v3917, 2
        %v3919 = vadd.f32 %v3917, %v3918
        %v3920 = vrot.slane %v3919, 1
        %v3921 = vadd.f32 %v3919, %v3920
        %v3922 = vsel %vm1600, %v3896, 0.0
        %v3923 = vrot.slane %v3922, 4
        %v3924 = vadd.f32 %v3922, %v3923
        %v3925 = vrot.slane %v3924, 2
        %v3926 = vadd.f32 %v3924, %v3925
        %v3927 = vrot.slane %v3926, 1
        %v3928 = vadd.f32 %v3926, %v3927
        %v3929 = vsel %vm1600, %v3897, 0.0
        %v3930 = vrot.slane %v3929, 4
        %v3931 = vadd.f32 %v3929, %v3930
        %v3932 = vrot.slane %v3931, 2
        %v3933 = vadd.f32 %v3931, %v3932
        %v3934 = vrot.slane %v3933, 1
        %v3935 = vadd.f32 %v3933, %v3934
        %v3936 = vsel %vm1600, %v3898, 0.0
        %v3937 = vrot.slane %v3936, 4
        %v3938 = vadd.f32 %v3936, %v3937
        %v3939 = vrot.slane %v3938, 2
        %v3940 = vadd.f32 %v3938, %v3939
        %v3941 = vrot.slane %v3940, 1
        %v3942 = vadd.f32 %v3940, %v3941
        %v3943 = vsel %vm1600, %v3899, 0.0
        %v3944 = vrot.slane %v3943, 4
        %v3945 = vadd.f32 %v3943, %v3944
        %v3946 = vrot.slane %v3945, 2
        %v3947 = vadd.f32 %v3945, %v3946
        %v3948 = vrot.slane %v3947, 1
        %v3949 = vadd.f32 %v3947, %v3948
        %v3950 = vsel %vm1600, %v3900, 0.0
        %v3951 = vrot.slane %v3950, 4
        %v3952 = vadd.f32 %v3950, %v3951
        %v3953 = vrot.slane %v3952, 2
        %v3954 = vadd.f32 %v3952, %v3953
        %v3955 = vrot.slane %v3954, 1
        %v3956 = vadd.f32 %v3954, %v3955
        %3957 = vrot.lane.b32.xlu0 %v3115, 112
        %v3958 = vpop.permute.xlu0 %3957
        %3959 = vrot.lane.b32.xlu0 %v3116, 112
        %v3960 = vpop.permute.xlu0 %3959
        %3961 = vrot.lane.b32.xlu0 %v3117, 112
        %v3962 = vpop.permute.xlu0 %3961
        %3963 = vrot.lane.b32.xlu0 %v3118, 112
        %v3964 = vpop.permute.xlu0 %3963
        %3965 = vrot.lane.b32.xlu0 %v3119, 112
        %v3966 = vpop.permute.xlu0 %3965
        %3967 = vrot.lane.b32.xlu0 %v3120, 112
        %v3968 = vpop.permute.xlu0 %3967
        %3969 = vrot.lane.b32.xlu0 %v3121, 112
        %v3970 = vpop.permute.xlu0 %3969
        %3971 = vrot.lane.b32.xlu0 %v3122, 112
        %v3972 = vpop.permute.xlu0 %3971
        %v3981 = vsel %vm683, %v3958, 0.0
        %3982 = vadd.xlane.f32.xlu0 %v3981
        %v3983 = vpop.xlane.xlu0 %3982
        %v3984 = vsel %vm683, %v3960, 0.0
        %3985 = vadd.xlane.f32.xlu0 %v3984
        %v3986 = vpop.xlane.xlu0 %3985
        %v3987 = vsel %vm683, %v3962, 0.0
        %3988 = vadd.xlane.f32.xlu0 %v3987
        %v3989 = vpop.xlane.xlu0 %3988
        %v3990 = vsel %vm683, %v3964, 0.0
        %3991 = vadd.xlane.f32.xlu0 %v3990
        %v3992 = vpop.xlane.xlu0 %3991
        %v3993 = vsel %vm683, %v3966, 0.0
        %3994 = vadd.xlane.f32.xlu0 %v3993
        %v3995 = vpop.xlane.xlu0 %3994
        %v3996 = vsel %vm683, %v3968, 0.0
        %3997 = vadd.xlane.f32.xlu0 %v3996
        %v3998 = vpop.xlane.xlu0 %3997
        %v3999 = vsel %vm683, %v3970, 0.0
        %4000 = vadd.xlane.f32.xlu0 %v3999
        %v4001 = vpop.xlane.xlu0 %4000
        %v4002 = vsel %vm683, %v3972, 0.0
        %4003 = vadd.xlane.f32.xlu0 %v4002
        %v4004 = vpop.xlane.xlu0 %4003
        %v4005 = vadd.f32 %v3983, %v1712
        %v4006 = vadd.f32 %v3986, %v1719
        %v4007 = vadd.f32 %v3989, %v1726
        %v4008 = vadd.f32 %v3992, %v1733
        %v4009 = vadd.f32 %v3995, %v1740
        %v4010 = vadd.f32 %v3998, %v1747
        %v4011 = vadd.f32 %v4001, %v1754
        %v4012 = vadd.f32 %v4004, %v1761
        %4021 = vset.pattern.permute.xlu0 0
        %4022 = vperm.xlu0 %4021, %v4005
        %v4023 = vpop.permute.xlu0 %4022
        %4024 = vset.pattern.permute.xlu0 0
        %4025 = vperm.xlu0 %4024, %v4006
        %v4026 = vpop.permute.xlu0 %4025
        %4027 = vset.pattern.permute.xlu0 0
        %4028 = vperm.xlu0 %4027, %v4007
        %v4029 = vpop.permute.xlu0 %4028
        %4030 = vset.pattern.permute.xlu0 0
        %4031 = vperm.xlu0 %4030, %v4008
        %v4032 = vpop.permute.xlu0 %4031
        %4033 = vset.pattern.permute.xlu0 0
        %4034 = vperm.xlu0 %4033, %v4009
        %v4035 = vpop.permute.xlu0 %4034
        %4036 = vset.pattern.permute.xlu0 0
        %4037 = vperm.xlu0 %4036, %v4010
        %v4038 = vpop.permute.xlu0 %4037
        %4039 = vset.pattern.permute.xlu0 0
        %4040 = vperm.xlu0 %4039, %v4011
        %v4041 = vpop.permute.xlu0 %4040
        %4042 = vset.pattern.permute.xlu0 0
        %4043 = vperm.xlu0 %4042, %v4012
        %v4044 = vpop.permute.xlu0 %4043
        %v4045 = vlaneseq
        %v4046 = vshrl.u32 %v4045, 7
        %v4047 = vsub.s32 %v411, %v4046
        %v4048 = vrot.slane %v4023, %v4047
        %v4049 = vlaneseq
        %v4050 = vshrl.u32 %v4049, 7
        %v4051 = vsub.s32 %v411, %v4050
        %v4052 = vrot.slane %v4026, %v4051
        %v4053 = vlaneseq
        %v4054 = vshrl.u32 %v4053, 7
        %v4055 = vsub.s32 %v411, %v4054
        %v4056 = vrot.slane %v4029, %v4055
        %v4057 = vlaneseq
        %v4058 = vshrl.u32 %v4057, 7
        %v4059 = vsub.s32 %v411, %v4058
        %v4060 = vrot.slane %v4032, %v4059
        %v4061 = vlaneseq
        %v4062 = vshrl.u32 %v4061, 7
        %v4063 = vsub.s32 %v411, %v4062
        %v4064 = vrot.slane %v4035, %v4063
        %v4065 = vlaneseq
        %v4066 = vshrl.u32 %v4065, 7
        %v4067 = vsub.s32 %v411, %v4066
        %v4068 = vrot.slane %v4038, %v4067
        %v4069 = vlaneseq
        %v4070 = vshrl.u32 %v4069, 7
        %v4071 = vsub.s32 %v411, %v4070
        %v4072 = vrot.slane %v4041, %v4071
        %v4073 = vlaneseq
        %v4074 = vshrl.u32 %v4073, 7
        %v4075 = vsub.s32 %v411, %v4074
        %v4076 = vrot.slane %v4044, %v4075
        %v4077 = vsel %vm845, %v4052, %v4048
        %v4078 = vsel %vm847, %v4056, %v4077
        %v4079 = vsel %vm849, %v4060, %v4078
        %v4080 = vsel %vm851, %v4064, %v4079
        %v4081 = vsel %vm853, %v4068, %v4080
        %v4082 = vsel %vm855, %v4072, %v4081
        %v4083 = vsel %vm857, %v4076, %v4082
        %v4085 = vsel %vm683, %v4083, -inf
        %4086 = vmax.xlane.f32.xlu0 %v4085
        %v4087 = vpop.xlane.xlu0 %4086
        %v4089 = vlaneseq
        %v4090 = vshrl.u32 %v4089, 7
        %v4091 = vsub.s32 0, %v4090
        %v4092 = vrot.slane %v4087, %v4091
        %v4093 = vlaneseq
        %v4094 = vshrl.u32 %v4093, 7
        %v4095 = vsub.s32 1, %v4094
        %v4096 = vrot.slane %v4087, %v4095
        %v4097 = vlaneseq
        %v4098 = vshrl.u32 %v4097, 7
        %v4099 = vsub.s32 2, %v4098
        %v4100 = vrot.slane %v4087, %v4099
        %v4101 = vlaneseq
        %v4102 = vshrl.u32 %v4101, 7
        %v4103 = vsub.s32 3, %v4102
        %v4104 = vrot.slane %v4087, %v4103
        %v4105 = vlaneseq
        %v4106 = vshrl.u32 %v4105, 7
        %v4107 = vsub.s32 4, %v4106
        %v4108 = vrot.slane %v4087, %v4107
        %v4109 = vlaneseq
        %v4110 = vshrl.u32 %v4109, 7
        %v4111 = vsub.s32 5, %v4110
        %v4112 = vrot.slane %v4087, %v4111
        %v4113 = vlaneseq
        %v4114 = vshrl.u32 %v4113, 7
        %v4115 = vsub.s32 6, %v4114
        %v4116 = vrot.slane %v4087, %v4115
        %v4117 = vlaneseq
        %v4118 = vshrl.u32 %v4117, 7
        %v4119 = vsub.s32 7, %v4118
        %v4120 = vrot.slane %v4087, %v4119
        %v4129 = vsub.f32 %v4005, %v4092
        %v4130 = vsub.f32 %v4006, %v4096
        %v4131 = vsub.f32 %v4007, %v4100
        %v4132 = vsub.f32 %v4008, %v4104
        %v4133 = vsub.f32 %v4009, %v4108
        %v4134 = vsub.f32 %v4010, %v4112
        %v4135 = vsub.f32 %v4011, %v4116
        %v4136 = vsub.f32 %v4012, %v4120
        %v4137 = vmul.f32 %v4129, 1.442695
        %v4138 = vpow.pop %v4137
        %v4139 = vmul.f32 %v4130, 1.442695
        %v4140 = vpow.pop %v4139
        %v4141 = vmul.f32 %v4131, 1.442695
        %v4142 = vpow.pop %v4141
        %v4143 = vmul.f32 %v4132, 1.442695
        %v4144 = vpow.pop %v4143
        %v4145 = vmul.f32 %v4133, 1.442695
        %v4146 = vpow.pop %v4145
        %v4147 = vmul.f32 %v4134, 1.442695
        %v4148 = vpow.pop %v4147
        %v4149 = vmul.f32 %v4135, 1.442695
        %v4150 = vpow.pop %v4149
        %v4151 = vmul.f32 %v4136, 1.442695
        %v4152 = vpow.pop %v4151
        %4161 = vset.pattern.permute.xlu0 0
        %4162 = vperm.xlu0 %4161, %v4138
        %v4163 = vpop.permute.xlu0 %4162
        %4164 = vset.pattern.permute.xlu0 0
        %4165 = vperm.xlu0 %4164, %v4140
        %v4166 = vpop.permute.xlu0 %4165
        %4167 = vset.pattern.permute.xlu0 0
        %4168 = vperm.xlu0 %4167, %v4142
        %v4169 = vpop.permute.xlu0 %4168
        %4170 = vset.pattern.permute.xlu0 0
        %4171 = vperm.xlu0 %4170, %v4144
        %v4172 = vpop.permute.xlu0 %4171
        %4173 = vset.pattern.permute.xlu0 0
        %4174 = vperm.xlu0 %4173, %v4146
        %v4175 = vpop.permute.xlu0 %4174
        %4176 = vset.pattern.permute.xlu0 0
        %4177 = vperm.xlu0 %4176, %v4148
        %v4178 = vpop.permute.xlu0 %4177
        %4179 = vset.pattern.permute.xlu0 0
        %4180 = vperm.xlu0 %4179, %v4150
        %v4181 = vpop.permute.xlu0 %4180
        %4182 = vset.pattern.permute.xlu0 0
        %4183 = vperm.xlu0 %4182, %v4152
        %v4184 = vpop.permute.xlu0 %4183
        %v4185 = vlaneseq
        %v4186 = vshrl.u32 %v4185, 7
        %v4187 = vsub.s32 %v411, %v4186
        %v4188 = vrot.slane %v4163, %v4187
        %v4189 = vlaneseq
        %v4190 = vshrl.u32 %v4189, 7
        %v4191 = vsub.s32 %v411, %v4190
        %v4192 = vrot.slane %v4166, %v4191
        %v4193 = vlaneseq
        %v4194 = vshrl.u32 %v4193, 7
        %v4195 = vsub.s32 %v411, %v4194
        %v4196 = vrot.slane %v4169, %v4195
        %v4197 = vlaneseq
        %v4198 = vshrl.u32 %v4197, 7
        %v4199 = vsub.s32 %v411, %v4198
        %v4200 = vrot.slane %v4172, %v4199
        %v4201 = vlaneseq
        %v4202 = vshrl.u32 %v4201, 7
        %v4203 = vsub.s32 %v411, %v4202
        %v4204 = vrot.slane %v4175, %v4203
        %v4205 = vlaneseq
        %v4206 = vshrl.u32 %v4205, 7
        %v4207 = vsub.s32 %v411, %v4206
        %v4208 = vrot.slane %v4178, %v4207
        %v4209 = vlaneseq
        %v4210 = vshrl.u32 %v4209, 7
        %v4211 = vsub.s32 %v411, %v4210
        %v4212 = vrot.slane %v4181, %v4211
        %v4213 = vlaneseq
        %v4214 = vshrl.u32 %v4213, 7
        %v4215 = vsub.s32 %v411, %v4214
        %v4216 = vrot.slane %v4184, %v4215
        %v4217 = vsel %vm845, %v4192, %v4188
        %v4218 = vsel %vm847, %v4196, %v4217
        %v4219 = vsel %vm849, %v4200, %v4218
        %v4220 = vsel %vm851, %v4204, %v4219
        %v4221 = vsel %vm853, %v4208, %v4220
        %v4222 = vsel %vm855, %v4212, %v4221
        %v4223 = vsel %vm857, %v4216, %v4222
        %v4225 = vsel %vm683, %v4223, 0.0
        %4226 = vadd.xlane.f32.xlu0 %v4225
        %v4227 = vpop.xlane.xlu0 %4226
        %v4228 = vrcp.pop %v4227
        %v4230 = vlaneseq
        %v4231 = vshrl.u32 %v4230, 7
        %v4232 = vsub.s32 0, %v4231
        %v4233 = vrot.slane %v4228, %v4232
        %v4234 = vlaneseq
        %v4235 = vshrl.u32 %v4234, 7
        %v4236 = vsub.s32 1, %v4235
        %v4237 = vrot.slane %v4228, %v4236
        %v4238 = vlaneseq
        %v4239 = vshrl.u32 %v4238, 7
        %v4240 = vsub.s32 2, %v4239
        %v4241 = vrot.slane %v4228, %v4240
        %v4242 = vlaneseq
        %v4243 = vshrl.u32 %v4242, 7
        %v4244 = vsub.s32 3, %v4243
        %v4245 = vrot.slane %v4228, %v4244
        %v4246 = vlaneseq
        %v4247 = vshrl.u32 %v4246, 7
        %v4248 = vsub.s32 4, %v4247
        %v4249 = vrot.slane %v4228, %v4248
        %v4250 = vlaneseq
        %v4251 = vshrl.u32 %v4250, 7
        %v4252 = vsub.s32 5, %v4251
        %v4253 = vrot.slane %v4228, %v4252
        %v4254 = vlaneseq
        %v4255 = vshrl.u32 %v4254, 7
        %v4256 = vsub.s32 6, %v4255
        %v4257 = vrot.slane %v4228, %v4256
        %v4258 = vlaneseq
        %v4259 = vshrl.u32 %v4258, 7
        %v4260 = vsub.s32 7, %v4259
        %v4261 = vrot.slane %v4228, %v4260
        %v4270 = vmul.f32 %v4138, %v4233
        %v4271 = vmul.f32 %v4140, %v4237
        %v4272 = vmul.f32 %v4142, %v4241
        %v4273 = vmul.f32 %v4144, %v4245
        %v4274 = vmul.f32 %v4146, %v4249
        %v4275 = vmul.f32 %v4148, %v4253
        %v4276 = vmul.f32 %v4150, %v4257
        %v4277 = vmul.f32 %v4152, %v4261
        %4279 = vset.pattern.permute.xlu0 0
        %4280 = vperm.xlu0 %4279, %v4270
        %v4281 = vpop.permute.xlu0 %4280
        %4284 = vset.pattern.permute.xlu0 0
        %4285 = vperm.xlu0 %4284, %v4271
        %v4286 = vpop.permute.xlu0 %4285
        %4289 = vset.pattern.permute.xlu0 0
        %4290 = vperm.xlu0 %4289, %v4272
        %v4291 = vpop.permute.xlu0 %4290
        %4294 = vset.pattern.permute.xlu0 0
        %4295 = vperm.xlu0 %4294, %v4273
        %v4296 = vpop.permute.xlu0 %4295
        %4299 = vset.pattern.permute.xlu0 0
        %4300 = vperm.xlu0 %4299, %v4274
        %v4301 = vpop.permute.xlu0 %4300
        %4304 = vset.pattern.permute.xlu0 0
        %4305 = vperm.xlu0 %4304, %v4275
        %v4306 = vpop.permute.xlu0 %4305
        %4309 = vset.pattern.permute.xlu0 0
        %4310 = vperm.xlu0 %4309, %v4276
        %v4311 = vpop.permute.xlu0 %4310
        %4314 = vset.pattern.permute.xlu0 0
        %4315 = vperm.xlu0 %4314, %v4277
        %v4316 = vpop.permute.xlu0 %4315
        %v4318 = vmul.f32 %v4281, %v3017
        %v4319 = vmul.f32 %v4286, %v3017
        %v4320 = vmul.f32 %v4291, %v3017
        %v4321 = vmul.f32 %v4296, %v3017
        %v4322 = vmul.f32 %v4301, %v3017
        %v4323 = vmul.f32 %v4306, %v3017
        %v4324 = vmul.f32 %v4311, %v3017
        %v4325 = vmul.f32 %v4316, %v3017
        %v4326 = vsel %vm2091, %v4318, 0.0
        %v4327 = vrot.slane %v4326, 4
        %v4328 = vadd.f32 %v4326, %v4327
        %v4329 = vrot.slane %v4328, 2
        %v4330 = vadd.f32 %v4328, %v4329
        %v4331 = vrot.slane %v4330, 1
        %v4332 = vadd.f32 %v4330, %v4331
        %v4333 = vsel %vm2091, %v4319, 0.0
        %v4334 = vrot.slane %v4333, 4
        %v4335 = vadd.f32 %v4333, %v4334
        %v4336 = vrot.slane %v4335, 2
        %v4337 = vadd.f32 %v4335, %v4336
        %v4338 = vrot.slane %v4337, 1
        %v4339 = vadd.f32 %v4337, %v4338
        %v4340 = vsel %vm2091, %v4320, 0.0
        %v4341 = vrot.slane %v4340, 4
        %v4342 = vadd.f32 %v4340, %v4341
        %v4343 = vrot.slane %v4342, 2
        %v4344 = vadd.f32 %v4342, %v4343
        %v4345 = vrot.slane %v4344, 1
        %v4346 = vadd.f32 %v4344, %v4345
        %v4347 = vsel %vm2091, %v4321, 0.0
        %v4348 = vrot.slane %v4347, 4
        %v4349 = vadd.f32 %v4347, %v4348
        %v4350 = vrot.slane %v4349, 2
        %v4351 = vadd.f32 %v4349, %v4350
        %v4352 = vrot.slane %v4351, 1
        %v4353 = vadd.f32 %v4351, %v4352
        %v4354 = vsel %vm2091, %v4322, 0.0
        %v4355 = vrot.slane %v4354, 4
        %v4356 = vadd.f32 %v4354, %v4355
        %v4357 = vrot.slane %v4356, 2
        %v4358 = vadd.f32 %v4356, %v4357
        %v4359 = vrot.slane %v4358, 1
        %v4360 = vadd.f32 %v4358, %v4359
        %v4361 = vsel %vm2091, %v4323, 0.0
        %v4362 = vrot.slane %v4361, 4
        %v4363 = vadd.f32 %v4361, %v4362
        %v4364 = vrot.slane %v4363, 2
        %v4365 = vadd.f32 %v4363, %v4364
        %v4366 = vrot.slane %v4365, 1
        %v4367 = vadd.f32 %v4365, %v4366
        %v4368 = vsel %vm2091, %v4324, 0.0
        %v4369 = vrot.slane %v4368, 4
        %v4370 = vadd.f32 %v4368, %v4369
        %v4371 = vrot.slane %v4370, 2
        %v4372 = vadd.f32 %v4370, %v4371
        %v4373 = vrot.slane %v4372, 1
        %v4374 = vadd.f32 %v4372, %v4373
        %v4375 = vsel %vm2091, %v4325, 0.0
        %v4376 = vrot.slane %v4375, 4
        %v4377 = vadd.f32 %v4375, %v4376
        %v4378 = vrot.slane %v4377, 2
        %v4379 = vadd.f32 %v4377, %v4378
        %v4380 = vrot.slane %v4379, 1
        %v4381 = vadd.f32 %v4379, %v4380
        %4382 = vrot.lane.b32.xlu0 %v3115, 104
        %v4383 = vpop.permute.xlu0 %4382
        %4384 = vrot.lane.b32.xlu0 %v3116, 104
        %v4385 = vpop.permute.xlu0 %4384
        %4386 = vrot.lane.b32.xlu0 %v3117, 104
        %v4387 = vpop.permute.xlu0 %4386
        %4388 = vrot.lane.b32.xlu0 %v3118, 104
        %v4389 = vpop.permute.xlu0 %4388
        %4390 = vrot.lane.b32.xlu0 %v3119, 104
        %v4391 = vpop.permute.xlu0 %4390
        %4392 = vrot.lane.b32.xlu0 %v3120, 104
        %v4393 = vpop.permute.xlu0 %4392
        %4394 = vrot.lane.b32.xlu0 %v3121, 104
        %v4395 = vpop.permute.xlu0 %4394
        %4396 = vrot.lane.b32.xlu0 %v3122, 104
        %v4397 = vpop.permute.xlu0 %4396
        %v4406 = vsel %vm683, %v4383, 0.0
        %4407 = vadd.xlane.f32.xlu0 %v4406
        %v4408 = vpop.xlane.xlu0 %4407
        %v4409 = vsel %vm683, %v4385, 0.0
        %4410 = vadd.xlane.f32.xlu0 %v4409
        %v4411 = vpop.xlane.xlu0 %4410
        %v4412 = vsel %vm683, %v4387, 0.0
        %4413 = vadd.xlane.f32.xlu0 %v4412
        %v4414 = vpop.xlane.xlu0 %4413
        %v4415 = vsel %vm683, %v4389, 0.0
        %4416 = vadd.xlane.f32.xlu0 %v4415
        %v4417 = vpop.xlane.xlu0 %4416
        %v4418 = vsel %vm683, %v4391, 0.0
        %4419 = vadd.xlane.f32.xlu0 %v4418
        %v4420 = vpop.xlane.xlu0 %4419
        %v4421 = vsel %vm683, %v4393, 0.0
        %4422 = vadd.xlane.f32.xlu0 %v4421
        %v4423 = vpop.xlane.xlu0 %4422
        %v4424 = vsel %vm683, %v4395, 0.0
        %4425 = vadd.xlane.f32.xlu0 %v4424
        %v4426 = vpop.xlane.xlu0 %4425
        %v4427 = vsel %vm683, %v4397, 0.0
        %4428 = vadd.xlane.f32.xlu0 %v4427
        %v4429 = vpop.xlane.xlu0 %4428
        %v4430 = vadd.f32 %v4408, %v2203
        %v4431 = vadd.f32 %v4411, %v2210
        %v4432 = vadd.f32 %v4414, %v2217
        %v4433 = vadd.f32 %v4417, %v2224
        %v4434 = vadd.f32 %v4420, %v2231
        %v4435 = vadd.f32 %v4423, %v2238
        %v4436 = vadd.f32 %v4426, %v2245
        %v4437 = vadd.f32 %v4429, %v2252
        %4446 = vset.pattern.permute.xlu0 0
        %4447 = vperm.xlu0 %4446, %v4430
        %v4448 = vpop.permute.xlu0 %4447
        %4449 = vset.pattern.permute.xlu0 0
        %4450 = vperm.xlu0 %4449, %v4431
        %v4451 = vpop.permute.xlu0 %4450
        %4452 = vset.pattern.permute.xlu0 0
        %4453 = vperm.xlu0 %4452, %v4432
        %v4454 = vpop.permute.xlu0 %4453
        %4455 = vset.pattern.permute.xlu0 0
        %4456 = vperm.xlu0 %4455, %v4433
        %v4457 = vpop.permute.xlu0 %4456
        %4458 = vset.pattern.permute.xlu0 0
        %4459 = vperm.xlu0 %4458, %v4434
        %v4460 = vpop.permute.xlu0 %4459
        %4461 = vset.pattern.permute.xlu0 0
        %4462 = vperm.xlu0 %4461, %v4435
        %v4463 = vpop.permute.xlu0 %4462
        %4464 = vset.pattern.permute.xlu0 0
        %4465 = vperm.xlu0 %4464, %v4436
        %v4466 = vpop.permute.xlu0 %4465
        %4467 = vset.pattern.permute.xlu0 0
        %4468 = vperm.xlu0 %4467, %v4437
        %v4469 = vpop.permute.xlu0 %4468
        %v4470 = vlaneseq
        %v4471 = vshrl.u32 %v4470, 7
        %v4472 = vsub.s32 %v411, %v4471
        %v4473 = vrot.slane %v4448, %v4472
        %v4474 = vlaneseq
        %v4475 = vshrl.u32 %v4474, 7
        %v4476 = vsub.s32 %v411, %v4475
        %v4477 = vrot.slane %v4451, %v4476
        %v4478 = vlaneseq
        %v4479 = vshrl.u32 %v4478, 7
        %v4480 = vsub.s32 %v411, %v4479
        %v4481 = vrot.slane %v4454, %v4480
        %v4482 = vlaneseq
        %v4483 = vshrl.u32 %v4482, 7
        %v4484 = vsub.s32 %v411, %v4483
        %v4485 = vrot.slane %v4457, %v4484
        %v4486 = vlaneseq
        %v4487 = vshrl.u32 %v4486, 7
        %v4488 = vsub.s32 %v411, %v4487
        %v4489 = vrot.slane %v4460, %v4488
        %v4490 = vlaneseq
        %v4491 = vshrl.u32 %v4490, 7
        %v4492 = vsub.s32 %v411, %v4491
        %v4493 = vrot.slane %v4463, %v4492
        %v4494 = vlaneseq
        %v4495 = vshrl.u32 %v4494, 7
        %v4496 = vsub.s32 %v411, %v4495
        %v4497 = vrot.slane %v4466, %v4496
        %v4498 = vlaneseq
        %v4499 = vshrl.u32 %v4498, 7
        %v4500 = vsub.s32 %v411, %v4499
        %v4501 = vrot.slane %v4469, %v4500
        %v4502 = vsel %vm845, %v4477, %v4473
        %v4503 = vsel %vm847, %v4481, %v4502
        %v4504 = vsel %vm849, %v4485, %v4503
        %v4505 = vsel %vm851, %v4489, %v4504
        %v4506 = vsel %vm853, %v4493, %v4505
        %v4507 = vsel %vm855, %v4497, %v4506
        %v4508 = vsel %vm857, %v4501, %v4507
        %v4510 = vsel %vm683, %v4508, -inf
        %4511 = vmax.xlane.f32.xlu0 %v4510
        %v4512 = vpop.xlane.xlu0 %4511
        %v4514 = vlaneseq
        %v4515 = vshrl.u32 %v4514, 7
        %v4516 = vsub.s32 0, %v4515
        %v4517 = vrot.slane %v4512, %v4516
        %v4518 = vlaneseq
        %v4519 = vshrl.u32 %v4518, 7
        %v4520 = vsub.s32 1, %v4519
        %v4521 = vrot.slane %v4512, %v4520
        %v4522 = vlaneseq
        %v4523 = vshrl.u32 %v4522, 7
        %v4524 = vsub.s32 2, %v4523
        %v4525 = vrot.slane %v4512, %v4524
        %v4526 = vlaneseq
        %v4527 = vshrl.u32 %v4526, 7
        %v4528 = vsub.s32 3, %v4527
        %v4529 = vrot.slane %v4512, %v4528
        %v4530 = vlaneseq
        %v4531 = vshrl.u32 %v4530, 7
        %v4532 = vsub.s32 4, %v4531
        %v4533 = vrot.slane %v4512, %v4532
        %v4534 = vlaneseq
        %v4535 = vshrl.u32 %v4534, 7
        %v4536 = vsub.s32 5, %v4535
        %v4537 = vrot.slane %v4512, %v4536
        %v4538 = vlaneseq
        %v4539 = vshrl.u32 %v4538, 7
        %v4540 = vsub.s32 6, %v4539
        %v4541 = vrot.slane %v4512, %v4540
        %v4542 = vlaneseq
        %v4543 = vshrl.u32 %v4542, 7
        %v4544 = vsub.s32 7, %v4543
        %v4545 = vrot.slane %v4512, %v4544
        %v4554 = vsub.f32 %v4430, %v4517
        %v4555 = vsub.f32 %v4431, %v4521
        %v4556 = vsub.f32 %v4432, %v4525
        %v4557 = vsub.f32 %v4433, %v4529
        %v4558 = vsub.f32 %v4434, %v4533
        %v4559 = vsub.f32 %v4435, %v4537
        %v4560 = vsub.f32 %v4436, %v4541
        %v4561 = vsub.f32 %v4437, %v4545
        %v4562 = vmul.f32 %v4554, 1.442695
        %v4563 = vpow.pop %v4562
        %v4564 = vmul.f32 %v4555, 1.442695
        %v4565 = vpow.pop %v4564
        %v4566 = vmul.f32 %v4556, 1.442695
        %v4567 = vpow.pop %v4566
        %v4568 = vmul.f32 %v4557, 1.442695
        %v4569 = vpow.pop %v4568
        %v4570 = vmul.f32 %v4558, 1.442695
        %v4571 = vpow.pop %v4570
        %v4572 = vmul.f32 %v4559, 1.442695
        %v4573 = vpow.pop %v4572
        %v4574 = vmul.f32 %v4560, 1.442695
        %v4575 = vpow.pop %v4574
        %v4576 = vmul.f32 %v4561, 1.442695
        %v4577 = vpow.pop %v4576
        %4586 = vset.pattern.permute.xlu0 0
        %4587 = vperm.xlu0 %4586, %v4563
        %v4588 = vpop.permute.xlu0 %4587
        %4589 = vset.pattern.permute.xlu0 0
        %4590 = vperm.xlu0 %4589, %v4565
        %v4591 = vpop.permute.xlu0 %4590
        %4592 = vset.pattern.permute.xlu0 0
        %4593 = vperm.xlu0 %4592, %v4567
        %v4594 = vpop.permute.xlu0 %4593
        %4595 = vset.pattern.permute.xlu0 0
        %4596 = vperm.xlu0 %4595, %v4569
        %v4597 = vpop.permute.xlu0 %4596
        %4598 = vset.pattern.permute.xlu0 0
        %4599 = vperm.xlu0 %4598, %v4571
        %v4600 = vpop.permute.xlu0 %4599
        %4601 = vset.pattern.permute.xlu0 0
        %4602 = vperm.xlu0 %4601, %v4573
        %v4603 = vpop.permute.xlu0 %4602
        %4604 = vset.pattern.permute.xlu0 0
        %4605 = vperm.xlu0 %4604, %v4575
        %v4606 = vpop.permute.xlu0 %4605
        %4607 = vset.pattern.permute.xlu0 0
        %4608 = vperm.xlu0 %4607, %v4577
        %v4609 = vpop.permute.xlu0 %4608
        %v4610 = vlaneseq
        %v4611 = vshrl.u32 %v4610, 7
        %v4612 = vsub.s32 %v411, %v4611
        %v4613 = vrot.slane %v4588, %v4612
        %v4614 = vlaneseq
        %v4615 = vshrl.u32 %v4614, 7
        %v4616 = vsub.s32 %v411, %v4615
        %v4617 = vrot.slane %v4591, %v4616
        %v4618 = vlaneseq
        %v4619 = vshrl.u32 %v4618, 7
        %v4620 = vsub.s32 %v411, %v4619
        %v4621 = vrot.slane %v4594, %v4620
        %v4622 = vlaneseq
        %v4623 = vshrl.u32 %v4622, 7
        %v4624 = vsub.s32 %v411, %v4623
        %v4625 = vrot.slane %v4597, %v4624
        %v4626 = vlaneseq
        %v4627 = vshrl.u32 %v4626, 7
        %v4628 = vsub.s32 %v411, %v4627
        %v4629 = vrot.slane %v4600, %v4628
        %v4630 = vlaneseq
        %v4631 = vshrl.u32 %v4630, 7
        %v4632 = vsub.s32 %v411, %v4631
        %v4633 = vrot.slane %v4603, %v4632
        %v4634 = vlaneseq
        %v4635 = vshrl.u32 %v4634, 7
        %v4636 = vsub.s32 %v411, %v4635
        %v4637 = vrot.slane %v4606, %v4636
        %v4638 = vlaneseq
        %v4639 = vshrl.u32 %v4638, 7
        %v4640 = vsub.s32 %v411, %v4639
        %v4641 = vrot.slane %v4609, %v4640
        %v4642 = vsel %vm845, %v4617, %v4613
        %v4643 = vsel %vm847, %v4621, %v4642
        %v4644 = vsel %vm849, %v4625, %v4643
        %v4645 = vsel %vm851, %v4629, %v4644
        %v4646 = vsel %vm853, %v4633, %v4645
        %v4647 = vsel %vm855, %v4637, %v4646
        %v4648 = vsel %vm857, %v4641, %v4647
        %v4650 = vsel %vm683, %v4648, 0.0
        %4651 = vadd.xlane.f32.xlu0 %v4650
        %v4652 = vpop.xlane.xlu0 %4651
        %v4653 = vrcp.pop %v4652
        %v4655 = vlaneseq
        %v4656 = vshrl.u32 %v4655, 7
        %v4657 = vsub.s32 0, %v4656
        %v4658 = vrot.slane %v4653, %v4657
        %v4659 = vlaneseq
        %v4660 = vshrl.u32 %v4659, 7
        %v4661 = vsub.s32 1, %v4660
        %v4662 = vrot.slane %v4653, %v4661
        %v4663 = vlaneseq
        %v4664 = vshrl.u32 %v4663, 7
        %v4665 = vsub.s32 2, %v4664
        %v4666 = vrot.slane %v4653, %v4665
        %v4667 = vlaneseq
        %v4668 = vshrl.u32 %v4667, 7
        %v4669 = vsub.s32 3, %v4668
        %v4670 = vrot.slane %v4653, %v4669
        %v4671 = vlaneseq
        %v4672 = vshrl.u32 %v4671, 7
        %v4673 = vsub.s32 4, %v4672
        %v4674 = vrot.slane %v4653, %v4673
        %v4675 = vlaneseq
        %v4676 = vshrl.u32 %v4675, 7
        %v4677 = vsub.s32 5, %v4676
        %v4678 = vrot.slane %v4653, %v4677
        %v4679 = vlaneseq
        %v4680 = vshrl.u32 %v4679, 7
        %v4681 = vsub.s32 6, %v4680
        %v4682 = vrot.slane %v4653, %v4681
        %v4683 = vlaneseq
        %v4684 = vshrl.u32 %v4683, 7
        %v4685 = vsub.s32 7, %v4684
        %v4686 = vrot.slane %v4653, %v4685
        %v4695 = vmul.f32 %v4563, %v4658
        %v4696 = vmul.f32 %v4565, %v4662
        %v4697 = vmul.f32 %v4567, %v4666
        %v4698 = vmul.f32 %v4569, %v4670
        %v4699 = vmul.f32 %v4571, %v4674
        %v4700 = vmul.f32 %v4573, %v4678
        %v4701 = vmul.f32 %v4575, %v4682
        %v4702 = vmul.f32 %v4577, %v4686
        %4704 = vset.pattern.permute.xlu0 0
        %4705 = vperm.xlu0 %4704, %v4695
        %v4706 = vpop.permute.xlu0 %4705
        %4709 = vset.pattern.permute.xlu0 0
        %4710 = vperm.xlu0 %4709, %v4696
        %v4711 = vpop.permute.xlu0 %4710
        %4714 = vset.pattern.permute.xlu0 0
        %4715 = vperm.xlu0 %4714, %v4697
        %v4716 = vpop.permute.xlu0 %4715
        %4719 = vset.pattern.permute.xlu0 0
        %4720 = vperm.xlu0 %4719, %v4698
        %v4721 = vpop.permute.xlu0 %4720
        %4724 = vset.pattern.permute.xlu0 0
        %4725 = vperm.xlu0 %4724, %v4699
        %v4726 = vpop.permute.xlu0 %4725
        %4729 = vset.pattern.permute.xlu0 0
        %4730 = vperm.xlu0 %4729, %v4700
        %v4731 = vpop.permute.xlu0 %4730
        %4734 = vset.pattern.permute.xlu0 0
        %4735 = vperm.xlu0 %4734, %v4701
        %v4736 = vpop.permute.xlu0 %4735
        %4739 = vset.pattern.permute.xlu0 0
        %4740 = vperm.xlu0 %4739, %v4702
        %v4741 = vpop.permute.xlu0 %4740
        %v4743 = vmul.f32 %v4706, %v3017
        %v4744 = vmul.f32 %v4711, %v3017
        %v4745 = vmul.f32 %v4716, %v3017
        %v4746 = vmul.f32 %v4721, %v3017
        %v4747 = vmul.f32 %v4726, %v3017
        %v4748 = vmul.f32 %v4731, %v3017
        %v4749 = vmul.f32 %v4736, %v3017
        %v4750 = vmul.f32 %v4741, %v3017
        %v4751 = vsel %vm2582, %v4743, 0.0
        %v4752 = vrot.slane %v4751, 4
        %v4753 = vadd.f32 %v4751, %v4752
        %v4754 = vrot.slane %v4753, 2
        %v4755 = vadd.f32 %v4753, %v4754
        %v4756 = vrot.slane %v4755, 1
        %v4757 = vadd.f32 %v4755, %v4756
        %v4758 = vsel %vm2582, %v4744, 0.0
        %v4759 = vrot.slane %v4758, 4
        %v4760 = vadd.f32 %v4758, %v4759
        %v4761 = vrot.slane %v4760, 2
        %v4762 = vadd.f32 %v4760, %v4761
        %v4763 = vrot.slane %v4762, 1
        %v4764 = vadd.f32 %v4762, %v4763
        %v4765 = vsel %vm2582, %v4745, 0.0
        %v4766 = vrot.slane %v4765, 4
        %v4767 = vadd.f32 %v4765, %v4766
        %v4768 = vrot.slane %v4767, 2
        %v4769 = vadd.f32 %v4767, %v4768
        %v4770 = vrot.slane %v4769, 1
        %v4771 = vadd.f32 %v4769, %v4770
        %v4772 = vsel %vm2582, %v4746, 0.0
        %v4773 = vrot.slane %v4772, 4
        %v4774 = vadd.f32 %v4772, %v4773
        %v4775 = vrot.slane %v4774, 2
        %v4776 = vadd.f32 %v4774, %v4775
        %v4777 = vrot.slane %v4776, 1
        %v4778 = vadd.f32 %v4776, %v4777
        %v4779 = vsel %vm2582, %v4747, 0.0
        %v4780 = vrot.slane %v4779, 4
        %v4781 = vadd.f32 %v4779, %v4780
        %v4782 = vrot.slane %v4781, 2
        %v4783 = vadd.f32 %v4781, %v4782
        %v4784 = vrot.slane %v4783, 1
        %v4785 = vadd.f32 %v4783, %v4784
        %v4786 = vsel %vm2582, %v4748, 0.0
        %v4787 = vrot.slane %v4786, 4
        %v4788 = vadd.f32 %v4786, %v4787
        %v4789 = vrot.slane %v4788, 2
        %v4790 = vadd.f32 %v4788, %v4789
        %v4791 = vrot.slane %v4790, 1
        %v4792 = vadd.f32 %v4790, %v4791
        %v4793 = vsel %vm2582, %v4749, 0.0
        %v4794 = vrot.slane %v4793, 4
        %v4795 = vadd.f32 %v4793, %v4794
        %v4796 = vrot.slane %v4795, 2
        %v4797 = vadd.f32 %v4795, %v4796
        %v4798 = vrot.slane %v4797, 1
        %v4799 = vadd.f32 %v4797, %v4798
        %v4800 = vsel %vm2582, %v4750, 0.0
        %v4801 = vrot.slane %v4800, 4
        %v4802 = vadd.f32 %v4800, %v4801
        %v4803 = vrot.slane %v4802, 2
        %v4804 = vadd.f32 %v4802, %v4803
        %v4805 = vrot.slane %v4804, 1
        %v4806 = vadd.f32 %v4804, %v4805
        %v4815 = vsel %vm845, %v3481, %v3474
        %v4816 = vsel %vm847, %v3488, %v4815
        %v4817 = vsel %vm849, %v3495, %v4816
        %v4818 = vsel %vm851, %v3502, %v4817
        %v4819 = vsel %vm853, %v3509, %v4818
        %v4820 = vsel %vm855, %v3516, %v4819
        %v4821 = vsel %vm857, %v3523, %v4820
        %4822 = vrot.lane.b32.xlu0 %v4821, 64
        %v4823 = vpop.permute.xlu0 %4822
        %v4833 = vsel %vm845, %v3914, %v3907
        %v4834 = vsel %vm847, %v3921, %v4833
        %v4835 = vsel %vm849, %v3928, %v4834
        %v4836 = vsel %vm851, %v3935, %v4835
        %v4837 = vsel %vm853, %v3942, %v4836
        %v4838 = vsel %vm855, %v3949, %v4837
        %v4839 = vsel %vm857, %v3956, %v4838
        %4840 = vrot.lane.b32.xlu0 %v4839, 64
        %v4841 = vpop.permute.xlu0 %4840
        %v4851 = vsel %vm845, %v4339, %v4332
        %v4852 = vsel %vm847, %v4346, %v4851
        %v4853 = vsel %vm849, %v4353, %v4852
        %v4854 = vsel %vm851, %v4360, %v4853
        %v4855 = vsel %vm853, %v4367, %v4854
        %v4856 = vsel %vm855, %v4374, %v4855
        %v4857 = vsel %vm857, %v4381, %v4856
        %4858 = vrot.lane.b32.xlu0 %v4857, 64
        %v4859 = vpop.permute.xlu0 %4858
        %v4869 = vsel %vm845, %v4764, %v4757
        %v4870 = vsel %vm847, %v4771, %v4869
        %v4871 = vsel %vm849, %v4778, %v4870
        %v4872 = vsel %vm851, %v4785, %v4871
        %v4873 = vsel %vm853, %v4792, %v4872
        %v4874 = vsel %vm855, %v4799, %v4873
        %v4875 = vsel %vm857, %v4806, %v4874
        %4876 = vrot.lane.b32.xlu0 %v4875, 64
        %v4877 = vpop.permute.xlu0 %4876
        %v4879 = vsel %vm683, %v4823, %v4841
        %v4880 = vsel %vm2712, %v4879, %v4859
        %v4881 = vsel %vm2714, %v4880, %v4877
        %v4882 = vpack.c.bf16 %v4881, %v4881
        %s4883 = scalar_lea.vmem %s5, 16
        %v4884 = vld [vmem:[%s4883] sm:$0xf]
        %v4885 = vld [vmem:[%s4883 + $0x4] sm:$0xf]
        %v4886 = vld [vmem:[%s4883 + $0x8] sm:$0xf]
        %v4887 = vld [vmem:[%s4883 + $0xc] sm:$0xf]
        %v4892 = vunpack.c.l.b16 %v4884
        %v4893 = vunpack.c.l.b16 %v4885
        %v4894 = vunpack.c.l.b16 %v4886
        %v4895 = vunpack.c.l.b16 %v4887
        %v4896 = vpack.c.b16 %v4893, %v4892
        %v4897 = vpack.c.b16 %v4895, %v4894
        %v4901 = vsel %vm506, %v4882, 0
        %4903 = vmatprep.subr.bf16.mxu0 0
        %4904 = vmatpush1.bf16.msra.mxu0 0
        %4905 = vmatprep.subr.bf16.mxu0 0
        %4906 = vmatpush1.bf16.msra.mxu0 0
        %4907 = vmatprep.subr.bf16.mxu0 0
        %4908 = vmatpush1.bf16.msra.mxu0 0
        %4909 = vmatprep.subr.bf16.mxu0 0
        %4910 = vmatpush1.bf16.msra.mxu0 0
        %4911 = vmatprep.subr.bf16.mxu0 0
        %4912 = vmatpush1.bf16.msra.mxu0 0
        %4913 = vmatprep.subr.bf16.mxu0 0
        %4914 = vmatpush1.bf16.msra.mxu0 0
        %4915 = vmatprep.subr.bf16.mxu0 0
        %4916 = vmatpush1.bf16.msra.mxu0 %v4897
        %4917 = vmatprep.subr.bf16.mxu0 0
        %4918 = vmatpush1.bf16.msra.mxu0 %v4896
        %4919 = vmatprep.subr.bf16.mxu0 0
        %4920 = vmatpush2.bf16.msra.mxu0 0
        %4921 = vmatprep.subr.bf16.mxu0 0
        %4922 = vmatpush2.bf16.msra.mxu0 0
        %4923 = vmatprep.subr.bf16.mxu0 0
        %4924 = vmatpush2.bf16.msra.mxu0 0
        %4925 = vmatprep.subr.bf16.mxu0 0
        %4926 = vmatpush2.bf16.msra.mxu0 0
        %4927 = vmatprep.subr.bf16.mxu0 0
        %4928 = vmatpush2.bf16.msra.mxu0 0
        %4929 = vmatprep.subr.bf16.mxu0 0
        %4930 = vmatpush2.bf16.msra.mxu0 0
        %4931 = vmatprep.subr.bf16.mxu0 0
        %4932 = vmatpush2.bf16.msra.mxu0 0
        %4933 = vmatprep.subr.bf16.mxu0 0
        %4934 = vmatpush2.bf16.msra.mxu0 0
        %4935 = vmatprep.mubr.bf16.mxu0 0
        %4936 = vmatmul.mubr.bf16.gmra.mxu0 %v4901
        %v4937 = vpop.f32.mrf.mxu0
        %v4938 = vadd.f32 0.0, %v4937
        %v4939 = vpop.f32.mrf.mxu0
        %v4940 = vpop.f32.mrf.mxu0
        %v4941 = vpop.f32.mrf.mxu0
        %4942 = vdwg.mxu0
        %v4943 = vadd.f32 %v2943, %v4938
        %s4944 = scalar_lea.vmem %s6, 1
        %v4945 = vld [vmem:[%s4944] sm:$0x1]
        %v4946 = vmul.f32 %v4943, %v4943
        %v4947 = vsel %vm506, %v4946, 0.0
        %4948 = vadd.xlane.f32.xlu0 %v4947
        %v4949 = vpop.xlane.xlu0 %4948
        %v4950 = vmul.f32 %v4949, %v510
        %v4951 = vadd.f32 %v4950, 1e-06
        %v4952 = vrsqrt.pop %v4951
        %v4953 = vmul.f32 %v4943, %v4952
        %v4955 = vlaneseq
        %v4956 = vshrl.u32 %v4955, 7
        %v4957 = vsub.s32 0, %v4956
        %v4958 = vrot.slane %v4945, %v4957
        %v4960 = vmul.f32 %v4953, %v4958
        %v4961 = vpack.c.bf16 %v4960, %v4960
        %s4962 = scalar_lea.vmem %s7, 16
        %v4963 = vld [vmem:[%s4962] sm:$0xf]
        %v4964 = vld [vmem:[%s4962 + $0x4] sm:$0xf]
        %v4965 = vld [vmem:[%s4962 + $0x8] sm:$0xf]
        %v4966 = vld [vmem:[%s4962 + $0xc] sm:$0xf]
        %v4971 = vunpack.c.l.b16 %v4963
        %v4972 = vunpack.c.l.b16 %v4964
        %v4973 = vunpack.c.l.b16 %v4965
        %v4974 = vunpack.c.l.b16 %v4966
        %v4975 = vpack.c.b16 %v4972, %v4971
        %v4976 = vpack.c.b16 %v4974, %v4973
        %v4980 = vsel %vm506, %v4961, 0
        %4982 = vmatprep.subr.bf16.mxu0 0
        %4983 = vmatpush1.bf16.msra.mxu0 0
        %4984 = vmatprep.subr.bf16.mxu0 0
        %4985 = vmatpush1.bf16.msra.mxu0 0
        %4986 = vmatprep.subr.bf16.mxu0 0
        %4987 = vmatpush1.bf16.msra.mxu0 0
        %4988 = vmatprep.subr.bf16.mxu0 0
        %4989 = vmatpush1.bf16.msra.mxu0 0
        %4990 = vmatprep.subr.bf16.mxu0 0
        %4991 = vmatpush1.bf16.msra.mxu0 0
        %4992 = vmatprep.subr.bf16.mxu0 0
        %4993 = vmatpush1.bf16.msra.mxu0 0
        %4994 = vmatprep.subr.bf16.mxu0 0
        %4995 = vmatpush1.bf16.msra.mxu0 %v4976
        %4996 = vmatprep.subr.bf16.mxu0 0
        %4997 = vmatpush1.bf16.msra.mxu0 %v4975
        %4998 = vmatprep.subr.bf16.mxu0 0
        %4999 = vmatpush2.bf16.msra.mxu0 0
        %5000 = vmatprep.subr.bf16.mxu0 0
        %5001 = vmatpush2.bf16.msra.mxu0 0
        %5002 = vmatprep.subr.bf16.mxu0 0
        %5003 = vmatpush2.bf16.msra.mxu0 0
        %5004 = vmatprep.subr.bf16.mxu0 0
        %5005 = vmatpush2.bf16.msra.mxu0 0
        %5006 = vmatprep.subr.bf16.mxu0 0
        %5007 = vmatpush2.bf16.msra.mxu0 0
        %5008 = vmatprep.subr.bf16.mxu0 0
        %5009 = vmatpush2.bf16.msra.mxu0 0
        %5010 = vmatprep.subr.bf16.mxu0 0
        %5011 = vmatpush2.bf16.msra.mxu0 0
        %5012 = vmatprep.subr.bf16.mxu0 0
        %5013 = vmatpush2.bf16.msra.mxu0 0
        %5014 = vmatprep.mubr.bf16.mxu0 0
        %5015 = vmatmul.mubr.bf16.gmra.mxu0 %v4980
        %v5016 = vpop.f32.mrf.mxu0
        %v5017 = vadd.f32 0.0, %v5016
        %v5018 = vpop.f32.mrf.mxu0
        %v5019 = vpop.f32.mrf.mxu0
        %v5020 = vpop.f32.mrf.mxu0
        %5021 = vdwg.mxu0
        %v5022 = vmul.f32 %v5017, 0.5
        %v5023 = vmul.f32 %v5017, 0.044715
        %v5024 = vmul.f32 %v5023, %v5017
        %v5025 = vmul.f32 %v5024, %v5017
        %v5026 = vadd.f32 %v5017, %v5025
        %v5027 = vmul.f32 %v5026, 0.7978846
        %v5028 = vtanh.pop %v5027
        %v5029 = vadd.f32 %v5028, 1.0
        %v5030 = vmul.f32 %v5022, %v5029
        %5032 = vrot.lane.b32.xlu0 %v5017, 64
        %v5033 = vpop.permute.xlu0 %5032
        %v5035 = vmul.f32 %v5030, %v5033
        %v5036 = vpack.c.bf16 %v5035, %v5035
        %s5037 = scalar_lea.vmem %s8, 32
        %v5038 = vld [vmem:[%s5037] sm:$0xf]
        %v5039 = vld [vmem:[%s5037 + $0x4] sm:$0xf]
        %v5040 = vld [vmem:[%s5037 + $0x8] sm:$0xf]
        %v5041 = vld [vmem:[%s5037 + $0xc] sm:$0xf]
        %v5042 = vld [vmem:[%s5037 + $0x10] sm:$0xf]
        %v5043 = vld [vmem:[%s5037 + $0x14] sm:$0xf]
        %v5044 = vld [vmem:[%s5037 + $0x18] sm:$0xf]
        %v5045 = vld [vmem:[%s5037 + $0x1c] sm:$0xf]
        %v5054 = vunpack.c.l.b16 %v5038
        %v5055 = vunpack.c.l.b16 %v5039
        %v5056 = vunpack.c.l.b16 %v5040
        %v5057 = vunpack.c.l.b16 %v5041
        %v5058 = vunpack.c.l.b16 %v5042
        %v5059 = vunpack.c.l.b16 %v5043
        %v5060 = vunpack.c.l.b16 %v5044
        %v5061 = vunpack.c.l.b16 %v5045
        %v5062 = vpack.c.b16 %v5055, %v5054
        %v5063 = vpack.c.b16 %v5057, %v5056
        %v5064 = vpack.c.b16 %v5059, %v5058
        %v5065 = vpack.c.b16 %v5061, %v5060
        %v5071 = vsel %vm426, %v5036, 0
        %5073 = vmatprep.subr.bf16.mxu0 0
        %5074 = vmatpush1.bf16.msra.mxu0 0
        %5075 = vmatprep.subr.bf16.mxu0 0
        %5076 = vmatpush1.bf16.msra.mxu0 0
        %5077 = vmatprep.subr.bf16.mxu0 0
        %5078 = vmatpush1.bf16.msra.mxu0 0
        %5079 = vmatprep.subr.bf16.mxu0 0
        %5080 = vmatpush1.bf16.msra.mxu0 0
        %5081 = vmatprep.subr.bf16.mxu0 0
        %5082 = vmatpush1.bf16.msra.mxu0 %v5065
        %5083 = vmatprep.subr.bf16.mxu0 0
        %5084 = vmatpush1.bf16.msra.mxu0 %v5064
        %5085 = vmatprep.subr.bf16.mxu0 0
        %5086 = vmatpush1.bf16.msra.mxu0 %v5063
        %5087 = vmatprep.subr.bf16.mxu0 0
        %5088 = vmatpush1.bf16.msra.mxu0 %v5062
        %5089 = vmatprep.subr.bf16.mxu0 0
        %5090 = vmatpush2.bf16.msra.mxu0 0
        %5091 = vmatprep.subr.bf16.mxu0 0
        %5092 = vmatpush2.bf16.msra.mxu0 0
        %5093 = vmatprep.subr.bf16.mxu0 0
        %5094 = vmatpush2.bf16.msra.mxu0 0
        %5095 = vmatprep.subr.bf16.mxu0 0
        %5096 = vmatpush2.bf16.msra.mxu0 0
        %5097 = vmatprep.subr.bf16.mxu0 0
        %5098 = vmatpush2.bf16.msra.mxu0 0
        %5099 = vmatprep.subr.bf16.mxu0 0
        %5100 = vmatpush2.bf16.msra.mxu0 0
        %5101 = vmatprep.subr.bf16.mxu0 0
        %5102 = vmatpush2.bf16.msra.mxu0 0
        %5103 = vmatprep.subr.bf16.mxu0 0
        %5104 = vmatpush2.bf16.msra.mxu0 0
        %5105 = vmatprep.mubr.bf16.mxu0 0
        %5106 = vmatmul.mubr.bf16.gmra.mxu0 %v5071
        %v5107 = vpop.f32.mrf.mxu0
        %v5108 = vadd.f32 0.0, %v5107
        %v5109 = vpop.f32.mrf.mxu0
        %v5110 = vpop.f32.mrf.mxu0
        %v5111 = vpop.f32.mrf.mxu0
        %5112 = vdwg.mxu0
        %v5113 = vadd.f32 %v4943, %v5108
        %v5114 = vld [vmem:[%s9] sm:$0x1]
        %v5115 = vmul.f32 %v5113, %v5113
        %vm5116 = vcmask 253952
        %v5117 = vsel %vm5116, %v5115, 0.0
        %5118 = vadd.xlane.f32.xlu0 %v5117
        %v5119 = vpop.xlane.xlu0 %5118
        %v5120 = vmul.f32 %v5119, %v510
        %v5121 = vadd.f32 %v5120, 1e-06
        %v5122 = vrsqrt.pop %v5121
        %v5123 = vmul.f32 %v5113, %v5122
        %v5124 = vmul.f32 %v5123, %v5114
        %v5125 = vpack.c.bf16 %v5124, %v5124
        %v5126 = vld [vmem:[%s10] sm:$0xf]
        %v5127 = vld [vmem:[%s10 + $0x4] sm:$0xf]
        %v5128 = vld [vmem:[%s10 + $0x8] sm:$0xf]
        %v5129 = vld [vmem:[%s10 + $0xc] sm:$0xf]
        %v5130 = vld [vmem:[%s11] sm:$0x1]
        %v5135 = vunpack.c.l.b16 %v5126
        %v5136 = vunpack.c.l.b16 %v5127
        %v5137 = vunpack.c.l.b16 %v5128
        %v5138 = vunpack.c.l.b16 %v5129
        %v5139 = vpack.c.b16 %v5136, %v5135
        %v5140 = vpack.c.b16 %v5138, %v5137
        %v5144 = vsel %vm506, %v5125, 0
        %5146 = vmatprep.subr.bf16.mxu0 0
        %5147 = vmatpush1.bf16.msra.mxu0 0
        %5148 = vmatprep.subr.bf16.mxu0 0
        %5149 = vmatpush1.bf16.msra.mxu0 0
        %5150 = vmatprep.subr.bf16.mxu0 0
        %5151 = vmatpush1.bf16.msra.mxu0 0
        %5152 = vmatprep.subr.bf16.mxu0 0
        %5153 = vmatpush1.bf16.msra.mxu0 0
        %5154 = vmatprep.subr.bf16.mxu0 0
        %5155 = vmatpush1.bf16.msra.mxu0 0
        %5156 = vmatprep.subr.bf16.mxu0 0
        %5157 = vmatpush1.bf16.msra.mxu0 0
        %5158 = vmatprep.subr.bf16.mxu0 0
        %5159 = vmatpush1.bf16.msra.mxu0 %v5140
        %5160 = vmatprep.subr.bf16.mxu0 0
        %5161 = vmatpush1.bf16.msra.mxu0 %v5139
        %5162 = vmatprep.subr.bf16.mxu0 0
        %5163 = vmatpush2.bf16.msra.mxu0 0
        %5164 = vmatprep.subr.bf16.mxu0 0
        %5165 = vmatpush2.bf16.msra.mxu0 0
        %5166 = vmatprep.subr.bf16.mxu0 0
        %5167 = vmatpush2.bf16.msra.mxu0 0
        %5168 = vmatprep.subr.bf16.mxu0 0
        %5169 = vmatpush2.bf16.msra.mxu0 0
        %5170 = vmatprep.subr.bf16.mxu0 0
        %5171 = vmatpush2.bf16.msra.mxu0 0
        %5172 = vmatprep.subr.bf16.mxu0 0
        %5173 = vmatpush2.bf16.msra.mxu0 0
        %5174 = vmatprep.subr.bf16.mxu0 0
        %5175 = vmatpush2.bf16.msra.mxu0 0
        %5176 = vmatprep.subr.bf16.mxu0 0
        %5177 = vmatpush2.bf16.msra.mxu0 0
        %5178 = vmatprep.mubr.bf16.mxu0 0
        %5179 = vmatmul.mubr.bf16.gmra.mxu0 %v5144
        %v5180 = vpop.f32.mrf.mxu0
        %v5181 = vadd.f32 %v5130, %v5180
        %v5182 = vpop.f32.mrf.mxu0
        %v5183 = vpop.f32.mrf.mxu0
        %v5184 = vpop.f32.mrf.mxu0
        %5185 = vdwg.mxu0
        %5186 = vst [vmem:[%s403] sm:$0x1] %v5181
        %s5187 = sand.u32 %s291, 1
        %s5188 = scalar_lea.sflag [#allocation3], %s5187
        %s5189 = sand.u32 %s291, 1
        %s5190 = scalar_lea.vmem [#allocation2], %s5189
        // Predicated region
        $region69: #{byt5_classifier_forward.1} parent=67 // pred_check
          %p5191 = pneg %p301
        $region70: #{byt5_classifier_forward.1} parent=67 // pred_check_branch
          %5193 = sbr.rel (%p5191) target = $region72
        $region71: #{byt5_classifier_forward.1} parent=67 // pred_region
          %s5195 = ssub.s32 16, 16
          %5196 = vsyncadd %s5188, %s5195
          %s5197 = smul.addr %s26, 16
          %s5198 = scalar_lea.hbm %s12, %s5197
          %s5200 = sshll.u32 %s5190, 4
          %s5201 = int_to_ptr.vmem [resolvable:$true] %s5200
          %5203 = dma.vmem_to_hbm [thread:$0]  %s5201, 16, %s5198, %s5188
        $region72: #{byt5_classifier_forward.1} parent=67 // pred_fallthru
          _
      $region68: #{byt5_classifier_forward.1} parent=5 // pred_fallthru
        _
      %p5204 = scmp.le.s32.totalorder 2, %s21
      // Predicated region
      $region73: #{byt5_classifier_forward.1} parent=5 // pred_check
        %p5205 = pneg %p5204
      $region74: #{byt5_classifier_forward.1} parent=5 // pred_check_branch
        %5207 = sbr.rel (%p5205) target = $region76
      $region75: #{byt5_classifier_forward.1} parent=5 // pred_region
        %s5208 = ssub.s32 %s21, 2
        // Predicated region
        $region77: #{byt5_classifier_forward.1} parent=75 // pred_check
          %p5209 = pneg %p307
        $region78: #{byt5_classifier_forward.1} parent=75 // pred_check_branch
          %5211 = sbr.rel (%p5209) target = $region80
        $region79: #{byt5_classifier_forward.1} parent=75 // pred_region
          %s5212 = sand.u32 %s292, 1
          %s5213 = scalar_lea.sflag [#allocation3], %s5212
          %s5214 = sand.u32 %s292, 1
          %s5215 = scalar_lea.vmem [#allocation2], %s5214
          %5216 = dma.done %s5213, 16
        $region80: #{byt5_classifier_forward.1} parent=75 // pred_fallthru
          _
      $region76: #{byt5_classifier_forward.1} parent=5 // pred_fallthru
        _
    $region6: #{byt5_classifier_forward.1} parent=1 // loop_footer
      %s25 = sadd.s32 1, %s21
    $region7: #{byt5_classifier_forward.1} parent=1 // loop_footer_branch
      %20 = sbr.rel target = $region3
    $region8: #{byt5_classifier_forward.1} parent=1 // loop_exit
      _
    %5217 = vsyncpa [#allocation3], 1
    %s5218 = scalar_lea.sflag [#allocation3], 1
    %5219 = vsyncpa %s5218, 1

</llo_original>
